<compile_context>
chip_gen: v7x
topology: tpu7x:2x2x1
jax: 0.10.0
libtpu: 0.0.40
codegen_flags: <defaults>
</compile_context>

<pallas_src>
import functools
import math

import jax
import jax.numpy as jnp
import numpy as np
from jax.experimental import pallas as pl
from jax.experimental.pallas import tpu as pltpu


# ----------------------------------------------------------------------------
# Fused Pallas kernel
# ----------------------------------------------------------------------------
def _octave_kernel(xh_ref, xl_ref, xhp_ref, whh_ref, whl_ref, wll_ref, wlh_ref,
                   up_ref, oh_ref, ol_ref, *, W, Wl, HWh, HWl, Ch, Cl, Coh, Col):
    f32 = jnp.float32

    def col_masks(width, hw):
        # Multiplicative masks that zero the left / right image column: they fix
        # the row wrap-around of flat (row-major) W-direction tap shifts.
        col = jax.lax.broadcasted_iota(jnp.int32, (1, hw), 1) % width
        return (col > 0).astype(f32), (col < width - 1).astype(f32)

    mask_l_h, mask_r_h = col_masks(W, HWh)
    mask_l_l, mask_r_l = col_masks(Wl, HWl)

    def conv3x3(x_ref, w_ref, width, hw, cin, cout, mask_l, mask_r):
        # x_ref block: (1, cin, (h+2)*width + 2)  -- H zero-padded, row-major
        #   flattened, with one extra zero guard element on each end.
        # w_ref block: (cout, 9*cin), column index = (ky*3 + kx)*cin + ci.
        wv = w_ref[...]
        acc = jnp.zeros((cout, hw), f32)
        for ky in range(3):
            for kx in range(3):
                s = ky * width + (kx - 1)               # flat shift of this tap
                slab = x_ref[0, :, s + 1:s + 1 + hw]    # (cin, hw), static offsets
                if kx == 0:
                    slab = slab * mask_l
                elif kx == 2:
                    slab = slab * mask_r
                base = (ky * 3 + kx) * cin
                for ci in range(cin):
                    w_col = wv[:, base + ci:base + ci + 1]     # (cout, 1)
                    acc = acc + w_col * slab[ci:ci + 1, :]     # VPU broadcast FMA
        return acc

    h2h = conv3x3(xh_ref, whh_ref, W, HWh, Ch, Coh, mask_l_h, mask_r_h)
    l2h = conv3x3(xl_ref, wlh_ref, Wl, HWl, Cl, Coh, mask_l_l, mask_r_l)
    l2l = conv3x3(xl_ref, wll_ref, Wl, HWl, Cl, Col, mask_l_l, mask_r_l)
    h2l = conv3x3(xhp_ref, whl_ref, Wl, HWl, Ch, Col, mask_l_l, mask_r_l)

    # 2x nearest-neighbour upsample of l2h: one small matmul with a 0/1 matrix.
    l2h_up = jnp.dot(l2h, up_ref[...], preferred_element_type=f32)

    oh_ref[0] = h2h + l2h_up       # (Coh, HWh) lane-dense store (256 lanes)
    ol_ref[0] = h2l + l2l          # (Col, HWl)


# ----------------------------------------------------------------------------
# Wrapper (layout plumbing only)
# ----------------------------------------------------------------------------
def _pack_weight(w_oihw):
    # PyTorch OIHW (cout, cin, 3, 3) -> (cout, 9*cin) with col = (ky*3+kx)*cin + ci
    cout, cin, kh, kw = w_oihw.shape
    return jnp.transpose(w_oihw, (0, 2, 3, 1)).reshape(cout, kh * kw * cin)


def _prep_input(x_nchw):
    # Zero-pad H by 1, flatten (H+2, W) row-major, add one zero guard each end.
    n, c, h, w = x_nchw.shape
    xp = jnp.pad(x_nchw, ((0, 0), (0, 0), (1, 1), (0, 0)))
    return jnp.pad(xp.reshape(n, c, (h + 2) * w), ((0, 0), (0, 0), (1, 1)))


def _avgpool2x2(x_nchw):  # nn.AvgPool2d((2,2), stride=2)
    n, c, h, w = x_nchw.shape
    return x_nchw.reshape(n, c, h // 2, 2, w // 2, 2).mean(axis=(3, 5))


def _upsample_matrix(hl, wl):
    # (hl*wl, 4*hl*wl) 0/1 matrix:  low_flat @ U == flat 2x nearest upsample.
    hh, wh = 2 * hl, 2 * wl
    p = np.arange(hh * wh)
    src = (p // wh // 2) * wl + (p % wh) // 2
    u = np.zeros((hl * wl, hh * wh), np.float32)
    u[src, p] = 1.0
    return jnp.asarray(u)


def octave_conv(x_h, x_l, w_h2h, w_h2l, w_l2l, w_l2h):
    """OctaveConv forward for (x_h, x_l) tuple input; K=3, stride=1, pad=1, groups=1."""
    n, ch, h, w = x_h.shape
    _, cl, hl, wl = x_l.shape
    coh, col = w_h2h.shape[0], w_l2l.shape[0]
    assert w_h2h.shape[2:] == (3, 3) and (hl, wl) == (h // 2, w // 2)

    hwh, hwl = h * w, hl * wl
    lh, ll = (h + 2) * w + 2, (hl + 2) * wl + 2

    xh_f = _prep_input(x_h)                   # (n, ch, lh)
    xl_f = _prep_input(x_l)                   # (n, cl, ll)
    xhp_f = _prep_input(_avgpool2x2(x_h))     # (n, ch, ll)
    u = _upsample_matrix(hl, wl)              # (hwl, hwh)

    kernel = functools.partial(
        _octave_kernel, W=w, Wl=wl, HWh=hwh, HWl=hwl,
        Ch=ch, Cl=cl, Coh=coh, Col=col)

    out_h_f, out_l_f = pl.pallas_call(
        kernel,
        out_shape=(jax.ShapeDtypeStruct((n, coh, hwh), jnp.float32),
                   jax.ShapeDtypeStruct((n, col, hwl), jnp.float32)),
        grid=(n,),
        in_specs=[
            pl.BlockSpec((1, ch, lh), lambda i: (i, 0, 0)),
            pl.BlockSpec((1, cl, ll), lambda i: (i, 0, 0)),
            pl.BlockSpec((1, ch, ll), lambda i: (i, 0, 0)),
            pl.BlockSpec((coh, 9 * ch), lambda i: (0, 0)),
            pl.BlockSpec((col, 9 * ch), lambda i: (0, 0)),
            pl.BlockSpec((col, 9 * cl), lambda i: (0, 0)),
            pl.BlockSpec((coh, 9 * cl), lambda i: (0, 0)),
            pl.BlockSpec((hwl, hwh), lambda i: (0, 0)),
        ],
        out_specs=[
            pl.BlockSpec((1, coh, hwh), lambda i: (i, 0, 0)),
            pl.BlockSpec((1, col, hwl), lambda i: (i, 0, 0)),
        ],
        compiler_params=pltpu.CompilerParams(dimension_semantics=("parallel",)),
    )(xh_f, xl_f, xhp_f,
      _pack_weight(w_h2h), _pack_weight(w_h2l),
      _pack_weight(w_l2l), _pack_weight(w_l2h), u)

    return (out_h_f.reshape(n, coh, h, w),
            out_l_f.reshape(n, col, hl, wl))


# ----------------------------------------------------------------------------
# Pure-JAX reference (correctness check)
# ----------------------------------------------------------------------------
def _ref_conv(x, w):
    return jax.lax.conv_general_dilated(
        x, w, window_strides=(1, 1), padding=((1, 1), (1, 1)),
        dimension_numbers=("NCHW", "OIHW", "NCHW"))


def ref_forward(x_h, x_l, w_h2h, w_h2l, w_l2l, w_l2h):
    h2h = _ref_conv(x_h, w_h2h)
    h2l = _ref_conv(_avgpool2x2(x_h), w_h2l)
    l2l = _ref_conv(x_l, w_l2l)
    l2h = _ref_conv(x_l, w_l2h)
    l2h = jnp.repeat(jnp.repeat(l2h, 2, axis=2), 2, axis=3)
    return l2h + h2h, h2l + l2l


# ----------------------------------------------------------------------------
# Main
# ----------------------------------------------------------------------------
if __name__ == "__main__":
    # OctaveConv(8, 8, 3, alpha_in=0.5, alpha_out=0.5, stride=1, padding=1,
    #            groups=1, bias=False) applied to an (x_h, x_l) tuple.
    IN_CH = OUT_CH = 8
    K = 3
    ALPHA_IN = ALPHA_OUT = 0.5
    cin_l = int(ALPHA_IN * IN_CH)
    cin_h = IN_CH - cin_l
    cout_l = int(ALPHA_OUT * OUT_CH)
    cout_h = OUT_CH - cout_l
    N, H, W = 2, 16, 16

    key = jax.random.PRNGKey(0)
    ks = jax.random.split(key, 6)

    x_h = jax.random.normal(ks[0], (N, cin_h, H, W), jnp.float32)
    x_l = jax.random.normal(ks[1], (N, cin_l, H // 2, W // 2), jnp.float32)

    def mk_w(k, cout, cin):  # PyTorch OIHW layout
        return jax.random.normal(k, (cout, cin, K, K), jnp.float32) / math.sqrt(K * K * cin)

    w_h2h = mk_w(ks[2], cout_h, cin_h)
    w_h2l = mk_w(ks[3], cout_l, cin_h)
    w_l2l = mk_w(ks[4], cout_l, cin_l)
    w_l2h = mk_w(ks[5], cout_h, cin_l)

    fwd = jax.jit(octave_conv)
    out_h, out_l = fwd(x_h, x_l, w_h2h, w_h2l, w_l2l, w_l2h)
    jax.block_until_ready((out_h, out_l))

    ref_h, ref_l = ref_forward(x_h, x_l, w_h2h, w_h2l, w_l2l, w_l2h)
    np.testing.assert_allclose(np.asarray(out_h), np.asarray(ref_h), rtol=1e-3, atol=1e-3)
    np.testing.assert_allclose(np.asarray(out_l), np.asarray(ref_l), rtol=1e-3, atol=1e-3)

    assert out_h.shape == (N, cout_h, H, W)
    assert out_l.shape == (N, cout_l, H // 2, W // 2)

    print("KERNEL_OK")
</pallas_src>

<mosaic_0001>
module attributes {stable_mosaic.version = 11 : i64} {
  func.func @_octave_kernel(%arg0: i32, %arg1: memref<1x4x290xf32, #tpu.memory_space<vmem>>, %arg2: memref<1x4x82xf32, #tpu.memory_space<vmem>>, %arg3: memref<1x4x82xf32, #tpu.memory_space<vmem>>, %arg4: memref<4x36xf32, #tpu.memory_space<vmem>>, %arg5: memref<4x36xf32, #tpu.memory_space<vmem>>, %arg6: memref<4x36xf32, #tpu.memory_space<vmem>>, %arg7: memref<4x36xf32, #tpu.memory_space<vmem>>, %arg8: memref<64x256xf32, #tpu.memory_space<vmem>>, %arg9: memref<1x4x256xf32, #tpu.memory_space<vmem>>, %arg10: memref<1x4x64xf32, #tpu.memory_space<vmem>>) attributes {dimension_semantics = [#tpu.dimension_semantics<parallel>], iteration_bounds = array<i64: 2>, scalar_prefetch = 0 : i64, scratch_operands = 0 : i64, tpu.core_type = #tpu.core_type<tc>, window_params = [{transform_indices = @transform_0, window_bounds = array<i64: 1, 4, 290>}, {transform_indices = @transform_1, window_bounds = array<i64: 1, 4, 82>}, {transform_indices = @transform_2, window_bounds = array<i64: 1, 4, 82>}, {pipeline_mode = #tpu.pipeline_mode<synchronous>, transform_indices = @transform_3, window_bounds = array<i64: 4, 36>}, {pipeline_mode = #tpu.pipeline_mode<synchronous>, transform_indices = @transform_4, window_bounds = array<i64: 4, 36>}, {pipeline_mode = #tpu.pipeline_mode<synchronous>, transform_indices = @transform_5, window_bounds = array<i64: 4, 36>}, {pipeline_mode = #tpu.pipeline_mode<synchronous>, transform_indices = @transform_6, window_bounds = array<i64: 4, 36>}, {pipeline_mode = #tpu.pipeline_mode<synchronous>, transform_indices = @transform_7, window_bounds = array<i64: 64, 256>}, {transform_indices = @transform_8, window_bounds = array<i64: 1, 4, 256>}, {transform_indices = @transform_9, window_bounds = array<i64: 1, 4, 64>}]} {
    %0 = tpu.iota {dimensions = array<i32: 1>} : vector<1x256xi32>
    %c16_i32 = arith.constant 16 : i32
    %c0_i32 = arith.constant 0 : i32
    %1 = arith.cmpi eq, %c16_i32, %c0_i32 : i32
    %c1_i32 = arith.constant 1 : i32
    %2 = arith.select %1, %c1_i32, %c16_i32 : i32
    %3 = vector.broadcast %2 : i32 to vector<1x256xi32>
    %4 = arith.remsi %0, %3 : vector<1x256xi32>
    %c0_i32_0 = arith.constant 0 : i32
    %5 = vector.broadcast %c0_i32_0 : i32 to vector<1x256xi32>
    %6 = arith.cmpi ne, %4, %5 : vector<1x256xi32>
    %c0_i32_1 = arith.constant 0 : i32
    %7 = vector.broadcast %c0_i32_1 : i32 to vector<1x256xi32>
    %8 = arith.cmpi slt, %4, %7 : vector<1x256xi32>
    %c0_i32_2 = arith.constant 0 : i32
    %9 = arith.cmpi slt, %2, %c0_i32_2 : i32
    %10 = vector.broadcast %9 : i1 to vector<1x256xi1>
    %11 = vector.broadcast %10 : vector<1x256xi1> to vector<1x256xi1>
    %12 = arith.xori %8, %11 : vector<1x256xi1>
    %13 = arith.andi %12, %6 : vector<1x256xi1>
    %14 = vector.broadcast %2 : i32 to vector<1x256xi32>
    %15 = arith.addi %4, %14 : vector<1x256xi32>
    %16 = arith.select %13, %15, %4 : vector<1x256xi1>, vector<1x256xi32>
    %c0_i32_3 = arith.constant 0 : i32
    %17 = vector.broadcast %c0_i32_3 : i32 to vector<1x256xi32>
    %18 = arith.cmpi sgt, %16, %17 : vector<1x256xi32>
    %19 = arith.extui %18 : vector<1x256xi1> to vector<1x256xi32>
    %20 = arith.sitofp %19 : vector<1x256xi32> to vector<1x256xf32>
    %c15_i32 = arith.constant 15 : i32
    %21 = vector.broadcast %c15_i32 : i32 to vector<1x256xi32>
    %22 = arith.cmpi slt, %16, %21 : vector<1x256xi32>
    %23 = arith.extui %22 : vector<1x256xi1> to vector<1x256xi32>
    %24 = arith.sitofp %23 : vector<1x256xi32> to vector<1x256xf32>
    %25 = tpu.iota {dimensions = array<i32: 1>} : vector<1x64xi32>
    %c8_i32 = arith.constant 8 : i32
    %c0_i32_4 = arith.constant 0 : i32
    %26 = arith.cmpi eq, %c8_i32, %c0_i32_4 : i32
    %c1_i32_5 = arith.constant 1 : i32
    %27 = arith.select %26, %c1_i32_5, %c8_i32 : i32
    %28 = vector.broadcast %27 : i32 to vector<1x64xi32>
    %29 = arith.remsi %25, %28 : vector<1x64xi32>
    %c0_i32_6 = arith.constant 0 : i32
    %30 = vector.broadcast %c0_i32_6 : i32 to vector<1x64xi32>
    %31 = arith.cmpi ne, %29, %30 : vector<1x64xi32>
    %c0_i32_7 = arith.constant 0 : i32
    %32 = vector.broadcast %c0_i32_7 : i32 to vector<1x64xi32>
    %33 = arith.cmpi slt, %29, %32 : vector<1x64xi32>
    %c0_i32_8 = arith.constant 0 : i32
    %34 = arith.cmpi slt, %27, %c0_i32_8 : i32
    %35 = vector.broadcast %34 : i1 to vector<1x64xi1>
    %36 = vector.broadcast %35 : vector<1x64xi1> to vector<1x64xi1>
    %37 = arith.xori %33, %36 : vector<1x64xi1>
    %38 = arith.andi %37, %31 : vector<1x64xi1>
    %39 = vector.broadcast %27 : i32 to vector<1x64xi32>
    %40 = arith.addi %29, %39 : vector<1x64xi32>
    %41 = arith.select %38, %40, %29 : vector<1x64xi1>, vector<1x64xi32>
    %c0_i32_9 = arith.constant 0 : i32
    %42 = vector.broadcast %c0_i32_9 : i32 to vector<1x64xi32>
    %43 = arith.cmpi sgt, %41, %42 : vector<1x64xi32>
    %44 = arith.extui %43 : vector<1x64xi1> to vector<1x64xi32>
    %45 = arith.sitofp %44 : vector<1x64xi32> to vector<1x64xf32>
    %c7_i32 = arith.constant 7 : i32
    %46 = vector.broadcast %c7_i32 : i32 to vector<1x64xi32>
    %47 = arith.cmpi slt, %41, %46 : vector<1x64xi32>
    %48 = arith.extui %47 : vector<1x64xi1> to vector<1x64xi32>
    %49 = arith.sitofp %48 : vector<1x64xi32> to vector<1x64xf32>
    %c0 = arith.constant 0 : index
    %c0_10 = arith.constant 0 : index
    %50 = vector.load %arg4[%c0, %c0_10] : memref<4x36xf32, #tpu.memory_space<vmem>>, vector<4x36xf32>
    %cst = arith.constant 0.000000e+00 : f32
    %51 = vector.broadcast %cst : f32 to vector<4x256xf32>
    %c0_11 = arith.constant 0 : index
    %c0_12 = arith.constant 0 : index
    %c0_13 = arith.constant 0 : index
    %52 = vector.load %arg1[%c0_11, %c0_12, %c0_13] : memref<1x4x290xf32, #tpu.memory_space<vmem>>, vector<1x4x256xf32>
    %53 = vector.shape_cast %52 : vector<1x4x256xf32> to vector<4x256xf32>
    %54 = vector.broadcast %20 : vector<1x256xf32> to vector<4x256xf32>
    %55 = arith.mulf %53, %54 : vector<4x256xf32>
    %56 = vector.extract_strided_slice %50 {offsets = [0, 0], sizes = [4, 1], strides = [1, 1]} : vector<4x36xf32> to vector<4x1xf32>
    %57 = vector.extract_strided_slice %55 {offsets = [0, 0], sizes = [1, 256], strides = [1, 1]} : vector<4x256xf32> to vector<1x256xf32>
    %58 = vector.broadcast %56 : vector<4x1xf32> to vector<4x256xf32>
    %59 = vector.broadcast %57 : vector<1x256xf32> to vector<4x256xf32>
    %60 = arith.mulf %58, %59 : vector<4x256xf32>
    %61 = arith.addf %51, %60 : vector<4x256xf32>
    %62 = vector.extract_strided_slice %50 {offsets = [0, 1], sizes = [4, 1], strides = [1, 1]} : vector<4x36xf32> to vector<4x1xf32>
    %63 = vector.extract_strided_slice %55 {offsets = [1, 0], sizes = [1, 256], strides = [1, 1]} : vector<4x256xf32> to vector<1x256xf32>
    %64 = vector.broadcast %62 : vector<4x1xf32> to vector<4x256xf32>
    %65 = vector.broadcast %63 : vector<1x256xf32> to vector<4x256xf32>
    %66 = arith.mulf %64, %65 : vector<4x256xf32>
    %67 = arith.addf %61, %66 : vector<4x256xf32>
    %68 = vector.extract_strided_slice %50 {offsets = [0, 2], sizes = [4, 1], strides = [1, 1]} : vector<4x36xf32> to vector<4x1xf32>
    %69 = vector.extract_strided_slice %55 {offsets = [2, 0], sizes = [1, 256], strides = [1, 1]} : vector<4x256xf32> to vector<1x256xf32>
    %70 = vector.broadcast %68 : vector<4x1xf32> to vector<4x256xf32>
    %71 = vector.broadcast %69 : vector<1x256xf32> to vector<4x256xf32>
    %72 = arith.mulf %70, %71 : vector<4x256xf32>
    %73 = arith.addf %67, %72 : vector<4x256xf32>
    %74 = vector.extract_strided_slice %50 {offsets = [0, 3], sizes = [4, 1], strides = [1, 1]} : vector<4x36xf32> to vector<4x1xf32>
    %75 = vector.extract_strided_slice %55 {offsets = [3, 0], sizes = [1, 256], strides = [1, 1]} : vector<4x256xf32> to vector<1x256xf32>
    %76 = vector.broadcast %74 : vector<4x1xf32> to vector<4x256xf32>
    %77 = vector.broadcast %75 : vector<1x256xf32> to vector<4x256xf32>
    %78 = arith.mulf %76, %77 : vector<4x256xf32>
    %79 = arith.addf %73, %78 : vector<4x256xf32>
    %c0_14 = arith.constant 0 : index
    %c0_15 = arith.constant 0 : index
    %c1 = arith.constant 1 : index
    %80 = vector.load %arg1[%c0_14, %c0_15, %c1] : memref<1x4x290xf32, #tpu.memory_space<vmem>>, vector<1x4x256xf32>
    %81 = vector.shape_cast %80 : vector<1x4x256xf32> to vector<4x256xf32>
    %82 = vector.extract_strided_slice %50 {offsets = [0, 4], sizes = [4, 1], strides = [1, 1]} : vector<4x36xf32> to vector<4x1xf32>
    %83 = vector.extract_strided_slice %81 {offsets = [0, 0], sizes = [1, 256], strides = [1, 1]} : vector<4x256xf32> to vector<1x256xf32>
    %84 = vector.broadcast %82 : vector<4x1xf32> to vector<4x256xf32>
    %85 = vector.broadcast %83 : vector<1x256xf32> to vector<4x256xf32>
    %86 = arith.mulf %84, %85 : vector<4x256xf32>
    %87 = arith.addf %79, %86 : vector<4x256xf32>
    %88 = vector.extract_strided_slice %50 {offsets = [0, 5], sizes = [4, 1], strides = [1, 1]} : vector<4x36xf32> to vector<4x1xf32>
    %89 = vector.extract_strided_slice %81 {offsets = [1, 0], sizes = [1, 256], strides = [1, 1]} : vector<4x256xf32> to vector<1x256xf32>
    %90 = vector.broadcast %88 : vector<4x1xf32> to vector<4x256xf32>
    %91 = vector.broadcast %89 : vector<1x256xf32> to vector<4x256xf32>
    %92 = arith.mulf %90, %91 : vector<4x256xf32>
    %93 = arith.addf %87, %92 : vector<4x256xf32>
    %94 = vector.extract_strided_slice %50 {offsets = [0, 6], sizes = [4, 1], strides = [1, 1]} : vector<4x36xf32> to vector<4x1xf32>
    %95 = vector.extract_strided_slice %81 {offsets = [2, 0], sizes = [1, 256], strides = [1, 1]} : vector<4x256xf32> to vector<1x256xf32>
    %96 = vector.broadcast %94 : vector<4x1xf32> to vector<4x256xf32>
    %97 = vector.broadcast %95 : vector<1x256xf32> to vector<4x256xf32>
    %98 = arith.mulf %96, %97 : vector<4x256xf32>
    %99 = arith.addf %93, %98 : vector<4x256xf32>
    %100 = vector.extract_strided_slice %50 {offsets = [0, 7], sizes = [4, 1], strides = [1, 1]} : vector<4x36xf32> to vector<4x1xf32>
    %101 = vector.extract_strided_slice %81 {offsets = [3, 0], sizes = [1, 256], strides = [1, 1]} : vector<4x256xf32> to vector<1x256xf32>
    %102 = vector.broadcast %100 : vector<4x1xf32> to vector<4x256xf32>
    %103 = vector.broadcast %101 : vector<1x256xf32> to vector<4x256xf32>
    %104 = arith.mulf %102, %103 : vector<4x256xf32>
    %105 = arith.addf %99, %104 : vector<4x256xf32>
    %c0_16 = arith.constant 0 : index
    %c0_17 = arith.constant 0 : index
    %c2 = arith.constant 2 : index
    %106 = vector.load %arg1[%c0_16, %c0_17, %c2] : memref<1x4x290xf32, #tpu.memory_space<vmem>>, vector<1x4x256xf32>
    %107 = vector.shape_cast %106 : vector<1x4x256xf32> to vector<4x256xf32>
    %108 = vector.broadcast %24 : vector<1x256xf32> to vector<4x256xf32>
    %109 = arith.mulf %107, %108 : vector<4x256xf32>
    %110 = vector.extract_strided_slice %50 {offsets = [0, 8], sizes = [4, 1], strides = [1, 1]} : vector<4x36xf32> to vector<4x1xf32>
    %111 = vector.extract_strided_slice %109 {offsets = [0, 0], sizes = [1, 256], strides = [1, 1]} : vector<4x256xf32> to vector<1x256xf32>
    %112 = vector.broadcast %110 : vector<4x1xf32> to vector<4x256xf32>
    %113 = vector.broadcast %111 : vector<1x256xf32> to vector<4x256xf32>
    %114 = arith.mulf %112, %113 : vector<4x256xf32>
    %115 = arith.addf %105, %114 : vector<4x256xf32>
    %116 = vector.extract_strided_slice %50 {offsets = [0, 9], sizes = [4, 1], strides = [1, 1]} : vector<4x36xf32> to vector<4x1xf32>
    %117 = vector.extract_strided_slice %109 {offsets = [1, 0], sizes = [1, 256], strides = [1, 1]} : vector<4x256xf32> to vector<1x256xf32>
    %118 = vector.broadcast %116 : vector<4x1xf32> to vector<4x256xf32>
    %119 = vector.broadcast %117 : vector<1x256xf32> to vector<4x256xf32>
    %120 = arith.mulf %118, %119 : vector<4x256xf32>
    %121 = arith.addf %115, %120 : vector<4x256xf32>
    %122 = vector.extract_strided_slice %50 {offsets = [0, 10], sizes = [4, 1], strides = [1, 1]} : vector<4x36xf32> to vector<4x1xf32>
    %123 = vector.extract_strided_slice %109 {offsets = [2, 0], sizes = [1, 256], strides = [1, 1]} : vector<4x256xf32> to vector<1x256xf32>
    %124 = vector.broadcast %122 : vector<4x1xf32> to vector<4x256xf32>
    %125 = vector.broadcast %123 : vector<1x256xf32> to vector<4x256xf32>
    %126 = arith.mulf %124, %125 : vector<4x256xf32>
    %127 = arith.addf %121, %126 : vector<4x256xf32>
    %128 = vector.extract_strided_slice %50 {offsets = [0, 11], sizes = [4, 1], strides = [1, 1]} : vector<4x36xf32> to vector<4x1xf32>
    %129 = vector.extract_strided_slice %109 {offsets = [3, 0], sizes = [1, 256], strides = [1, 1]} : vector<4x256xf32> to vector<1x256xf32>
    %130 = vector.broadcast %128 : vector<4x1xf32> to vector<4x256xf32>
    %131 = vector.broadcast %129 : vector<1x256xf32> to vector<4x256xf32>
    %132 = arith.mulf %130, %131 : vector<4x256xf32>
    %133 = arith.addf %127, %132 : vector<4x256xf32>
    %c0_18 = arith.constant 0 : index
    %c0_19 = arith.constant 0 : index
    %c16 = arith.constant 16 : index
    %134 = vector.load %arg1[%c0_18, %c0_19, %c16] : memref<1x4x290xf32, #tpu.memory_space<vmem>>, vector<1x4x256xf32>
    %135 = vector.shape_cast %134 : vector<1x4x256xf32> to vector<4x256xf32>
    %136 = vector.broadcast %20 : vector<1x256xf32> to vector<4x256xf32>
    %137 = arith.mulf %135, %136 : vector<4x256xf32>
    %138 = vector.extract_strided_slice %50 {offsets = [0, 12], sizes = [4, 1], strides = [1, 1]} : vector<4x36xf32> to vector<4x1xf32>
    %139 = vector.extract_strided_slice %137 {offsets = [0, 0], sizes = [1, 256], strides = [1, 1]} : vector<4x256xf32> to vector<1x256xf32>
    %140 = vector.broadcast %138 : vector<4x1xf32> to vector<4x256xf32>
    %141 = vector.broadcast %139 : vector<1x256xf32> to vector<4x256xf32>
    %142 = arith.mulf %140, %141 : vector<4x256xf32>
    %143 = arith.addf %133, %142 : vector<4x256xf32>
    %144 = vector.extract_strided_slice %50 {offsets = [0, 13], sizes = [4, 1], strides = [1, 1]} : vector<4x36xf32> to vector<4x1xf32>
    %145 = vector.extract_strided_slice %137 {offsets = [1, 0], sizes = [1, 256], strides = [1, 1]} : vector<4x256xf32> to vector<1x256xf32>
    %146 = vector.broadcast %144 : vector<4x1xf32> to vector<4x256xf32>
    %147 = vector.broadcast %145 : vector<1x256xf32> to vector<4x256xf32>
    %148 = arith.mulf %146, %147 : vector<4x256xf32>
    %149 = arith.addf %143, %148 : vector<4x256xf32>
    %150 = vector.extract_strided_slice %50 {offsets = [0, 14], sizes = [4, 1], strides = [1, 1]} : vector<4x36xf32> to vector<4x1xf32>
    %151 = vector.extract_strided_slice %137 {offsets = [2, 0], sizes = [1, 256], strides = [1, 1]} : vector<4x256xf32> to vector<1x256xf32>
    %152 = vector.broadcast %150 : vector<4x1xf32> to vector<4x256xf32>
    %153 = vector.broadcast %151 : vector<1x256xf32> to vector<4x256xf32>
    %154 = arith.mulf %152, %153 : vector<4x256xf32>
    %155 = arith.addf %149, %154 : vector<4x256xf32>
    %156 = vector.extract_strided_slice %50 {offsets = [0, 15], sizes = [4, 1], strides = [1, 1]} : vector<4x36xf32> to vector<4x1xf32>
    %157 = vector.extract_strided_slice %137 {offsets = [3, 0], sizes = [1, 256], strides = [1, 1]} : vector<4x256xf32> to vector<1x256xf32>
    %158 = vector.broadcast %156 : vector<4x1xf32> to vector<4x256xf32>
    %159 = vector.broadcast %157 : vector<1x256xf32> to vector<4x256xf32>
    %160 = arith.mulf %158, %159 : vector<4x256xf32>
    %161 = arith.addf %155, %160 : vector<4x256xf32>
    %c0_20 = arith.constant 0 : index
    %c0_21 = arith.constant 0 : index
    %c17 = arith.constant 17 : index
    %162 = vector.load %arg1[%c0_20, %c0_21, %c17] : memref<1x4x290xf32, #tpu.memory_space<vmem>>, vector<1x4x256xf32>
    %163 = vector.shape_cast %162 : vector<1x4x256xf32> to vector<4x256xf32>
    %164 = vector.extract_strided_slice %50 {offsets = [0, 16], sizes = [4, 1], strides = [1, 1]} : vector<4x36xf32> to vector<4x1xf32>
    %165 = vector.extract_strided_slice %163 {offsets = [0, 0], sizes = [1, 256], strides = [1, 1]} : vector<4x256xf32> to vector<1x256xf32>
    %166 = vector.broadcast %164 : vector<4x1xf32> to vector<4x256xf32>
    %167 = vector.broadcast %165 : vector<1x256xf32> to vector<4x256xf32>
    %168 = arith.mulf %166, %167 : vector<4x256xf32>
    %169 = arith.addf %161, %168 : vector<4x256xf32>
    %170 = vector.extract_strided_slice %50 {offsets = [0, 17], sizes = [4, 1], strides = [1, 1]} : vector<4x36xf32> to vector<4x1xf32>
    %171 = vector.extract_strided_slice %163 {offsets = [1, 0], sizes = [1, 256], strides = [1, 1]} : vector<4x256xf32> to vector<1x256xf32>
    %172 = vector.broadcast %170 : vector<4x1xf32> to vector<4x256xf32>
    %173 = vector.broadcast %171 : vector<1x256xf32> to vector<4x256xf32>
    %174 = arith.mulf %172, %173 : vector<4x256xf32>
    %175 = arith.addf %169, %174 : vector<4x256xf32>
    %176 = vector.extract_strided_slice %50 {offsets = [0, 18], sizes = [4, 1], strides = [1, 1]} : vector<4x36xf32> to vector<4x1xf32>
    %177 = vector.extract_strided_slice %163 {offsets = [2, 0], sizes = [1, 256], strides = [1, 1]} : vector<4x256xf32> to vector<1x256xf32>
    %178 = vector.broadcast %176 : vector<4x1xf32> to vector<4x256xf32>
    %179 = vector.broadcast %177 : vector<1x256xf32> to vector<4x256xf32>
    %180 = arith.mulf %178, %179 : vector<4x256xf32>
    %181 = arith.addf %175, %180 : vector<4x256xf32>
    %182 = vector.extract_strided_slice %50 {offsets = [0, 19], sizes = [4, 1], strides = [1, 1]} : vector<4x36xf32> to vector<4x1xf32>
    %183 = vector.extract_strided_slice %163 {offsets = [3, 0], sizes = [1, 256], strides = [1, 1]} : vector<4x256xf32> to vector<1x256xf32>
    %184 = vector.broadcast %182 : vector<4x1xf32> to vector<4x256xf32>
    %185 = vector.broadcast %183 : vector<1x256xf32> to vector<4x256xf32>
    %186 = arith.mulf %184, %185 : vector<4x256xf32>
    %187 = arith.addf %181, %186 : vector<4x256xf32>
    %c0_22 = arith.constant 0 : index
    %c0_23 = arith.constant 0 : index
    %c18 = arith.constant 18 : index
    %188 = vector.load %arg1[%c0_22, %c0_23, %c18] : memref<1x4x290xf32, #tpu.memory_space<vmem>>, vector<1x4x256xf32>
    %189 = vector.shape_cast %188 : vector<1x4x256xf32> to vector<4x256xf32>
    %190 = vector.broadcast %24 : vector<1x256xf32> to vector<4x256xf32>
    %191 = arith.mulf %189, %190 : vector<4x256xf32>
    %192 = vector.extract_strided_slice %50 {offsets = [0, 20], sizes = [4, 1], strides = [1, 1]} : vector<4x36xf32> to vector<4x1xf32>
    %193 = vector.extract_strided_slice %191 {offsets = [0, 0], sizes = [1, 256], strides = [1, 1]} : vector<4x256xf32> to vector<1x256xf32>
    %194 = vector.broadcast %192 : vector<4x1xf32> to vector<4x256xf32>
    %195 = vector.broadcast %193 : vector<1x256xf32> to vector<4x256xf32>
    %196 = arith.mulf %194, %195 : vector<4x256xf32>
    %197 = arith.addf %187, %196 : vector<4x256xf32>
    %198 = vector.extract_strided_slice %50 {offsets = [0, 21], sizes = [4, 1], strides = [1, 1]} : vector<4x36xf32> to vector<4x1xf32>
    %199 = vector.extract_strided_slice %191 {offsets = [1, 0], sizes = [1, 256], strides = [1, 1]} : vector<4x256xf32> to vector<1x256xf32>
    %200 = vector.broadcast %198 : vector<4x1xf32> to vector<4x256xf32>
    %201 = vector.broadcast %199 : vector<1x256xf32> to vector<4x256xf32>
    %202 = arith.mulf %200, %201 : vector<4x256xf32>
    %203 = arith.addf %197, %202 : vector<4x256xf32>
    %204 = vector.extract_strided_slice %50 {offsets = [0, 22], sizes = [4, 1], strides = [1, 1]} : vector<4x36xf32> to vector<4x1xf32>
    %205 = vector.extract_strided_slice %191 {offsets = [2, 0], sizes = [1, 256], strides = [1, 1]} : vector<4x256xf32> to vector<1x256xf32>
    %206 = vector.broadcast %204 : vector<4x1xf32> to vector<4x256xf32>
    %207 = vector.broadcast %205 : vector<1x256xf32> to vector<4x256xf32>
    %208 = arith.mulf %206, %207 : vector<4x256xf32>
    %209 = arith.addf %203, %208 : vector<4x256xf32>
    %210 = vector.extract_strided_slice %50 {offsets = [0, 23], sizes = [4, 1], strides = [1, 1]} : vector<4x36xf32> to vector<4x1xf32>
    %211 = vector.extract_strided_slice %191 {offsets = [3, 0], sizes = [1, 256], strides = [1, 1]} : vector<4x256xf32> to vector<1x256xf32>
    %212 = vector.broadcast %210 : vector<4x1xf32> to vector<4x256xf32>
    %213 = vector.broadcast %211 : vector<1x256xf32> to vector<4x256xf32>
    %214 = arith.mulf %212, %213 : vector<4x256xf32>
    %215 = arith.addf %209, %214 : vector<4x256xf32>
    %c0_24 = arith.constant 0 : index
    %c0_25 = arith.constant 0 : index
    %c32 = arith.constant 32 : index
    %216 = vector.load %arg1[%c0_24, %c0_25, %c32] : memref<1x4x290xf32, #tpu.memory_space<vmem>>, vector<1x4x256xf32>
    %217 = vector.shape_cast %216 : vector<1x4x256xf32> to vector<4x256xf32>
    %218 = vector.broadcast %20 : vector<1x256xf32> to vector<4x256xf32>
    %219 = arith.mulf %217, %218 : vector<4x256xf32>
    %220 = vector.extract_strided_slice %50 {offsets = [0, 24], sizes = [4, 1], strides = [1, 1]} : vector<4x36xf32> to vector<4x1xf32>
    %221 = vector.extract_strided_slice %219 {offsets = [0, 0], sizes = [1, 256], strides = [1, 1]} : vector<4x256xf32> to vector<1x256xf32>
    %222 = vector.broadcast %220 : vector<4x1xf32> to vector<4x256xf32>
    %223 = vector.broadcast %221 : vector<1x256xf32> to vector<4x256xf32>
    %224 = arith.mulf %222, %223 : vector<4x256xf32>
    %225 = arith.addf %215, %224 : vector<4x256xf32>
    %226 = vector.extract_strided_slice %50 {offsets = [0, 25], sizes = [4, 1], strides = [1, 1]} : vector<4x36xf32> to vector<4x1xf32>
    %227 = vector.extract_strided_slice %219 {offsets = [1, 0], sizes = [1, 256], strides = [1, 1]} : vector<4x256xf32> to vector<1x256xf32>
    %228 = vector.broadcast %226 : vector<4x1xf32> to vector<4x256xf32>
    %229 = vector.broadcast %227 : vector<1x256xf32> to vector<4x256xf32>
    %230 = arith.mulf %228, %229 : vector<4x256xf32>
    %231 = arith.addf %225, %230 : vector<4x256xf32>
    %232 = vector.extract_strided_slice %50 {offsets = [0, 26], sizes = [4, 1], strides = [1, 1]} : vector<4x36xf32> to vector<4x1xf32>
    %233 = vector.extract_strided_slice %219 {offsets = [2, 0], sizes = [1, 256], strides = [1, 1]} : vector<4x256xf32> to vector<1x256xf32>
    %234 = vector.broadcast %232 : vector<4x1xf32> to vector<4x256xf32>
    %235 = vector.broadcast %233 : vector<1x256xf32> to vector<4x256xf32>
    %236 = arith.mulf %234, %235 : vector<4x256xf32>
    %237 = arith.addf %231, %236 : vector<4x256xf32>
    %238 = vector.extract_strided_slice %50 {offsets = [0, 27], sizes = [4, 1], strides = [1, 1]} : vector<4x36xf32> to vector<4x1xf32>
    %239 = vector.extract_strided_slice %219 {offsets = [3, 0], sizes = [1, 256], strides = [1, 1]} : vector<4x256xf32> to vector<1x256xf32>
    %240 = vector.broadcast %238 : vector<4x1xf32> to vector<4x256xf32>
    %241 = vector.broadcast %239 : vector<1x256xf32> to vector<4x256xf32>
    %242 = arith.mulf %240, %241 : vector<4x256xf32>
    %243 = arith.addf %237, %242 : vector<4x256xf32>
    %c0_26 = arith.constant 0 : index
    %c0_27 = arith.constant 0 : index
    %c33 = arith.constant 33 : index
    %244 = vector.load %arg1[%c0_26, %c0_27, %c33] : memref<1x4x290xf32, #tpu.memory_space<vmem>>, vector<1x4x256xf32>
    %245 = vector.shape_cast %244 : vector<1x4x256xf32> to vector<4x256xf32>
    %246 = vector.extract_strided_slice %50 {offsets = [0, 28], sizes = [4, 1], strides = [1, 1]} : vector<4x36xf32> to vector<4x1xf32>
    %247 = vector.extract_strided_slice %245 {offsets = [0, 0], sizes = [1, 256], strides = [1, 1]} : vector<4x256xf32> to vector<1x256xf32>
    %248 = vector.broadcast %246 : vector<4x1xf32> to vector<4x256xf32>
    %249 = vector.broadcast %247 : vector<1x256xf32> to vector<4x256xf32>
    %250 = arith.mulf %248, %249 : vector<4x256xf32>
    %251 = arith.addf %243, %250 : vector<4x256xf32>
    %252 = vector.extract_strided_slice %50 {offsets = [0, 29], sizes = [4, 1], strides = [1, 1]} : vector<4x36xf32> to vector<4x1xf32>
    %253 = vector.extract_strided_slice %245 {offsets = [1, 0], sizes = [1, 256], strides = [1, 1]} : vector<4x256xf32> to vector<1x256xf32>
    %254 = vector.broadcast %252 : vector<4x1xf32> to vector<4x256xf32>
    %255 = vector.broadcast %253 : vector<1x256xf32> to vector<4x256xf32>
    %256 = arith.mulf %254, %255 : vector<4x256xf32>
    %257 = arith.addf %251, %256 : vector<4x256xf32>
    %258 = vector.extract_strided_slice %50 {offsets = [0, 30], sizes = [4, 1], strides = [1, 1]} : vector<4x36xf32> to vector<4x1xf32>
    %259 = vector.extract_strided_slice %245 {offsets = [2, 0], sizes = [1, 256], strides = [1, 1]} : vector<4x256xf32> to vector<1x256xf32>
    %260 = vector.broadcast %258 : vector<4x1xf32> to vector<4x256xf32>
    %261 = vector.broadcast %259 : vector<1x256xf32> to vector<4x256xf32>
    %262 = arith.mulf %260, %261 : vector<4x256xf32>
    %263 = arith.addf %257, %262 : vector<4x256xf32>
    %264 = vector.extract_strided_slice %50 {offsets = [0, 31], sizes = [4, 1], strides = [1, 1]} : vector<4x36xf32> to vector<4x1xf32>
    %265 = vector.extract_strided_slice %245 {offsets = [3, 0], sizes = [1, 256], strides = [1, 1]} : vector<4x256xf32> to vector<1x256xf32>
    %266 = vector.broadcast %264 : vector<4x1xf32> to vector<4x256xf32>
    %267 = vector.broadcast %265 : vector<1x256xf32> to vector<4x256xf32>
    %268 = arith.mulf %266, %267 : vector<4x256xf32>
    %269 = arith.addf %263, %268 : vector<4x256xf32>
    %c0_28 = arith.constant 0 : index
    %c0_29 = arith.constant 0 : index
    %c34 = arith.constant 34 : index
    %270 = vector.load %arg1[%c0_28, %c0_29, %c34] : memref<1x4x290xf32, #tpu.memory_space<vmem>>, vector<1x4x256xf32>
    %271 = vector.shape_cast %270 : vector<1x4x256xf32> to vector<4x256xf32>
    %272 = vector.broadcast %24 : vector<1x256xf32> to vector<4x256xf32>
    %273 = arith.mulf %271, %272 : vector<4x256xf32>
    %274 = vector.extract_strided_slice %50 {offsets = [0, 32], sizes = [4, 1], strides = [1, 1]} : vector<4x36xf32> to vector<4x1xf32>
    %275 = vector.extract_strided_slice %273 {offsets = [0, 0], sizes = [1, 256], strides = [1, 1]} : vector<4x256xf32> to vector<1x256xf32>
    %276 = vector.broadcast %274 : vector<4x1xf32> to vector<4x256xf32>
    %277 = vector.broadcast %275 : vector<1x256xf32> to vector<4x256xf32>
    %278 = arith.mulf %276, %277 : vector<4x256xf32>
    %279 = arith.addf %269, %278 : vector<4x256xf32>
    %280 = vector.extract_strided_slice %50 {offsets = [0, 33], sizes = [4, 1], strides = [1, 1]} : vector<4x36xf32> to vector<4x1xf32>
    %281 = vector.extract_strided_slice %273 {offsets = [1, 0], sizes = [1, 256], strides = [1, 1]} : vector<4x256xf32> to vector<1x256xf32>
    %282 = vector.broadcast %280 : vector<4x1xf32> to vector<4x256xf32>
    %283 = vector.broadcast %281 : vector<1x256xf32> to vector<4x256xf32>
    %284 = arith.mulf %282, %283 : vector<4x256xf32>
    %285 = arith.addf %279, %284 : vector<4x256xf32>
    %286 = vector.extract_strided_slice %50 {offsets = [0, 34], sizes = [4, 1], strides = [1, 1]} : vector<4x36xf32> to vector<4x1xf32>
    %287 = vector.extract_strided_slice %273 {offsets = [2, 0], sizes = [1, 256], strides = [1, 1]} : vector<4x256xf32> to vector<1x256xf32>
    %288 = vector.broadcast %286 : vector<4x1xf32> to vector<4x256xf32>
    %289 = vector.broadcast %287 : vector<1x256xf32> to vector<4x256xf32>
    %290 = arith.mulf %288, %289 : vector<4x256xf32>
    %291 = arith.addf %285, %290 : vector<4x256xf32>
    %292 = vector.extract_strided_slice %50 {offsets = [0, 35], sizes = [4, 1], strides = [1, 1]} : vector<4x36xf32> to vector<4x1xf32>
    %293 = vector.extract_strided_slice %273 {offsets = [3, 0], sizes = [1, 256], strides = [1, 1]} : vector<4x256xf32> to vector<1x256xf32>
    %294 = vector.broadcast %292 : vector<4x1xf32> to vector<4x256xf32>
    %295 = vector.broadcast %293 : vector<1x256xf32> to vector<4x256xf32>
    %296 = arith.mulf %294, %295 : vector<4x256xf32>
    %297 = arith.addf %291, %296 : vector<4x256xf32>
    %c0_30 = arith.constant 0 : index
    %c0_31 = arith.constant 0 : index
    %298 = vector.load %arg7[%c0_30, %c0_31] : memref<4x36xf32, #tpu.memory_space<vmem>>, vector<4x36xf32>
    %cst_32 = arith.constant 0.000000e+00 : f32
    %299 = vector.broadcast %cst_32 : f32 to vector<4x64xf32>
    %c0_33 = arith.constant 0 : index
    %c0_34 = arith.constant 0 : index
    %c0_35 = arith.constant 0 : index
    %300 = vector.load %arg2[%c0_33, %c0_34, %c0_35] : memref<1x4x82xf32, #tpu.memory_space<vmem>>, vector<1x4x64xf32>
    %301 = vector.shape_cast %300 : vector<1x4x64xf32> to vector<4x64xf32>
    %302 = vector.broadcast %45 : vector<1x64xf32> to vector<4x64xf32>
    %303 = arith.mulf %301, %302 : vector<4x64xf32>
    %304 = vector.extract_strided_slice %298 {offsets = [0, 0], sizes = [4, 1], strides = [1, 1]} : vector<4x36xf32> to vector<4x1xf32>
    %305 = vector.extract_strided_slice %303 {offsets = [0, 0], sizes = [1, 64], strides = [1, 1]} : vector<4x64xf32> to vector<1x64xf32>
    %306 = vector.broadcast %304 : vector<4x1xf32> to vector<4x64xf32>
    %307 = vector.broadcast %305 : vector<1x64xf32> to vector<4x64xf32>
    %308 = arith.mulf %306, %307 : vector<4x64xf32>
    %309 = arith.addf %299, %308 : vector<4x64xf32>
    %310 = vector.extract_strided_slice %298 {offsets = [0, 1], sizes = [4, 1], strides = [1, 1]} : vector<4x36xf32> to vector<4x1xf32>
    %311 = vector.extract_strided_slice %303 {offsets = [1, 0], sizes = [1, 64], strides = [1, 1]} : vector<4x64xf32> to vector<1x64xf32>
    %312 = vector.broadcast %310 : vector<4x1xf32> to vector<4x64xf32>
    %313 = vector.broadcast %311 : vector<1x64xf32> to vector<4x64xf32>
    %314 = arith.mulf %312, %313 : vector<4x64xf32>
    %315 = arith.addf %309, %314 : vector<4x64xf32>
    %316 = vector.extract_strided_slice %298 {offsets = [0, 2], sizes = [4, 1], strides = [1, 1]} : vector<4x36xf32> to vector<4x1xf32>
    %317 = vector.extract_strided_slice %303 {offsets = [2, 0], sizes = [1, 64], strides = [1, 1]} : vector<4x64xf32> to vector<1x64xf32>
    %318 = vector.broadcast %316 : vector<4x1xf32> to vector<4x64xf32>
    %319 = vector.broadcast %317 : vector<1x64xf32> to vector<4x64xf32>
    %320 = arith.mulf %318, %319 : vector<4x64xf32>
    %321 = arith.addf %315, %320 : vector<4x64xf32>
    %322 = vector.extract_strided_slice %298 {offsets = [0, 3], sizes = [4, 1], strides = [1, 1]} : vector<4x36xf32> to vector<4x1xf32>
    %323 = vector.extract_strided_slice %303 {offsets = [3, 0], sizes = [1, 64], strides = [1, 1]} : vector<4x64xf32> to vector<1x64xf32>
    %324 = vector.broadcast %322 : vector<4x1xf32> to vector<4x64xf32>
    %325 = vector.broadcast %323 : vector<1x64xf32> to vector<4x64xf32>
    %326 = arith.mulf %324, %325 : vector<4x64xf32>
    %327 = arith.addf %321, %326 : vector<4x64xf32>
    %c0_36 = arith.constant 0 : index
    %c0_37 = arith.constant 0 : index
    %c1_38 = arith.constant 1 : index
    %328 = vector.load %arg2[%c0_36, %c0_37, %c1_38] : memref<1x4x82xf32, #tpu.memory_space<vmem>>, vector<1x4x64xf32>
    %329 = vector.shape_cast %328 : vector<1x4x64xf32> to vector<4x64xf32>
    %330 = vector.extract_strided_slice %298 {offsets = [0, 4], sizes = [4, 1], strides = [1, 1]} : vector<4x36xf32> to vector<4x1xf32>
    %331 = vector.extract_strided_slice %329 {offsets = [0, 0], sizes = [1, 64], strides = [1, 1]} : vector<4x64xf32> to vector<1x64xf32>
    %332 = vector.broadcast %330 : vector<4x1xf32> to vector<4x64xf32>
    %333 = vector.broadcast %331 : vector<1x64xf32> to vector<4x64xf32>
    %334 = arith.mulf %332, %333 : vector<4x64xf32>
    %335 = arith.addf %327, %334 : vector<4x64xf32>
    %336 = vector.extract_strided_slice %298 {offsets = [0, 5], sizes = [4, 1], strides = [1, 1]} : vector<4x36xf32> to vector<4x1xf32>
    %337 = vector.extract_strided_slice %329 {offsets = [1, 0], sizes = [1, 64], strides = [1, 1]} : vector<4x64xf32> to vector<1x64xf32>
    %338 = vector.broadcast %336 : vector<4x1xf32> to vector<4x64xf32>
    %339 = vector.broadcast %337 : vector<1x64xf32> to vector<4x64xf32>
    %340 = arith.mulf %338, %339 : vector<4x64xf32>
    %341 = arith.addf %335, %340 : vector<4x64xf32>
    %342 = vector.extract_strided_slice %298 {offsets = [0, 6], sizes = [4, 1], strides = [1, 1]} : vector<4x36xf32> to vector<4x1xf32>
    %343 = vector.extract_strided_slice %329 {offsets = [2, 0], sizes = [1, 64], strides = [1, 1]} : vector<4x64xf32> to vector<1x64xf32>
    %344 = vector.broadcast %342 : vector<4x1xf32> to vector<4x64xf32>
    %345 = vector.broadcast %343 : vector<1x64xf32> to vector<4x64xf32>
    %346 = arith.mulf %344, %345 : vector<4x64xf32>
    %347 = arith.addf %341, %346 : vector<4x64xf32>
    %348 = vector.extract_strided_slice %298 {offsets = [0, 7], sizes = [4, 1], strides = [1, 1]} : vector<4x36xf32> to vector<4x1xf32>
    %349 = vector.extract_strided_slice %329 {offsets = [3, 0], sizes = [1, 64], strides = [1, 1]} : vector<4x64xf32> to vector<1x64xf32>
    %350 = vector.broadcast %348 : vector<4x1xf32> to vector<4x64xf32>
    %351 = vector.broadcast %349 : vector<1x64xf32> to vector<4x64xf32>
    %352 = arith.mulf %350, %351 : vector<4x64xf32>
    %353 = arith.addf %347, %352 : vector<4x64xf32>
    %c0_39 = arith.constant 0 : index
    %c0_40 = arith.constant 0 : index
    %c2_41 = arith.constant 2 : index
    %354 = vector.load %arg2[%c0_39, %c0_40, %c2_41] : memref<1x4x82xf32, #tpu.memory_space<vmem>>, vector<1x4x64xf32>
    %355 = vector.shape_cast %354 : vector<1x4x64xf32> to vector<4x64xf32>
    %356 = vector.broadcast %49 : vector<1x64xf32> to vector<4x64xf32>
    %357 = arith.mulf %355, %356 : vector<4x64xf32>
    %358 = vector.extract_strided_slice %298 {offsets = [0, 8], sizes = [4, 1], strides = [1, 1]} : vector<4x36xf32> to vector<4x1xf32>
    %359 = vector.extract_strided_slice %357 {offsets = [0, 0], sizes = [1, 64], strides = [1, 1]} : vector<4x64xf32> to vector<1x64xf32>
    %360 = vector.broadcast %358 : vector<4x1xf32> to vector<4x64xf32>
    %361 = vector.broadcast %359 : vector<1x64xf32> to vector<4x64xf32>
    %362 = arith.mulf %360, %361 : vector<4x64xf32>
    %363 = arith.addf %353, %362 : vector<4x64xf32>
    %364 = vector.extract_strided_slice %298 {offsets = [0, 9], sizes = [4, 1], strides = [1, 1]} : vector<4x36xf32> to vector<4x1xf32>
    %365 = vector.extract_strided_slice %357 {offsets = [1, 0], sizes = [1, 64], strides = [1, 1]} : vector<4x64xf32> to vector<1x64xf32>
    %366 = vector.broadcast %364 : vector<4x1xf32> to vector<4x64xf32>
    %367 = vector.broadcast %365 : vector<1x64xf32> to vector<4x64xf32>
    %368 = arith.mulf %366, %367 : vector<4x64xf32>
    %369 = arith.addf %363, %368 : vector<4x64xf32>
    %370 = vector.extract_strided_slice %298 {offsets = [0, 10], sizes = [4, 1], strides = [1, 1]} : vector<4x36xf32> to vector<4x1xf32>
    %371 = vector.extract_strided_slice %357 {offsets = [2, 0], sizes = [1, 64], strides = [1, 1]} : vector<4x64xf32> to vector<1x64xf32>
    %372 = vector.broadcast %370 : vector<4x1xf32> to vector<4x64xf32>
    %373 = vector.broadcast %371 : vector<1x64xf32> to vector<4x64xf32>
    %374 = arith.mulf %372, %373 : vector<4x64xf32>
    %375 = arith.addf %369, %374 : vector<4x64xf32>
    %376 = vector.extract_strided_slice %298 {offsets = [0, 11], sizes = [4, 1], strides = [1, 1]} : vector<4x36xf32> to vector<4x1xf32>
    %377 = vector.extract_strided_slice %357 {offsets = [3, 0], sizes = [1, 64], strides = [1, 1]} : vector<4x64xf32> to vector<1x64xf32>
    %378 = vector.broadcast %376 : vector<4x1xf32> to vector<4x64xf32>
    %379 = vector.broadcast %377 : vector<1x64xf32> to vector<4x64xf32>
    %380 = arith.mulf %378, %379 : vector<4x64xf32>
    %381 = arith.addf %375, %380 : vector<4x64xf32>
    %c0_42 = arith.constant 0 : index
    %c0_43 = arith.constant 0 : index
    %c8 = arith.constant 8 : index
    %382 = vector.load %arg2[%c0_42, %c0_43, %c8] : memref<1x4x82xf32, #tpu.memory_space<vmem>>, vector<1x4x64xf32>
    %383 = vector.shape_cast %382 : vector<1x4x64xf32> to vector<4x64xf32>
    %384 = vector.broadcast %45 : vector<1x64xf32> to vector<4x64xf32>
    %385 = arith.mulf %383, %384 : vector<4x64xf32>
    %386 = vector.extract_strided_slice %298 {offsets = [0, 12], sizes = [4, 1], strides = [1, 1]} : vector<4x36xf32> to vector<4x1xf32>
    %387 = vector.extract_strided_slice %385 {offsets = [0, 0], sizes = [1, 64], strides = [1, 1]} : vector<4x64xf32> to vector<1x64xf32>
    %388 = vector.broadcast %386 : vector<4x1xf32> to vector<4x64xf32>
    %389 = vector.broadcast %387 : vector<1x64xf32> to vector<4x64xf32>
    %390 = arith.mulf %388, %389 : vector<4x64xf32>
    %391 = arith.addf %381, %390 : vector<4x64xf32>
    %392 = vector.extract_strided_slice %298 {offsets = [0, 13], sizes = [4, 1], strides = [1, 1]} : vector<4x36xf32> to vector<4x1xf32>
    %393 = vector.extract_strided_slice %385 {offsets = [1, 0], sizes = [1, 64], strides = [1, 1]} : vector<4x64xf32> to vector<1x64xf32>
    %394 = vector.broadcast %392 : vector<4x1xf32> to vector<4x64xf32>
    %395 = vector.broadcast %393 : vector<1x64xf32> to vector<4x64xf32>
    %396 = arith.mulf %394, %395 : vector<4x64xf32>
    %397 = arith.addf %391, %396 : vector<4x64xf32>
    %398 = vector.extract_strided_slice %298 {offsets = [0, 14], sizes = [4, 1], strides = [1, 1]} : vector<4x36xf32> to vector<4x1xf32>
    %399 = vector.extract_strided_slice %385 {offsets = [2, 0], sizes = [1, 64], strides = [1, 1]} : vector<4x64xf32> to vector<1x64xf32>
    %400 = vector.broadcast %398 : vector<4x1xf32> to vector<4x64xf32>
    %401 = vector.broadcast %399 : vector<1x64xf32> to vector<4x64xf32>
    %402 = arith.mulf %400, %401 : vector<4x64xf32>
    %403 = arith.addf %397, %402 : vector<4x64xf32>
    %404 = vector.extract_strided_slice %298 {offsets = [0, 15], sizes = [4, 1], strides = [1, 1]} : vector<4x36xf32> to vector<4x1xf32>
    %405 = vector.extract_strided_slice %385 {offsets = [3, 0], sizes = [1, 64], strides = [1, 1]} : vector<4x64xf32> to vector<1x64xf32>
    %406 = vector.broadcast %404 : vector<4x1xf32> to vector<4x64xf32>
    %407 = vector.broadcast %405 : vector<1x64xf32> to vector<4x64xf32>
    %408 = arith.mulf %406, %407 : vector<4x64xf32>
    %409 = arith.addf %403, %408 : vector<4x64xf32>
    %c0_44 = arith.constant 0 : index
    %c0_45 = arith.constant 0 : index
    %c9 = arith.constant 9 : index
    %410 = vector.load %arg2[%c0_44, %c0_45, %c9] : memref<1x4x82xf32, #tpu.memory_space<vmem>>, vector<1x4x64xf32>
    %411 = vector.shape_cast %410 : vector<1x4x64xf32> to vector<4x64xf32>
    %412 = vector.extract_strided_slice %298 {offsets = [0, 16], sizes = [4, 1], strides = [1, 1]} : vector<4x36xf32> to vector<4x1xf32>
    %413 = vector.extract_strided_slice %411 {offsets = [0, 0], sizes = [1, 64], strides = [1, 1]} : vector<4x64xf32> to vector<1x64xf32>
    %414 = vector.broadcast %412 : vector<4x1xf32> to vector<4x64xf32>
    %415 = vector.broadcast %413 : vector<1x64xf32> to vector<4x64xf32>
    %416 = arith.mulf %414, %415 : vector<4x64xf32>
    %417 = arith.addf %409, %416 : vector<4x64xf32>
    %418 = vector.extract_strided_slice %298 {offsets = [0, 17], sizes = [4, 1], strides = [1, 1]} : vector<4x36xf32> to vector<4x1xf32>
    %419 = vector.extract_strided_slice %411 {offsets = [1, 0], sizes = [1, 64], strides = [1, 1]} : vector<4x64xf32> to vector<1x64xf32>
    %420 = vector.broadcast %418 : vector<4x1xf32> to vector<4x64xf32>
    %421 = vector.broadcast %419 : vector<1x64xf32> to vector<4x64xf32>
    %422 = arith.mulf %420, %421 : vector<4x64xf32>
    %423 = arith.addf %417, %422 : vector<4x64xf32>
    %424 = vector.extract_strided_slice %298 {offsets = [0, 18], sizes = [4, 1], strides = [1, 1]} : vector<4x36xf32> to vector<4x1xf32>
    %425 = vector.extract_strided_slice %411 {offsets = [2, 0], sizes = [1, 64], strides = [1, 1]} : vector<4x64xf32> to vector<1x64xf32>
    %426 = vector.broadcast %424 : vector<4x1xf32> to vector<4x64xf32>
    %427 = vector.broadcast %425 : vector<1x64xf32> to vector<4x64xf32>
    %428 = arith.mulf %426, %427 : vector<4x64xf32>
    %429 = arith.addf %423, %428 : vector<4x64xf32>
    %430 = vector.extract_strided_slice %298 {offsets = [0, 19], sizes = [4, 1], strides = [1, 1]} : vector<4x36xf32> to vector<4x1xf32>
    %431 = vector.extract_strided_slice %411 {offsets = [3, 0], sizes = [1, 64], strides = [1, 1]} : vector<4x64xf32> to vector<1x64xf32>
    %432 = vector.broadcast %430 : vector<4x1xf32> to vector<4x64xf32>
    %433 = vector.broadcast %431 : vector<1x64xf32> to vector<4x64xf32>
    %434 = arith.mulf %432, %433 : vector<4x64xf32>
    %435 = arith.addf %429, %434 : vector<4x64xf32>
    %c0_46 = arith.constant 0 : index
    %c0_47 = arith.constant 0 : index
    %c10 = arith.constant 10 : index
    %436 = vector.load %arg2[%c0_46, %c0_47, %c10] : memref<1x4x82xf32, #tpu.memory_space<vmem>>, vector<1x4x64xf32>
    %437 = vector.shape_cast %436 : vector<1x4x64xf32> to vector<4x64xf32>
    %438 = vector.broadcast %49 : vector<1x64xf32> to vector<4x64xf32>
    %439 = arith.mulf %437, %438 : vector<4x64xf32>
    %440 = vector.extract_strided_slice %298 {offsets = [0, 20], sizes = [4, 1], strides = [1, 1]} : vector<4x36xf32> to vector<4x1xf32>
    %441 = vector.extract_strided_slice %439 {offsets = [0, 0], sizes = [1, 64], strides = [1, 1]} : vector<4x64xf32> to vector<1x64xf32>
    %442 = vector.broadcast %440 : vector<4x1xf32> to vector<4x64xf32>
    %443 = vector.broadcast %441 : vector<1x64xf32> to vector<4x64xf32>
    %444 = arith.mulf %442, %443 : vector<4x64xf32>
    %445 = arith.addf %435, %444 : vector<4x64xf32>
    %446 = vector.extract_strided_slice %298 {offsets = [0, 21], sizes = [4, 1], strides = [1, 1]} : vector<4x36xf32> to vector<4x1xf32>
    %447 = vector.extract_strided_slice %439 {offsets = [1, 0], sizes = [1, 64], strides = [1, 1]} : vector<4x64xf32> to vector<1x64xf32>
    %448 = vector.broadcast %446 : vector<4x1xf32> to vector<4x64xf32>
    %449 = vector.broadcast %447 : vector<1x64xf32> to vector<4x64xf32>
    %450 = arith.mulf %448, %449 : vector<4x64xf32>
    %451 = arith.addf %445, %450 : vector<4x64xf32>
    %452 = vector.extract_strided_slice %298 {offsets = [0, 22], sizes = [4, 1], strides = [1, 1]} : vector<4x36xf32> to vector<4x1xf32>
    %453 = vector.extract_strided_slice %439 {offsets = [2, 0], sizes = [1, 64], strides = [1, 1]} : vector<4x64xf32> to vector<1x64xf32>
    %454 = vector.broadcast %452 : vector<4x1xf32> to vector<4x64xf32>
    %455 = vector.broadcast %453 : vector<1x64xf32> to vector<4x64xf32>
    %456 = arith.mulf %454, %455 : vector<4x64xf32>
    %457 = arith.addf %451, %456 : vector<4x64xf32>
    %458 = vector.extract_strided_slice %298 {offsets = [0, 23], sizes = [4, 1], strides = [1, 1]} : vector<4x36xf32> to vector<4x1xf32>
    %459 = vector.extract_strided_slice %439 {offsets = [3, 0], sizes = [1, 64], strides = [1, 1]} : vector<4x64xf32> to vector<1x64xf32>
    %460 = vector.broadcast %458 : vector<4x1xf32> to vector<4x64xf32>
    %461 = vector.broadcast %459 : vector<1x64xf32> to vector<4x64xf32>
    %462 = arith.mulf %460, %461 : vector<4x64xf32>
    %463 = arith.addf %457, %462 : vector<4x64xf32>
    %c0_48 = arith.constant 0 : index
    %c0_49 = arith.constant 0 : index
    %c16_50 = arith.constant 16 : index
    %464 = vector.load %arg2[%c0_48, %c0_49, %c16_50] : memref<1x4x82xf32, #tpu.memory_space<vmem>>, vector<1x4x64xf32>
    %465 = vector.shape_cast %464 : vector<1x4x64xf32> to vector<4x64xf32>
    %466 = vector.broadcast %45 : vector<1x64xf32> to vector<4x64xf32>
    %467 = arith.mulf %465, %466 : vector<4x64xf32>
    %468 = vector.extract_strided_slice %298 {offsets = [0, 24], sizes = [4, 1], strides = [1, 1]} : vector<4x36xf32> to vector<4x1xf32>
    %469 = vector.extract_strided_slice %467 {offsets = [0, 0], sizes = [1, 64], strides = [1, 1]} : vector<4x64xf32> to vector<1x64xf32>
    %470 = vector.broadcast %468 : vector<4x1xf32> to vector<4x64xf32>
    %471 = vector.broadcast %469 : vector<1x64xf32> to vector<4x64xf32>
    %472 = arith.mulf %470, %471 : vector<4x64xf32>
    %473 = arith.addf %463, %472 : vector<4x64xf32>
    %474 = vector.extract_strided_slice %298 {offsets = [0, 25], sizes = [4, 1], strides = [1, 1]} : vector<4x36xf32> to vector<4x1xf32>
    %475 = vector.extract_strided_slice %467 {offsets = [1, 0], sizes = [1, 64], strides = [1, 1]} : vector<4x64xf32> to vector<1x64xf32>
    %476 = vector.broadcast %474 : vector<4x1xf32> to vector<4x64xf32>
    %477 = vector.broadcast %475 : vector<1x64xf32> to vector<4x64xf32>
    %478 = arith.mulf %476, %477 : vector<4x64xf32>
    %479 = arith.addf %473, %478 : vector<4x64xf32>
    %480 = vector.extract_strided_slice %298 {offsets = [0, 26], sizes = [4, 1], strides = [1, 1]} : vector<4x36xf32> to vector<4x1xf32>
    %481 = vector.extract_strided_slice %467 {offsets = [2, 0], sizes = [1, 64], strides = [1, 1]} : vector<4x64xf32> to vector<1x64xf32>
    %482 = vector.broadcast %480 : vector<4x1xf32> to vector<4x64xf32>
    %483 = vector.broadcast %481 : vector<1x64xf32> to vector<4x64xf32>
    %484 = arith.mulf %482, %483 : vector<4x64xf32>
    %485 = arith.addf %479, %484 : vector<4x64xf32>
    %486 = vector.extract_strided_slice %298 {offsets = [0, 27], sizes = [4, 1], strides = [1, 1]} : vector<4x36xf32> to vector<4x1xf32>
    %487 = vector.extract_strided_slice %467 {offsets = [3, 0], sizes = [1, 64], strides = [1, 1]} : vector<4x64xf32> to vector<1x64xf32>
    %488 = vector.broadcast %486 : vector<4x1xf32> to vector<4x64xf32>
    %489 = vector.broadcast %487 : vector<1x64xf32> to vector<4x64xf32>
    %490 = arith.mulf %488, %489 : vector<4x64xf32>
    %491 = arith.addf %485, %490 : vector<4x64xf32>
    %c0_51 = arith.constant 0 : index
    %c0_52 = arith.constant 0 : index
    %c17_53 = arith.constant 17 : index
    %492 = vector.load %arg2[%c0_51, %c0_52, %c17_53] : memref<1x4x82xf32, #tpu.memory_space<vmem>>, vector<1x4x64xf32>
    %493 = vector.shape_cast %492 : vector<1x4x64xf32> to vector<4x64xf32>
    %494 = vector.extract_strided_slice %298 {offsets = [0, 28], sizes = [4, 1], strides = [1, 1]} : vector<4x36xf32> to vector<4x1xf32>
    %495 = vector.extract_strided_slice %493 {offsets = [0, 0], sizes = [1, 64], strides = [1, 1]} : vector<4x64xf32> to vector<1x64xf32>
    %496 = vector.broadcast %494 : vector<4x1xf32> to vector<4x64xf32>
    %497 = vector.broadcast %495 : vector<1x64xf32> to vector<4x64xf32>
    %498 = arith.mulf %496, %497 : vector<4x64xf32>
    %499 = arith.addf %491, %498 : vector<4x64xf32>
    %500 = vector.extract_strided_slice %298 {offsets = [0, 29], sizes = [4, 1], strides = [1, 1]} : vector<4x36xf32> to vector<4x1xf32>
    %501 = vector.extract_strided_slice %493 {offsets = [1, 0], sizes = [1, 64], strides = [1, 1]} : vector<4x64xf32> to vector<1x64xf32>
    %502 = vector.broadcast %500 : vector<4x1xf32> to vector<4x64xf32>
    %503 = vector.broadcast %501 : vector<1x64xf32> to vector<4x64xf32>
    %504 = arith.mulf %502, %503 : vector<4x64xf32>
    %505 = arith.addf %499, %504 : vector<4x64xf32>
    %506 = vector.extract_strided_slice %298 {offsets = [0, 30], sizes = [4, 1], strides = [1, 1]} : vector<4x36xf32> to vector<4x1xf32>
    %507 = vector.extract_strided_slice %493 {offsets = [2, 0], sizes = [1, 64], strides = [1, 1]} : vector<4x64xf32> to vector<1x64xf32>
    %508 = vector.broadcast %506 : vector<4x1xf32> to vector<4x64xf32>
    %509 = vector.broadcast %507 : vector<1x64xf32> to vector<4x64xf32>
    %510 = arith.mulf %508, %509 : vector<4x64xf32>
    %511 = arith.addf %505, %510 : vector<4x64xf32>
    %512 = vector.extract_strided_slice %298 {offsets = [0, 31], sizes = [4, 1], strides = [1, 1]} : vector<4x36xf32> to vector<4x1xf32>
    %513 = vector.extract_strided_slice %493 {offsets = [3, 0], sizes = [1, 64], strides = [1, 1]} : vector<4x64xf32> to vector<1x64xf32>
    %514 = vector.broadcast %512 : vector<4x1xf32> to vector<4x64xf32>
    %515 = vector.broadcast %513 : vector<1x64xf32> to vector<4x64xf32>
    %516 = arith.mulf %514, %515 : vector<4x64xf32>
    %517 = arith.addf %511, %516 : vector<4x64xf32>
    %c0_54 = arith.constant 0 : index
    %c0_55 = arith.constant 0 : index
    %c18_56 = arith.constant 18 : index
    %518 = vector.load %arg2[%c0_54, %c0_55, %c18_56] : memref<1x4x82xf32, #tpu.memory_space<vmem>>, vector<1x4x64xf32>
    %519 = vector.shape_cast %518 : vector<1x4x64xf32> to vector<4x64xf32>
    %520 = vector.broadcast %49 : vector<1x64xf32> to vector<4x64xf32>
    %521 = arith.mulf %519, %520 : vector<4x64xf32>
    %522 = vector.extract_strided_slice %298 {offsets = [0, 32], sizes = [4, 1], strides = [1, 1]} : vector<4x36xf32> to vector<4x1xf32>
    %523 = vector.extract_strided_slice %521 {offsets = [0, 0], sizes = [1, 64], strides = [1, 1]} : vector<4x64xf32> to vector<1x64xf32>
    %524 = vector.broadcast %522 : vector<4x1xf32> to vector<4x64xf32>
    %525 = vector.broadcast %523 : vector<1x64xf32> to vector<4x64xf32>
    %526 = arith.mulf %524, %525 : vector<4x64xf32>
    %527 = arith.addf %517, %526 : vector<4x64xf32>
    %528 = vector.extract_strided_slice %298 {offsets = [0, 33], sizes = [4, 1], strides = [1, 1]} : vector<4x36xf32> to vector<4x1xf32>
    %529 = vector.extract_strided_slice %521 {offsets = [1, 0], sizes = [1, 64], strides = [1, 1]} : vector<4x64xf32> to vector<1x64xf32>
    %530 = vector.broadcast %528 : vector<4x1xf32> to vector<4x64xf32>
    %531 = vector.broadcast %529 : vector<1x64xf32> to vector<4x64xf32>
    %532 = arith.mulf %530, %531 : vector<4x64xf32>
    %533 = arith.addf %527, %532 : vector<4x64xf32>
    %534 = vector.extract_strided_slice %298 {offsets = [0, 34], sizes = [4, 1], strides = [1, 1]} : vector<4x36xf32> to vector<4x1xf32>
    %535 = vector.extract_strided_slice %521 {offsets = [2, 0], sizes = [1, 64], strides = [1, 1]} : vector<4x64xf32> to vector<1x64xf32>
    %536 = vector.broadcast %534 : vector<4x1xf32> to vector<4x64xf32>
    %537 = vector.broadcast %535 : vector<1x64xf32> to vector<4x64xf32>
    %538 = arith.mulf %536, %537 : vector<4x64xf32>
    %539 = arith.addf %533, %538 : vector<4x64xf32>
    %540 = vector.extract_strided_slice %298 {offsets = [0, 35], sizes = [4, 1], strides = [1, 1]} : vector<4x36xf32> to vector<4x1xf32>
    %541 = vector.extract_strided_slice %521 {offsets = [3, 0], sizes = [1, 64], strides = [1, 1]} : vector<4x64xf32> to vector<1x64xf32>
    %542 = vector.broadcast %540 : vector<4x1xf32> to vector<4x64xf32>
    %543 = vector.broadcast %541 : vector<1x64xf32> to vector<4x64xf32>
    %544 = arith.mulf %542, %543 : vector<4x64xf32>
    %545 = arith.addf %539, %544 : vector<4x64xf32>
    %c0_57 = arith.constant 0 : index
    %c0_58 = arith.constant 0 : index
    %546 = vector.load %arg6[%c0_57, %c0_58] : memref<4x36xf32, #tpu.memory_space<vmem>>, vector<4x36xf32>
    %cst_59 = arith.constant 0.000000e+00 : f32
    %547 = vector.broadcast %cst_59 : f32 to vector<4x64xf32>
    %c0_60 = arith.constant 0 : index
    %c0_61 = arith.constant 0 : index
    %c0_62 = arith.constant 0 : index
    %548 = vector.load %arg2[%c0_60, %c0_61, %c0_62] : memref<1x4x82xf32, #tpu.memory_space<vmem>>, vector<1x4x64xf32>
    %549 = vector.shape_cast %548 : vector<1x4x64xf32> to vector<4x64xf32>
    %550 = vector.broadcast %45 : vector<1x64xf32> to vector<4x64xf32>
    %551 = arith.mulf %549, %550 : vector<4x64xf32>
    %552 = vector.extract_strided_slice %546 {offsets = [0, 0], sizes = [4, 1], strides = [1, 1]} : vector<4x36xf32> to vector<4x1xf32>
    %553 = vector.extract_strided_slice %551 {offsets = [0, 0], sizes = [1, 64], strides = [1, 1]} : vector<4x64xf32> to vector<1x64xf32>
    %554 = vector.broadcast %552 : vector<4x1xf32> to vector<4x64xf32>
    %555 = vector.broadcast %553 : vector<1x64xf32> to vector<4x64xf32>
    %556 = arith.mulf %554, %555 : vector<4x64xf32>
    %557 = arith.addf %547, %556 : vector<4x64xf32>
    %558 = vector.extract_strided_slice %546 {offsets = [0, 1], sizes = [4, 1], strides = [1, 1]} : vector<4x36xf32> to vector<4x1xf32>
    %559 = vector.extract_strided_slice %551 {offsets = [1, 0], sizes = [1, 64], strides = [1, 1]} : vector<4x64xf32> to vector<1x64xf32>
    %560 = vector.broadcast %558 : vector<4x1xf32> to vector<4x64xf32>
    %561 = vector.broadcast %559 : vector<1x64xf32> to vector<4x64xf32>
    %562 = arith.mulf %560, %561 : vector<4x64xf32>
    %563 = arith.addf %557, %562 : vector<4x64xf32>
    %564 = vector.extract_strided_slice %546 {offsets = [0, 2], sizes = [4, 1], strides = [1, 1]} : vector<4x36xf32> to vector<4x1xf32>
    %565 = vector.extract_strided_slice %551 {offsets = [2, 0], sizes = [1, 64], strides = [1, 1]} : vector<4x64xf32> to vector<1x64xf32>
    %566 = vector.broadcast %564 : vector<4x1xf32> to vector<4x64xf32>
    %567 = vector.broadcast %565 : vector<1x64xf32> to vector<4x64xf32>
    %568 = arith.mulf %566, %567 : vector<4x64xf32>
    %569 = arith.addf %563, %568 : vector<4x64xf32>
    %570 = vector.extract_strided_slice %546 {offsets = [0, 3], sizes = [4, 1], strides = [1, 1]} : vector<4x36xf32> to vector<4x1xf32>
    %571 = vector.extract_strided_slice %551 {offsets = [3, 0], sizes = [1, 64], strides = [1, 1]} : vector<4x64xf32> to vector<1x64xf32>
    %572 = vector.broadcast %570 : vector<4x1xf32> to vector<4x64xf32>
    %573 = vector.broadcast %571 : vector<1x64xf32> to vector<4x64xf32>
    %574 = arith.mulf %572, %573 : vector<4x64xf32>
    %575 = arith.addf %569, %574 : vector<4x64xf32>
    %c0_63 = arith.constant 0 : index
    %c0_64 = arith.constant 0 : index
    %c1_65 = arith.constant 1 : index
    %576 = vector.load %arg2[%c0_63, %c0_64, %c1_65] : memref<1x4x82xf32, #tpu.memory_space<vmem>>, vector<1x4x64xf32>
    %577 = vector.shape_cast %576 : vector<1x4x64xf32> to vector<4x64xf32>
    %578 = vector.extract_strided_slice %546 {offsets = [0, 4], sizes = [4, 1], strides = [1, 1]} : vector<4x36xf32> to vector<4x1xf32>
    %579 = vector.extract_strided_slice %577 {offsets = [0, 0], sizes = [1, 64], strides = [1, 1]} : vector<4x64xf32> to vector<1x64xf32>
    %580 = vector.broadcast %578 : vector<4x1xf32> to vector<4x64xf32>
    %581 = vector.broadcast %579 : vector<1x64xf32> to vector<4x64xf32>
    %582 = arith.mulf %580, %581 : vector<4x64xf32>
    %583 = arith.addf %575, %582 : vector<4x64xf32>
    %584 = vector.extract_strided_slice %546 {offsets = [0, 5], sizes = [4, 1], strides = [1, 1]} : vector<4x36xf32> to vector<4x1xf32>
    %585 = vector.extract_strided_slice %577 {offsets = [1, 0], sizes = [1, 64], strides = [1, 1]} : vector<4x64xf32> to vector<1x64xf32>
    %586 = vector.broadcast %584 : vector<4x1xf32> to vector<4x64xf32>
    %587 = vector.broadcast %585 : vector<1x64xf32> to vector<4x64xf32>
    %588 = arith.mulf %586, %587 : vector<4x64xf32>
    %589 = arith.addf %583, %588 : vector<4x64xf32>
    %590 = vector.extract_strided_slice %546 {offsets = [0, 6], sizes = [4, 1], strides = [1, 1]} : vector<4x36xf32> to vector<4x1xf32>
    %591 = vector.extract_strided_slice %577 {offsets = [2, 0], sizes = [1, 64], strides = [1, 1]} : vector<4x64xf32> to vector<1x64xf32>
    %592 = vector.broadcast %590 : vector<4x1xf32> to vector<4x64xf32>
    %593 = vector.broadcast %591 : vector<1x64xf32> to vector<4x64xf32>
    %594 = arith.mulf %592, %593 : vector<4x64xf32>
    %595 = arith.addf %589, %594 : vector<4x64xf32>
    %596 = vector.extract_strided_slice %546 {offsets = [0, 7], sizes = [4, 1], strides = [1, 1]} : vector<4x36xf32> to vector<4x1xf32>
    %597 = vector.extract_strided_slice %577 {offsets = [3, 0], sizes = [1, 64], strides = [1, 1]} : vector<4x64xf32> to vector<1x64xf32>
    %598 = vector.broadcast %596 : vector<4x1xf32> to vector<4x64xf32>
    %599 = vector.broadcast %597 : vector<1x64xf32> to vector<4x64xf32>
    %600 = arith.mulf %598, %599 : vector<4x64xf32>
    %601 = arith.addf %595, %600 : vector<4x64xf32>
    %c0_66 = arith.constant 0 : index
    %c0_67 = arith.constant 0 : index
    %c2_68 = arith.constant 2 : index
    %602 = vector.load %arg2[%c0_66, %c0_67, %c2_68] : memref<1x4x82xf32, #tpu.memory_space<vmem>>, vector<1x4x64xf32>
    %603 = vector.shape_cast %602 : vector<1x4x64xf32> to vector<4x64xf32>
    %604 = vector.broadcast %49 : vector<1x64xf32> to vector<4x64xf32>
    %605 = arith.mulf %603, %604 : vector<4x64xf32>
    %606 = vector.extract_strided_slice %546 {offsets = [0, 8], sizes = [4, 1], strides = [1, 1]} : vector<4x36xf32> to vector<4x1xf32>
    %607 = vector.extract_strided_slice %605 {offsets = [0, 0], sizes = [1, 64], strides = [1, 1]} : vector<4x64xf32> to vector<1x64xf32>
    %608 = vector.broadcast %606 : vector<4x1xf32> to vector<4x64xf32>
    %609 = vector.broadcast %607 : vector<1x64xf32> to vector<4x64xf32>
    %610 = arith.mulf %608, %609 : vector<4x64xf32>
    %611 = arith.addf %601, %610 : vector<4x64xf32>
    %612 = vector.extract_strided_slice %546 {offsets = [0, 9], sizes = [4, 1], strides = [1, 1]} : vector<4x36xf32> to vector<4x1xf32>
    %613 = vector.extract_strided_slice %605 {offsets = [1, 0], sizes = [1, 64], strides = [1, 1]} : vector<4x64xf32> to vector<1x64xf32>
    %614 = vector.broadcast %612 : vector<4x1xf32> to vector<4x64xf32>
    %615 = vector.broadcast %613 : vector<1x64xf32> to vector<4x64xf32>
    %616 = arith.mulf %614, %615 : vector<4x64xf32>
    %617 = arith.addf %611, %616 : vector<4x64xf32>
    %618 = vector.extract_strided_slice %546 {offsets = [0, 10], sizes = [4, 1], strides = [1, 1]} : vector<4x36xf32> to vector<4x1xf32>
    %619 = vector.extract_strided_slice %605 {offsets = [2, 0], sizes = [1, 64], strides = [1, 1]} : vector<4x64xf32> to vector<1x64xf32>
    %620 = vector.broadcast %618 : vector<4x1xf32> to vector<4x64xf32>
    %621 = vector.broadcast %619 : vector<1x64xf32> to vector<4x64xf32>
    %622 = arith.mulf %620, %621 : vector<4x64xf32>
    %623 = arith.addf %617, %622 : vector<4x64xf32>
    %624 = vector.extract_strided_slice %546 {offsets = [0, 11], sizes = [4, 1], strides = [1, 1]} : vector<4x36xf32> to vector<4x1xf32>
    %625 = vector.extract_strided_slice %605 {offsets = [3, 0], sizes = [1, 64], strides = [1, 1]} : vector<4x64xf32> to vector<1x64xf32>
    %626 = vector.broadcast %624 : vector<4x1xf32> to vector<4x64xf32>
    %627 = vector.broadcast %625 : vector<1x64xf32> to vector<4x64xf32>
    %628 = arith.mulf %626, %627 : vector<4x64xf32>
    %629 = arith.addf %623, %628 : vector<4x64xf32>
    %c0_69 = arith.constant 0 : index
    %c0_70 = arith.constant 0 : index
    %c8_71 = arith.constant 8 : index
    %630 = vector.load %arg2[%c0_69, %c0_70, %c8_71] : memref<1x4x82xf32, #tpu.memory_space<vmem>>, vector<1x4x64xf32>
    %631 = vector.shape_cast %630 : vector<1x4x64xf32> to vector<4x64xf32>
    %632 = vector.broadcast %45 : vector<1x64xf32> to vector<4x64xf32>
    %633 = arith.mulf %631, %632 : vector<4x64xf32>
    %634 = vector.extract_strided_slice %546 {offsets = [0, 12], sizes = [4, 1], strides = [1, 1]} : vector<4x36xf32> to vector<4x1xf32>
    %635 = vector.extract_strided_slice %633 {offsets = [0, 0], sizes = [1, 64], strides = [1, 1]} : vector<4x64xf32> to vector<1x64xf32>
    %636 = vector.broadcast %634 : vector<4x1xf32> to vector<4x64xf32>
    %637 = vector.broadcast %635 : vector<1x64xf32> to vector<4x64xf32>
    %638 = arith.mulf %636, %637 : vector<4x64xf32>
    %639 = arith.addf %629, %638 : vector<4x64xf32>
    %640 = vector.extract_strided_slice %546 {offsets = [0, 13], sizes = [4, 1], strides = [1, 1]} : vector<4x36xf32> to vector<4x1xf32>
    %641 = vector.extract_strided_slice %633 {offsets = [1, 0], sizes = [1, 64], strides = [1, 1]} : vector<4x64xf32> to vector<1x64xf32>
    %642 = vector.broadcast %640 : vector<4x1xf32> to vector<4x64xf32>
    %643 = vector.broadcast %641 : vector<1x64xf32> to vector<4x64xf32>
    %644 = arith.mulf %642, %643 : vector<4x64xf32>
    %645 = arith.addf %639, %644 : vector<4x64xf32>
    %646 = vector.extract_strided_slice %546 {offsets = [0, 14], sizes = [4, 1], strides = [1, 1]} : vector<4x36xf32> to vector<4x1xf32>
    %647 = vector.extract_strided_slice %633 {offsets = [2, 0], sizes = [1, 64], strides = [1, 1]} : vector<4x64xf32> to vector<1x64xf32>
    %648 = vector.broadcast %646 : vector<4x1xf32> to vector<4x64xf32>
    %649 = vector.broadcast %647 : vector<1x64xf32> to vector<4x64xf32>
    %650 = arith.mulf %648, %649 : vector<4x64xf32>
    %651 = arith.addf %645, %650 : vector<4x64xf32>
    %652 = vector.extract_strided_slice %546 {offsets = [0, 15], sizes = [4, 1], strides = [1, 1]} : vector<4x36xf32> to vector<4x1xf32>
    %653 = vector.extract_strided_slice %633 {offsets = [3, 0], sizes = [1, 64], strides = [1, 1]} : vector<4x64xf32> to vector<1x64xf32>
    %654 = vector.broadcast %652 : vector<4x1xf32> to vector<4x64xf32>
    %655 = vector.broadcast %653 : vector<1x64xf32> to vector<4x64xf32>
    %656 = arith.mulf %654, %655 : vector<4x64xf32>
    %657 = arith.addf %651, %656 : vector<4x64xf32>
    %c0_72 = arith.constant 0 : index
    %c0_73 = arith.constant 0 : index
    %c9_74 = arith.constant 9 : index
    %658 = vector.load %arg2[%c0_72, %c0_73, %c9_74] : memref<1x4x82xf32, #tpu.memory_space<vmem>>, vector<1x4x64xf32>
    %659 = vector.shape_cast %658 : vector<1x4x64xf32> to vector<4x64xf32>
    %660 = vector.extract_strided_slice %546 {offsets = [0, 16], sizes = [4, 1], strides = [1, 1]} : vector<4x36xf32> to vector<4x1xf32>
    %661 = vector.extract_strided_slice %659 {offsets = [0, 0], sizes = [1, 64], strides = [1, 1]} : vector<4x64xf32> to vector<1x64xf32>
    %662 = vector.broadcast %660 : vector<4x1xf32> to vector<4x64xf32>
    %663 = vector.broadcast %661 : vector<1x64xf32> to vector<4x64xf32>
    %664 = arith.mulf %662, %663 : vector<4x64xf32>
    %665 = arith.addf %657, %664 : vector<4x64xf32>
    %666 = vector.extract_strided_slice %546 {offsets = [0, 17], sizes = [4, 1], strides = [1, 1]} : vector<4x36xf32> to vector<4x1xf32>
    %667 = vector.extract_strided_slice %659 {offsets = [1, 0], sizes = [1, 64], strides = [1, 1]} : vector<4x64xf32> to vector<1x64xf32>
    %668 = vector.broadcast %666 : vector<4x1xf32> to vector<4x64xf32>
    %669 = vector.broadcast %667 : vector<1x64xf32> to vector<4x64xf32>
    %670 = arith.mulf %668, %669 : vector<4x64xf32>
    %671 = arith.addf %665, %670 : vector<4x64xf32>
    %672 = vector.extract_strided_slice %546 {offsets = [0, 18], sizes = [4, 1], strides = [1, 1]} : vector<4x36xf32> to vector<4x1xf32>
    %673 = vector.extract_strided_slice %659 {offsets = [2, 0], sizes = [1, 64], strides = [1, 1]} : vector<4x64xf32> to vector<1x64xf32>
    %674 = vector.broadcast %672 : vector<4x1xf32> to vector<4x64xf32>
    %675 = vector.broadcast %673 : vector<1x64xf32> to vector<4x64xf32>
    %676 = arith.mulf %674, %675 : vector<4x64xf32>
    %677 = arith.addf %671, %676 : vector<4x64xf32>
    %678 = vector.extract_strided_slice %546 {offsets = [0, 19], sizes = [4, 1], strides = [1, 1]} : vector<4x36xf32> to vector<4x1xf32>
    %679 = vector.extract_strided_slice %659 {offsets = [3, 0], sizes = [1, 64], strides = [1, 1]} : vector<4x64xf32> to vector<1x64xf32>
    %680 = vector.broadcast %678 : vector<4x1xf32> to vector<4x64xf32>
    %681 = vector.broadcast %679 : vector<1x64xf32> to vector<4x64xf32>
    %682 = arith.mulf %680, %681 : vector<4x64xf32>
    %683 = arith.addf %677, %682 : vector<4x64xf32>
    %c0_75 = arith.constant 0 : index
    %c0_76 = arith.constant 0 : index
    %c10_77 = arith.constant 10 : index
    %684 = vector.load %arg2[%c0_75, %c0_76, %c10_77] : memref<1x4x82xf32, #tpu.memory_space<vmem>>, vector<1x4x64xf32>
    %685 = vector.shape_cast %684 : vector<1x4x64xf32> to vector<4x64xf32>
    %686 = vector.broadcast %49 : vector<1x64xf32> to vector<4x64xf32>
    %687 = arith.mulf %685, %686 : vector<4x64xf32>
    %688 = vector.extract_strided_slice %546 {offsets = [0, 20], sizes = [4, 1], strides = [1, 1]} : vector<4x36xf32> to vector<4x1xf32>
    %689 = vector.extract_strided_slice %687 {offsets = [0, 0], sizes = [1, 64], strides = [1, 1]} : vector<4x64xf32> to vector<1x64xf32>
    %690 = vector.broadcast %688 : vector<4x1xf32> to vector<4x64xf32>
    %691 = vector.broadcast %689 : vector<1x64xf32> to vector<4x64xf32>
    %692 = arith.mulf %690, %691 : vector<4x64xf32>
    %693 = arith.addf %683, %692 : vector<4x64xf32>
    %694 = vector.extract_strided_slice %546 {offsets = [0, 21], sizes = [4, 1], strides = [1, 1]} : vector<4x36xf32> to vector<4x1xf32>
    %695 = vector.extract_strided_slice %687 {offsets = [1, 0], sizes = [1, 64], strides = [1, 1]} : vector<4x64xf32> to vector<1x64xf32>
    %696 = vector.broadcast %694 : vector<4x1xf32> to vector<4x64xf32>
    %697 = vector.broadcast %695 : vector<1x64xf32> to vector<4x64xf32>
    %698 = arith.mulf %696, %697 : vector<4x64xf32>
    %699 = arith.addf %693, %698 : vector<4x64xf32>
    %700 = vector.extract_strided_slice %546 {offsets = [0, 22], sizes = [4, 1], strides = [1, 1]} : vector<4x36xf32> to vector<4x1xf32>
    %701 = vector.extract_strided_slice %687 {offsets = [2, 0], sizes = [1, 64], strides = [1, 1]} : vector<4x64xf32> to vector<1x64xf32>
    %702 = vector.broadcast %700 : vector<4x1xf32> to vector<4x64xf32>
    %703 = vector.broadcast %701 : vector<1x64xf32> to vector<4x64xf32>
    %704 = arith.mulf %702, %703 : vector<4x64xf32>
    %705 = arith.addf %699, %704 : vector<4x64xf32>
    %706 = vector.extract_strided_slice %546 {offsets = [0, 23], sizes = [4, 1], strides = [1, 1]} : vector<4x36xf32> to vector<4x1xf32>
    %707 = vector.extract_strided_slice %687 {offsets = [3, 0], sizes = [1, 64], strides = [1, 1]} : vector<4x64xf32> to vector<1x64xf32>
    %708 = vector.broadcast %706 : vector<4x1xf32> to vector<4x64xf32>
    %709 = vector.broadcast %707 : vector<1x64xf32> to vector<4x64xf32>
    %710 = arith.mulf %708, %709 : vector<4x64xf32>
    %711 = arith.addf %705, %710 : vector<4x64xf32>
    %c0_78 = arith.constant 0 : index
    %c0_79 = arith.constant 0 : index
    %c16_80 = arith.constant 16 : index
    %712 = vector.load %arg2[%c0_78, %c0_79, %c16_80] : memref<1x4x82xf32, #tpu.memory_space<vmem>>, vector<1x4x64xf32>
    %713 = vector.shape_cast %712 : vector<1x4x64xf32> to vector<4x64xf32>
    %714 = vector.broadcast %45 : vector<1x64xf32> to vector<4x64xf32>
    %715 = arith.mulf %713, %714 : vector<4x64xf32>
    %716 = vector.extract_strided_slice %546 {offsets = [0, 24], sizes = [4, 1], strides = [1, 1]} : vector<4x36xf32> to vector<4x1xf32>
    %717 = vector.extract_strided_slice %715 {offsets = [0, 0], sizes = [1, 64], strides = [1, 1]} : vector<4x64xf32> to vector<1x64xf32>
    %718 = vector.broadcast %716 : vector<4x1xf32> to vector<4x64xf32>
    %719 = vector.broadcast %717 : vector<1x64xf32> to vector<4x64xf32>
    %720 = arith.mulf %718, %719 : vector<4x64xf32>
    %721 = arith.addf %711, %720 : vector<4x64xf32>
    %722 = vector.extract_strided_slice %546 {offsets = [0, 25], sizes = [4, 1], strides = [1, 1]} : vector<4x36xf32> to vector<4x1xf32>
    %723 = vector.extract_strided_slice %715 {offsets = [1, 0], sizes = [1, 64], strides = [1, 1]} : vector<4x64xf32> to vector<1x64xf32>
    %724 = vector.broadcast %722 : vector<4x1xf32> to vector<4x64xf32>
    %725 = vector.broadcast %723 : vector<1x64xf32> to vector<4x64xf32>
    %726 = arith.mulf %724, %725 : vector<4x64xf32>
    %727 = arith.addf %721, %726 : vector<4x64xf32>
    %728 = vector.extract_strided_slice %546 {offsets = [0, 26], sizes = [4, 1], strides = [1, 1]} : vector<4x36xf32> to vector<4x1xf32>
    %729 = vector.extract_strided_slice %715 {offsets = [2, 0], sizes = [1, 64], strides = [1, 1]} : vector<4x64xf32> to vector<1x64xf32>
    %730 = vector.broadcast %728 : vector<4x1xf32> to vector<4x64xf32>
    %731 = vector.broadcast %729 : vector<1x64xf32> to vector<4x64xf32>
    %732 = arith.mulf %730, %731 : vector<4x64xf32>
    %733 = arith.addf %727, %732 : vector<4x64xf32>
    %734 = vector.extract_strided_slice %546 {offsets = [0, 27], sizes = [4, 1], strides = [1, 1]} : vector<4x36xf32> to vector<4x1xf32>
    %735 = vector.extract_strided_slice %715 {offsets = [3, 0], sizes = [1, 64], strides = [1, 1]} : vector<4x64xf32> to vector<1x64xf32>
    %736 = vector.broadcast %734 : vector<4x1xf32> to vector<4x64xf32>
    %737 = vector.broadcast %735 : vector<1x64xf32> to vector<4x64xf32>
    %738 = arith.mulf %736, %737 : vector<4x64xf32>
    %739 = arith.addf %733, %738 : vector<4x64xf32>
    %c0_81 = arith.constant 0 : index
    %c0_82 = arith.constant 0 : index
    %c17_83 = arith.constant 17 : index
    %740 = vector.load %arg2[%c0_81, %c0_82, %c17_83] : memref<1x4x82xf32, #tpu.memory_space<vmem>>, vector<1x4x64xf32>
    %741 = vector.shape_cast %740 : vector<1x4x64xf32> to vector<4x64xf32>
    %742 = vector.extract_strided_slice %546 {offsets = [0, 28], sizes = [4, 1], strides = [1, 1]} : vector<4x36xf32> to vector<4x1xf32>
    %743 = vector.extract_strided_slice %741 {offsets = [0, 0], sizes = [1, 64], strides = [1, 1]} : vector<4x64xf32> to vector<1x64xf32>
    %744 = vector.broadcast %742 : vector<4x1xf32> to vector<4x64xf32>
    %745 = vector.broadcast %743 : vector<1x64xf32> to vector<4x64xf32>
    %746 = arith.mulf %744, %745 : vector<4x64xf32>
    %747 = arith.addf %739, %746 : vector<4x64xf32>
    %748 = vector.extract_strided_slice %546 {offsets = [0, 29], sizes = [4, 1], strides = [1, 1]} : vector<4x36xf32> to vector<4x1xf32>
    %749 = vector.extract_strided_slice %741 {offsets = [1, 0], sizes = [1, 64], strides = [1, 1]} : vector<4x64xf32> to vector<1x64xf32>
    %750 = vector.broadcast %748 : vector<4x1xf32> to vector<4x64xf32>
    %751 = vector.broadcast %749 : vector<1x64xf32> to vector<4x64xf32>
    %752 = arith.mulf %750, %751 : vector<4x64xf32>
    %753 = arith.addf %747, %752 : vector<4x64xf32>
    %754 = vector.extract_strided_slice %546 {offsets = [0, 30], sizes = [4, 1], strides = [1, 1]} : vector<4x36xf32> to vector<4x1xf32>
    %755 = vector.extract_strided_slice %741 {offsets = [2, 0], sizes = [1, 64], strides = [1, 1]} : vector<4x64xf32> to vector<1x64xf32>
    %756 = vector.broadcast %754 : vector<4x1xf32> to vector<4x64xf32>
    %757 = vector.broadcast %755 : vector<1x64xf32> to vector<4x64xf32>
    %758 = arith.mulf %756, %757 : vector<4x64xf32>
    %759 = arith.addf %753, %758 : vector<4x64xf32>
    %760 = vector.extract_strided_slice %546 {offsets = [0, 31], sizes = [4, 1], strides = [1, 1]} : vector<4x36xf32> to vector<4x1xf32>
    %761 = vector.extract_strided_slice %741 {offsets = [3, 0], sizes = [1, 64], strides = [1, 1]} : vector<4x64xf32> to vector<1x64xf32>
    %762 = vector.broadcast %760 : vector<4x1xf32> to vector<4x64xf32>
    %763 = vector.broadcast %761 : vector<1x64xf32> to vector<4x64xf32>
    %764 = arith.mulf %762, %763 : vector<4x64xf32>
    %765 = arith.addf %759, %764 : vector<4x64xf32>
    %c0_84 = arith.constant 0 : index
    %c0_85 = arith.constant 0 : index
    %c18_86 = arith.constant 18 : index
    %766 = vector.load %arg2[%c0_84, %c0_85, %c18_86] : memref<1x4x82xf32, #tpu.memory_space<vmem>>, vector<1x4x64xf32>
    %767 = vector.shape_cast %766 : vector<1x4x64xf32> to vector<4x64xf32>
    %768 = vector.broadcast %49 : vector<1x64xf32> to vector<4x64xf32>
    %769 = arith.mulf %767, %768 : vector<4x64xf32>
    %770 = vector.extract_strided_slice %546 {offsets = [0, 32], sizes = [4, 1], strides = [1, 1]} : vector<4x36xf32> to vector<4x1xf32>
    %771 = vector.extract_strided_slice %769 {offsets = [0, 0], sizes = [1, 64], strides = [1, 1]} : vector<4x64xf32> to vector<1x64xf32>
    %772 = vector.broadcast %770 : vector<4x1xf32> to vector<4x64xf32>
    %773 = vector.broadcast %771 : vector<1x64xf32> to vector<4x64xf32>
    %774 = arith.mulf %772, %773 : vector<4x64xf32>
    %775 = arith.addf %765, %774 : vector<4x64xf32>
    %776 = vector.extract_strided_slice %546 {offsets = [0, 33], sizes = [4, 1], strides = [1, 1]} : vector<4x36xf32> to vector<4x1xf32>
    %777 = vector.extract_strided_slice %769 {offsets = [1, 0], sizes = [1, 64], strides = [1, 1]} : vector<4x64xf32> to vector<1x64xf32>
    %778 = vector.broadcast %776 : vector<4x1xf32> to vector<4x64xf32>
    %779 = vector.broadcast %777 : vector<1x64xf32> to vector<4x64xf32>
    %780 = arith.mulf %778, %779 : vector<4x64xf32>
    %781 = arith.addf %775, %780 : vector<4x64xf32>
    %782 = vector.extract_strided_slice %546 {offsets = [0, 34], sizes = [4, 1], strides = [1, 1]} : vector<4x36xf32> to vector<4x1xf32>
    %783 = vector.extract_strided_slice %769 {offsets = [2, 0], sizes = [1, 64], strides = [1, 1]} : vector<4x64xf32> to vector<1x64xf32>
    %784 = vector.broadcast %782 : vector<4x1xf32> to vector<4x64xf32>
    %785 = vector.broadcast %783 : vector<1x64xf32> to vector<4x64xf32>
    %786 = arith.mulf %784, %785 : vector<4x64xf32>
    %787 = arith.addf %781, %786 : vector<4x64xf32>
    %788 = vector.extract_strided_slice %546 {offsets = [0, 35], sizes = [4, 1], strides = [1, 1]} : vector<4x36xf32> to vector<4x1xf32>
    %789 = vector.extract_strided_slice %769 {offsets = [3, 0], sizes = [1, 64], strides = [1, 1]} : vector<4x64xf32> to vector<1x64xf32>
    %790 = vector.broadcast %788 : vector<4x1xf32> to vector<4x64xf32>
    %791 = vector.broadcast %789 : vector<1x64xf32> to vector<4x64xf32>
    %792 = arith.mulf %790, %791 : vector<4x64xf32>
    %793 = arith.addf %787, %792 : vector<4x64xf32>
    %c0_87 = arith.constant 0 : index
    %c0_88 = arith.constant 0 : index
    %794 = vector.load %arg5[%c0_87, %c0_88] : memref<4x36xf32, #tpu.memory_space<vmem>>, vector<4x36xf32>
    %cst_89 = arith.constant 0.000000e+00 : f32
    %795 = vector.broadcast %cst_89 : f32 to vector<4x64xf32>
    %c0_90 = arith.constant 0 : index
    %c0_91 = arith.constant 0 : index
    %c0_92 = arith.constant 0 : index
    %796 = vector.load %arg3[%c0_90, %c0_91, %c0_92] : memref<1x4x82xf32, #tpu.memory_space<vmem>>, vector<1x4x64xf32>
    %797 = vector.shape_cast %796 : vector<1x4x64xf32> to vector<4x64xf32>
    %798 = vector.broadcast %45 : vector<1x64xf32> to vector<4x64xf32>
    %799 = arith.mulf %797, %798 : vector<4x64xf32>
    %800 = vector.extract_strided_slice %794 {offsets = [0, 0], sizes = [4, 1], strides = [1, 1]} : vector<4x36xf32> to vector<4x1xf32>
    %801 = vector.extract_strided_slice %799 {offsets = [0, 0], sizes = [1, 64], strides = [1, 1]} : vector<4x64xf32> to vector<1x64xf32>
    %802 = vector.broadcast %800 : vector<4x1xf32> to vector<4x64xf32>
    %803 = vector.broadcast %801 : vector<1x64xf32> to vector<4x64xf32>
    %804 = arith.mulf %802, %803 : vector<4x64xf32>
    %805 = arith.addf %795, %804 : vector<4x64xf32>
    %806 = vector.extract_strided_slice %794 {offsets = [0, 1], sizes = [4, 1], strides = [1, 1]} : vector<4x36xf32> to vector<4x1xf32>
    %807 = vector.extract_strided_slice %799 {offsets = [1, 0], sizes = [1, 64], strides = [1, 1]} : vector<4x64xf32> to vector<1x64xf32>
    %808 = vector.broadcast %806 : vector<4x1xf32> to vector<4x64xf32>
    %809 = vector.broadcast %807 : vector<1x64xf32> to vector<4x64xf32>
    %810 = arith.mulf %808, %809 : vector<4x64xf32>
    %811 = arith.addf %805, %810 : vector<4x64xf32>
    %812 = vector.extract_strided_slice %794 {offsets = [0, 2], sizes = [4, 1], strides = [1, 1]} : vector<4x36xf32> to vector<4x1xf32>
    %813 = vector.extract_strided_slice %799 {offsets = [2, 0], sizes = [1, 64], strides = [1, 1]} : vector<4x64xf32> to vector<1x64xf32>
    %814 = vector.broadcast %812 : vector<4x1xf32> to vector<4x64xf32>
    %815 = vector.broadcast %813 : vector<1x64xf32> to vector<4x64xf32>
    %816 = arith.mulf %814, %815 : vector<4x64xf32>
    %817 = arith.addf %811, %816 : vector<4x64xf32>
    %818 = vector.extract_strided_slice %794 {offsets = [0, 3], sizes = [4, 1], strides = [1, 1]} : vector<4x36xf32> to vector<4x1xf32>
    %819 = vector.extract_strided_slice %799 {offsets = [3, 0], sizes = [1, 64], strides = [1, 1]} : vector<4x64xf32> to vector<1x64xf32>
    %820 = vector.broadcast %818 : vector<4x1xf32> to vector<4x64xf32>
    %821 = vector.broadcast %819 : vector<1x64xf32> to vector<4x64xf32>
    %822 = arith.mulf %820, %821 : vector<4x64xf32>
    %823 = arith.addf %817, %822 : vector<4x64xf32>
    %c0_93 = arith.constant 0 : index
    %c0_94 = arith.constant 0 : index
    %c1_95 = arith.constant 1 : index
    %824 = vector.load %arg3[%c0_93, %c0_94, %c1_95] : memref<1x4x82xf32, #tpu.memory_space<vmem>>, vector<1x4x64xf32>
    %825 = vector.shape_cast %824 : vector<1x4x64xf32> to vector<4x64xf32>
    %826 = vector.extract_strided_slice %794 {offsets = [0, 4], sizes = [4, 1], strides = [1, 1]} : vector<4x36xf32> to vector<4x1xf32>
    %827 = vector.extract_strided_slice %825 {offsets = [0, 0], sizes = [1, 64], strides = [1, 1]} : vector<4x64xf32> to vector<1x64xf32>
    %828 = vector.broadcast %826 : vector<4x1xf32> to vector<4x64xf32>
    %829 = vector.broadcast %827 : vector<1x64xf32> to vector<4x64xf32>
    %830 = arith.mulf %828, %829 : vector<4x64xf32>
    %831 = arith.addf %823, %830 : vector<4x64xf32>
    %832 = vector.extract_strided_slice %794 {offsets = [0, 5], sizes = [4, 1], strides = [1, 1]} : vector<4x36xf32> to vector<4x1xf32>
    %833 = vector.extract_strided_slice %825 {offsets = [1, 0], sizes = [1, 64], strides = [1, 1]} : vector<4x64xf32> to vector<1x64xf32>
    %834 = vector.broadcast %832 : vector<4x1xf32> to vector<4x64xf32>
    %835 = vector.broadcast %833 : vector<1x64xf32> to vector<4x64xf32>
    %836 = arith.mulf %834, %835 : vector<4x64xf32>
    %837 = arith.addf %831, %836 : vector<4x64xf32>
    %838 = vector.extract_strided_slice %794 {offsets = [0, 6], sizes = [4, 1], strides = [1, 1]} : vector<4x36xf32> to vector<4x1xf32>
    %839 = vector.extract_strided_slice %825 {offsets = [2, 0], sizes = [1, 64], strides = [1, 1]} : vector<4x64xf32> to vector<1x64xf32>
    %840 = vector.broadcast %838 : vector<4x1xf32> to vector<4x64xf32>
    %841 = vector.broadcast %839 : vector<1x64xf32> to vector<4x64xf32>
    %842 = arith.mulf %840, %841 : vector<4x64xf32>
    %843 = arith.addf %837, %842 : vector<4x64xf32>
    %844 = vector.extract_strided_slice %794 {offsets = [0, 7], sizes = [4, 1], strides = [1, 1]} : vector<4x36xf32> to vector<4x1xf32>
    %845 = vector.extract_strided_slice %825 {offsets = [3, 0], sizes = [1, 64], strides = [1, 1]} : vector<4x64xf32> to vector<1x64xf32>
    %846 = vector.broadcast %844 : vector<4x1xf32> to vector<4x64xf32>
    %847 = vector.broadcast %845 : vector<1x64xf32> to vector<4x64xf32>
    %848 = arith.mulf %846, %847 : vector<4x64xf32>
    %849 = arith.addf %843, %848 : vector<4x64xf32>
    %c0_96 = arith.constant 0 : index
    %c0_97 = arith.constant 0 : index
    %c2_98 = arith.constant 2 : index
    %850 = vector.load %arg3[%c0_96, %c0_97, %c2_98] : memref<1x4x82xf32, #tpu.memory_space<vmem>>, vector<1x4x64xf32>
    %851 = vector.shape_cast %850 : vector<1x4x64xf32> to vector<4x64xf32>
    %852 = vector.broadcast %49 : vector<1x64xf32> to vector<4x64xf32>
    %853 = arith.mulf %851, %852 : vector<4x64xf32>
    %854 = vector.extract_strided_slice %794 {offsets = [0, 8], sizes = [4, 1], strides = [1, 1]} : vector<4x36xf32> to vector<4x1xf32>
    %855 = vector.extract_strided_slice %853 {offsets = [0, 0], sizes = [1, 64], strides = [1, 1]} : vector<4x64xf32> to vector<1x64xf32>
    %856 = vector.broadcast %854 : vector<4x1xf32> to vector<4x64xf32>
    %857 = vector.broadcast %855 : vector<1x64xf32> to vector<4x64xf32>
    %858 = arith.mulf %856, %857 : vector<4x64xf32>
    %859 = arith.addf %849, %858 : vector<4x64xf32>
    %860 = vector.extract_strided_slice %794 {offsets = [0, 9], sizes = [4, 1], strides = [1, 1]} : vector<4x36xf32> to vector<4x1xf32>
    %861 = vector.extract_strided_slice %853 {offsets = [1, 0], sizes = [1, 64], strides = [1, 1]} : vector<4x64xf32> to vector<1x64xf32>
    %862 = vector.broadcast %860 : vector<4x1xf32> to vector<4x64xf32>
    %863 = vector.broadcast %861 : vector<1x64xf32> to vector<4x64xf32>
    %864 = arith.mulf %862, %863 : vector<4x64xf32>
    %865 = arith.addf %859, %864 : vector<4x64xf32>
    %866 = vector.extract_strided_slice %794 {offsets = [0, 10], sizes = [4, 1], strides = [1, 1]} : vector<4x36xf32> to vector<4x1xf32>
    %867 = vector.extract_strided_slice %853 {offsets = [2, 0], sizes = [1, 64], strides = [1, 1]} : vector<4x64xf32> to vector<1x64xf32>
    %868 = vector.broadcast %866 : vector<4x1xf32> to vector<4x64xf32>
    %869 = vector.broadcast %867 : vector<1x64xf32> to vector<4x64xf32>
    %870 = arith.mulf %868, %869 : vector<4x64xf32>
    %871 = arith.addf %865, %870 : vector<4x64xf32>
    %872 = vector.extract_strided_slice %794 {offsets = [0, 11], sizes = [4, 1], strides = [1, 1]} : vector<4x36xf32> to vector<4x1xf32>
    %873 = vector.extract_strided_slice %853 {offsets = [3, 0], sizes = [1, 64], strides = [1, 1]} : vector<4x64xf32> to vector<1x64xf32>
    %874 = vector.broadcast %872 : vector<4x1xf32> to vector<4x64xf32>
    %875 = vector.broadcast %873 : vector<1x64xf32> to vector<4x64xf32>
    %876 = arith.mulf %874, %875 : vector<4x64xf32>
    %877 = arith.addf %871, %876 : vector<4x64xf32>
    %c0_99 = arith.constant 0 : index
    %c0_100 = arith.constant 0 : index
    %c8_101 = arith.constant 8 : index
    %878 = vector.load %arg3[%c0_99, %c0_100, %c8_101] : memref<1x4x82xf32, #tpu.memory_space<vmem>>, vector<1x4x64xf32>
    %879 = vector.shape_cast %878 : vector<1x4x64xf32> to vector<4x64xf32>
    %880 = vector.broadcast %45 : vector<1x64xf32> to vector<4x64xf32>
    %881 = arith.mulf %879, %880 : vector<4x64xf32>
    %882 = vector.extract_strided_slice %794 {offsets = [0, 12], sizes = [4, 1], strides = [1, 1]} : vector<4x36xf32> to vector<4x1xf32>
    %883 = vector.extract_strided_slice %881 {offsets = [0, 0], sizes = [1, 64], strides = [1, 1]} : vector<4x64xf32> to vector<1x64xf32>
    %884 = vector.broadcast %882 : vector<4x1xf32> to vector<4x64xf32>
    %885 = vector.broadcast %883 : vector<1x64xf32> to vector<4x64xf32>
    %886 = arith.mulf %884, %885 : vector<4x64xf32>
    %887 = arith.addf %877, %886 : vector<4x64xf32>
    %888 = vector.extract_strided_slice %794 {offsets = [0, 13], sizes = [4, 1], strides = [1, 1]} : vector<4x36xf32> to vector<4x1xf32>
    %889 = vector.extract_strided_slice %881 {offsets = [1, 0], sizes = [1, 64], strides = [1, 1]} : vector<4x64xf32> to vector<1x64xf32>
    %890 = vector.broadcast %888 : vector<4x1xf32> to vector<4x64xf32>
    %891 = vector.broadcast %889 : vector<1x64xf32> to vector<4x64xf32>
    %892 = arith.mulf %890, %891 : vector<4x64xf32>
    %893 = arith.addf %887, %892 : vector<4x64xf32>
    %894 = vector.extract_strided_slice %794 {offsets = [0, 14], sizes = [4, 1], strides = [1, 1]} : vector<4x36xf32> to vector<4x1xf32>
    %895 = vector.extract_strided_slice %881 {offsets = [2, 0], sizes = [1, 64], strides = [1, 1]} : vector<4x64xf32> to vector<1x64xf32>
    %896 = vector.broadcast %894 : vector<4x1xf32> to vector<4x64xf32>
    %897 = vector.broadcast %895 : vector<1x64xf32> to vector<4x64xf32>
    %898 = arith.mulf %896, %897 : vector<4x64xf32>
    %899 = arith.addf %893, %898 : vector<4x64xf32>
    %900 = vector.extract_strided_slice %794 {offsets = [0, 15], sizes = [4, 1], strides = [1, 1]} : vector<4x36xf32> to vector<4x1xf32>
    %901 = vector.extract_strided_slice %881 {offsets = [3, 0], sizes = [1, 64], strides = [1, 1]} : vector<4x64xf32> to vector<1x64xf32>
    %902 = vector.broadcast %900 : vector<4x1xf32> to vector<4x64xf32>
    %903 = vector.broadcast %901 : vector<1x64xf32> to vector<4x64xf32>
    %904 = arith.mulf %902, %903 : vector<4x64xf32>
    %905 = arith.addf %899, %904 : vector<4x64xf32>
    %c0_102 = arith.constant 0 : index
    %c0_103 = arith.constant 0 : index
    %c9_104 = arith.constant 9 : index
    %906 = vector.load %arg3[%c0_102, %c0_103, %c9_104] : memref<1x4x82xf32, #tpu.memory_space<vmem>>, vector<1x4x64xf32>
    %907 = vector.shape_cast %906 : vector<1x4x64xf32> to vector<4x64xf32>
    %908 = vector.extract_strided_slice %794 {offsets = [0, 16], sizes = [4, 1], strides = [1, 1]} : vector<4x36xf32> to vector<4x1xf32>
    %909 = vector.extract_strided_slice %907 {offsets = [0, 0], sizes = [1, 64], strides = [1, 1]} : vector<4x64xf32> to vector<1x64xf32>
    %910 = vector.broadcast %908 : vector<4x1xf32> to vector<4x64xf32>
    %911 = vector.broadcast %909 : vector<1x64xf32> to vector<4x64xf32>
    %912 = arith.mulf %910, %911 : vector<4x64xf32>
    %913 = arith.addf %905, %912 : vector<4x64xf32>
    %914 = vector.extract_strided_slice %794 {offsets = [0, 17], sizes = [4, 1], strides = [1, 1]} : vector<4x36xf32> to vector<4x1xf32>
    %915 = vector.extract_strided_slice %907 {offsets = [1, 0], sizes = [1, 64], strides = [1, 1]} : vector<4x64xf32> to vector<1x64xf32>
    %916 = vector.broadcast %914 : vector<4x1xf32> to vector<4x64xf32>
    %917 = vector.broadcast %915 : vector<1x64xf32> to vector<4x64xf32>
    %918 = arith.mulf %916, %917 : vector<4x64xf32>
    %919 = arith.addf %913, %918 : vector<4x64xf32>
    %920 = vector.extract_strided_slice %794 {offsets = [0, 18], sizes = [4, 1], strides = [1, 1]} : vector<4x36xf32> to vector<4x1xf32>
    %921 = vector.extract_strided_slice %907 {offsets = [2, 0], sizes = [1, 64], strides = [1, 1]} : vector<4x64xf32> to vector<1x64xf32>
    %922 = vector.broadcast %920 : vector<4x1xf32> to vector<4x64xf32>
    %923 = vector.broadcast %921 : vector<1x64xf32> to vector<4x64xf32>
    %924 = arith.mulf %922, %923 : vector<4x64xf32>
    %925 = arith.addf %919, %924 : vector<4x64xf32>
    %926 = vector.extract_strided_slice %794 {offsets = [0, 19], sizes = [4, 1], strides = [1, 1]} : vector<4x36xf32> to vector<4x1xf32>
    %927 = vector.extract_strided_slice %907 {offsets = [3, 0], sizes = [1, 64], strides = [1, 1]} : vector<4x64xf32> to vector<1x64xf32>
    %928 = vector.broadcast %926 : vector<4x1xf32> to vector<4x64xf32>
    %929 = vector.broadcast %927 : vector<1x64xf32> to vector<4x64xf32>
    %930 = arith.mulf %928, %929 : vector<4x64xf32>
    %931 = arith.addf %925, %930 : vector<4x64xf32>
    %c0_105 = arith.constant 0 : index
    %c0_106 = arith.constant 0 : index
    %c10_107 = arith.constant 10 : index
    %932 = vector.load %arg3[%c0_105, %c0_106, %c10_107] : memref<1x4x82xf32, #tpu.memory_space<vmem>>, vector<1x4x64xf32>
    %933 = vector.shape_cast %932 : vector<1x4x64xf32> to vector<4x64xf32>
    %934 = vector.broadcast %49 : vector<1x64xf32> to vector<4x64xf32>
    %935 = arith.mulf %933, %934 : vector<4x64xf32>
    %936 = vector.extract_strided_slice %794 {offsets = [0, 20], sizes = [4, 1], strides = [1, 1]} : vector<4x36xf32> to vector<4x1xf32>
    %937 = vector.extract_strided_slice %935 {offsets = [0, 0], sizes = [1, 64], strides = [1, 1]} : vector<4x64xf32> to vector<1x64xf32>
    %938 = vector.broadcast %936 : vector<4x1xf32> to vector<4x64xf32>
    %939 = vector.broadcast %937 : vector<1x64xf32> to vector<4x64xf32>
    %940 = arith.mulf %938, %939 : vector<4x64xf32>
    %941 = arith.addf %931, %940 : vector<4x64xf32>
    %942 = vector.extract_strided_slice %794 {offsets = [0, 21], sizes = [4, 1], strides = [1, 1]} : vector<4x36xf32> to vector<4x1xf32>
    %943 = vector.extract_strided_slice %935 {offsets = [1, 0], sizes = [1, 64], strides = [1, 1]} : vector<4x64xf32> to vector<1x64xf32>
    %944 = vector.broadcast %942 : vector<4x1xf32> to vector<4x64xf32>
    %945 = vector.broadcast %943 : vector<1x64xf32> to vector<4x64xf32>
    %946 = arith.mulf %944, %945 : vector<4x64xf32>
    %947 = arith.addf %941, %946 : vector<4x64xf32>
    %948 = vector.extract_strided_slice %794 {offsets = [0, 22], sizes = [4, 1], strides = [1, 1]} : vector<4x36xf32> to vector<4x1xf32>
    %949 = vector.extract_strided_slice %935 {offsets = [2, 0], sizes = [1, 64], strides = [1, 1]} : vector<4x64xf32> to vector<1x64xf32>
    %950 = vector.broadcast %948 : vector<4x1xf32> to vector<4x64xf32>
    %951 = vector.broadcast %949 : vector<1x64xf32> to vector<4x64xf32>
    %952 = arith.mulf %950, %951 : vector<4x64xf32>
    %953 = arith.addf %947, %952 : vector<4x64xf32>
    %954 = vector.extract_strided_slice %794 {offsets = [0, 23], sizes = [4, 1], strides = [1, 1]} : vector<4x36xf32> to vector<4x1xf32>
    %955 = vector.extract_strided_slice %935 {offsets = [3, 0], sizes = [1, 64], strides = [1, 1]} : vector<4x64xf32> to vector<1x64xf32>
    %956 = vector.broadcast %954 : vector<4x1xf32> to vector<4x64xf32>
    %957 = vector.broadcast %955 : vector<1x64xf32> to vector<4x64xf32>
    %958 = arith.mulf %956, %957 : vector<4x64xf32>
    %959 = arith.addf %953, %958 : vector<4x64xf32>
    %c0_108 = arith.constant 0 : index
    %c0_109 = arith.constant 0 : index
    %c16_110 = arith.constant 16 : index
    %960 = vector.load %arg3[%c0_108, %c0_109, %c16_110] : memref<1x4x82xf32, #tpu.memory_space<vmem>>, vector<1x4x64xf32>
    %961 = vector.shape_cast %960 : vector<1x4x64xf32> to vector<4x64xf32>
    %962 = vector.broadcast %45 : vector<1x64xf32> to vector<4x64xf32>
    %963 = arith.mulf %961, %962 : vector<4x64xf32>
    %964 = vector.extract_strided_slice %794 {offsets = [0, 24], sizes = [4, 1], strides = [1, 1]} : vector<4x36xf32> to vector<4x1xf32>
    %965 = vector.extract_strided_slice %963 {offsets = [0, 0], sizes = [1, 64], strides = [1, 1]} : vector<4x64xf32> to vector<1x64xf32>
    %966 = vector.broadcast %964 : vector<4x1xf32> to vector<4x64xf32>
    %967 = vector.broadcast %965 : vector<1x64xf32> to vector<4x64xf32>
    %968 = arith.mulf %966, %967 : vector<4x64xf32>
    %969 = arith.addf %959, %968 : vector<4x64xf32>
    %970 = vector.extract_strided_slice %794 {offsets = [0, 25], sizes = [4, 1], strides = [1, 1]} : vector<4x36xf32> to vector<4x1xf32>
    %971 = vector.extract_strided_slice %963 {offsets = [1, 0], sizes = [1, 64], strides = [1, 1]} : vector<4x64xf32> to vector<1x64xf32>
    %972 = vector.broadcast %970 : vector<4x1xf32> to vector<4x64xf32>
    %973 = vector.broadcast %971 : vector<1x64xf32> to vector<4x64xf32>
    %974 = arith.mulf %972, %973 : vector<4x64xf32>
    %975 = arith.addf %969, %974 : vector<4x64xf32>
    %976 = vector.extract_strided_slice %794 {offsets = [0, 26], sizes = [4, 1], strides = [1, 1]} : vector<4x36xf32> to vector<4x1xf32>
    %977 = vector.extract_strided_slice %963 {offsets = [2, 0], sizes = [1, 64], strides = [1, 1]} : vector<4x64xf32> to vector<1x64xf32>
    %978 = vector.broadcast %976 : vector<4x1xf32> to vector<4x64xf32>
    %979 = vector.broadcast %977 : vector<1x64xf32> to vector<4x64xf32>
    %980 = arith.mulf %978, %979 : vector<4x64xf32>
    %981 = arith.addf %975, %980 : vector<4x64xf32>
    %982 = vector.extract_strided_slice %794 {offsets = [0, 27], sizes = [4, 1], strides = [1, 1]} : vector<4x36xf32> to vector<4x1xf32>
    %983 = vector.extract_strided_slice %963 {offsets = [3, 0], sizes = [1, 64], strides = [1, 1]} : vector<4x64xf32> to vector<1x64xf32>
    %984 = vector.broadcast %982 : vector<4x1xf32> to vector<4x64xf32>
    %985 = vector.broadcast %983 : vector<1x64xf32> to vector<4x64xf32>
    %986 = arith.mulf %984, %985 : vector<4x64xf32>
    %987 = arith.addf %981, %986 : vector<4x64xf32>
    %c0_111 = arith.constant 0 : index
    %c0_112 = arith.constant 0 : index
    %c17_113 = arith.constant 17 : index
    %988 = vector.load %arg3[%c0_111, %c0_112, %c17_113] : memref<1x4x82xf32, #tpu.memory_space<vmem>>, vector<1x4x64xf32>
    %989 = vector.shape_cast %988 : vector<1x4x64xf32> to vector<4x64xf32>
    %990 = vector.extract_strided_slice %794 {offsets = [0, 28], sizes = [4, 1], strides = [1, 1]} : vector<4x36xf32> to vector<4x1xf32>
    %991 = vector.extract_strided_slice %989 {offsets = [0, 0], sizes = [1, 64], strides = [1, 1]} : vector<4x64xf32> to vector<1x64xf32>
    %992 = vector.broadcast %990 : vector<4x1xf32> to vector<4x64xf32>
    %993 = vector.broadcast %991 : vector<1x64xf32> to vector<4x64xf32>
    %994 = arith.mulf %992, %993 : vector<4x64xf32>
    %995 = arith.addf %987, %994 : vector<4x64xf32>
    %996 = vector.extract_strided_slice %794 {offsets = [0, 29], sizes = [4, 1], strides = [1, 1]} : vector<4x36xf32> to vector<4x1xf32>
    %997 = vector.extract_strided_slice %989 {offsets = [1, 0], sizes = [1, 64], strides = [1, 1]} : vector<4x64xf32> to vector<1x64xf32>
    %998 = vector.broadcast %996 : vector<4x1xf32> to vector<4x64xf32>
    %999 = vector.broadcast %997 : vector<1x64xf32> to vector<4x64xf32>
    %1000 = arith.mulf %998, %999 : vector<4x64xf32>
    %1001 = arith.addf %995, %1000 : vector<4x64xf32>
    %1002 = vector.extract_strided_slice %794 {offsets = [0, 30], sizes = [4, 1], strides = [1, 1]} : vector<4x36xf32> to vector<4x1xf32>
    %1003 = vector.extract_strided_slice %989 {offsets = [2, 0], sizes = [1, 64], strides = [1, 1]} : vector<4x64xf32> to vector<1x64xf32>
    %1004 = vector.broadcast %1002 : vector<4x1xf32> to vector<4x64xf32>
    %1005 = vector.broadcast %1003 : vector<1x64xf32> to vector<4x64xf32>
    %1006 = arith.mulf %1004, %1005 : vector<4x64xf32>
    %1007 = arith.addf %1001, %1006 : vector<4x64xf32>
    %1008 = vector.extract_strided_slice %794 {offsets = [0, 31], sizes = [4, 1], strides = [1, 1]} : vector<4x36xf32> to vector<4x1xf32>
    %1009 = vector.extract_strided_slice %989 {offsets = [3, 0], sizes = [1, 64], strides = [1, 1]} : vector<4x64xf32> to vector<1x64xf32>
    %1010 = vector.broadcast %1008 : vector<4x1xf32> to vector<4x64xf32>
    %1011 = vector.broadcast %1009 : vector<1x64xf32> to vector<4x64xf32>
    %1012 = arith.mulf %1010, %1011 : vector<4x64xf32>
    %1013 = arith.addf %1007, %1012 : vector<4x64xf32>
    %c0_114 = arith.constant 0 : index
    %c0_115 = arith.constant 0 : index
    %c18_116 = arith.constant 18 : index
    %1014 = vector.load %arg3[%c0_114, %c0_115, %c18_116] : memref<1x4x82xf32, #tpu.memory_space<vmem>>, vector<1x4x64xf32>
    %1015 = vector.shape_cast %1014 : vector<1x4x64xf32> to vector<4x64xf32>
    %1016 = vector.broadcast %49 : vector<1x64xf32> to vector<4x64xf32>
    %1017 = arith.mulf %1015, %1016 : vector<4x64xf32>
    %1018 = vector.extract_strided_slice %794 {offsets = [0, 32], sizes = [4, 1], strides = [1, 1]} : vector<4x36xf32> to vector<4x1xf32>
    %1019 = vector.extract_strided_slice %1017 {offsets = [0, 0], sizes = [1, 64], strides = [1, 1]} : vector<4x64xf32> to vector<1x64xf32>
    %1020 = vector.broadcast %1018 : vector<4x1xf32> to vector<4x64xf32>
    %1021 = vector.broadcast %1019 : vector<1x64xf32> to vector<4x64xf32>
    %1022 = arith.mulf %1020, %1021 : vector<4x64xf32>
    %1023 = arith.addf %1013, %1022 : vector<4x64xf32>
    %1024 = vector.extract_strided_slice %794 {offsets = [0, 33], sizes = [4, 1], strides = [1, 1]} : vector<4x36xf32> to vector<4x1xf32>
    %1025 = vector.extract_strided_slice %1017 {offsets = [1, 0], sizes = [1, 64], strides = [1, 1]} : vector<4x64xf32> to vector<1x64xf32>
    %1026 = vector.broadcast %1024 : vector<4x1xf32> to vector<4x64xf32>
    %1027 = vector.broadcast %1025 : vector<1x64xf32> to vector<4x64xf32>
    %1028 = arith.mulf %1026, %1027 : vector<4x64xf32>
    %1029 = arith.addf %1023, %1028 : vector<4x64xf32>
    %1030 = vector.extract_strided_slice %794 {offsets = [0, 34], sizes = [4, 1], strides = [1, 1]} : vector<4x36xf32> to vector<4x1xf32>
    %1031 = vector.extract_strided_slice %1017 {offsets = [2, 0], sizes = [1, 64], strides = [1, 1]} : vector<4x64xf32> to vector<1x64xf32>
    %1032 = vector.broadcast %1030 : vector<4x1xf32> to vector<4x64xf32>
    %1033 = vector.broadcast %1031 : vector<1x64xf32> to vector<4x64xf32>
    %1034 = arith.mulf %1032, %1033 : vector<4x64xf32>
    %1035 = arith.addf %1029, %1034 : vector<4x64xf32>
    %1036 = vector.extract_strided_slice %794 {offsets = [0, 35], sizes = [4, 1], strides = [1, 1]} : vector<4x36xf32> to vector<4x1xf32>
    %1037 = vector.extract_strided_slice %1017 {offsets = [3, 0], sizes = [1, 64], strides = [1, 1]} : vector<4x64xf32> to vector<1x64xf32>
    %1038 = vector.broadcast %1036 : vector<4x1xf32> to vector<4x64xf32>
    %1039 = vector.broadcast %1037 : vector<1x64xf32> to vector<4x64xf32>
    %1040 = arith.mulf %1038, %1039 : vector<4x64xf32>
    %1041 = arith.addf %1035, %1040 : vector<4x64xf32>
    %c0_117 = arith.constant 0 : index
    %c0_118 = arith.constant 0 : index
    %1042 = vector.load %arg8[%c0_117, %c0_118] : memref<64x256xf32, #tpu.memory_space<vmem>>, vector<64x256xf32>
    %cst_119 = arith.constant dense<0.000000e+00> : vector<4x256xf32>
    %1043 = tpu.matmul %545, %1042, %cst_119 {dimension_numbers = #tpu.dot_dimension_numbers<[1], [0], [0], [1], [0, 0, 1, 1], [], []>} : vector<4x64xf32>, vector<64x256xf32>, vector<4x256xf32> -> vector<4x256xf32>
    %1044 = arith.addf %297, %1043 : vector<4x256xf32>
    %c0_120 = arith.constant 0 : index
    %c0_121 = arith.constant 0 : index
    %c0_122 = arith.constant 0 : index
    %1045 = vector.load %arg9[%c0_120, %c0_121, %c0_122] : memref<1x4x256xf32, #tpu.memory_space<vmem>>, vector<1x4x256xf32>
    %1046 = vector.shape_cast %1045 : vector<1x4x256xf32> to vector<4x256xf32>
    %1047 = vector.shape_cast %1044 : vector<4x256xf32> to vector<1x4x256xf32>
    tpu.vector_store %arg9[%c0_120, %c0_121, %c0_122], %1047 {strides = array<i32>} : memref<1x4x256xf32, #tpu.memory_space<vmem>>, vector<1x4x256xf32>,
    %1048 = arith.addf %1041, %793 : vector<4x64xf32>
    %c0_123 = arith.constant 0 : index
    %c0_124 = arith.constant 0 : index
    %c0_125 = arith.constant 0 : index
    %1049 = vector.load %arg10[%c0_123, %c0_124, %c0_125] : memref<1x4x64xf32, #tpu.memory_space<vmem>>, vector<1x4x64xf32>
    %1050 = vector.shape_cast %1049 : vector<1x4x64xf32> to vector<4x64xf32>
    %1051 = vector.shape_cast %1048 : vector<4x64xf32> to vector<1x4x64xf32>
    tpu.vector_store %arg10[%c0_123, %c0_124, %c0_125], %1051 {strides = array<i32>} : memref<1x4x64xf32, #tpu.memory_space<vmem>>, vector<1x4x64xf32>,
    return
  }
  func.func @transform_0(%arg0: i32) -> (i32, i32, i32) {
    %c0_i32 = arith.constant 0 : i32
    %c0_i32_0 = arith.constant 0 : i32
    %c0_i32_1 = arith.constant 0 : i32
    return %arg0, %c0_i32, %c0_i32_0 : i32, i32, i32
  }
  func.func @transform_1(%arg0: i32) -> (i32, i32, i32) {
    %c0_i32 = arith.constant 0 : i32
    %c0_i32_0 = arith.constant 0 : i32
    %c0_i32_1 = arith.constant 0 : i32
    return %arg0, %c0_i32, %c0_i32_0 : i32, i32, i32
  }
  func.func @transform_2(%arg0: i32) -> (i32, i32, i32) {
    %c0_i32 = arith.constant 0 : i32
    %c0_i32_0 = arith.constant 0 : i32
    %c0_i32_1 = arith.constant 0 : i32
    return %arg0, %c0_i32, %c0_i32_0 : i32, i32, i32
  }
  func.func @transform_3(%arg0: i32) -> (i32, i32) {
    %c0_i32 = arith.constant 0 : i32
    %c0_i32_0 = arith.constant 0 : i32
    %c0_i32_1 = arith.constant 0 : i32
    return %c0_i32, %c0_i32_0 : i32, i32
  }
  func.func @transform_4(%arg0: i32) -> (i32, i32) {
    %c0_i32 = arith.constant 0 : i32
    %c0_i32_0 = arith.constant 0 : i32
    %c0_i32_1 = arith.constant 0 : i32
    return %c0_i32, %c0_i32_0 : i32, i32
  }
  func.func @transform_5(%arg0: i32) -> (i32, i32) {
    %c0_i32 = arith.constant 0 : i32
    %c0_i32_0 = arith.constant 0 : i32
    %c0_i32_1 = arith.constant 0 : i32
    return %c0_i32, %c0_i32_0 : i32, i32
  }
  func.func @transform_6(%arg0: i32) -> (i32, i32) {
    %c0_i32 = arith.constant 0 : i32
    %c0_i32_0 = arith.constant 0 : i32
    %c0_i32_1 = arith.constant 0 : i32
    return %c0_i32, %c0_i32_0 : i32, i32
  }
  func.func @transform_7(%arg0: i32) -> (i32, i32) {
    %c0_i32 = arith.constant 0 : i32
    %c0_i32_0 = arith.constant 0 : i32
    %c0_i32_1 = arith.constant 0 : i32
    return %c0_i32, %c0_i32_0 : i32, i32
  }
  func.func @transform_8(%arg0: i32) -> (i32, i32, i32) {
    %c0_i32 = arith.constant 0 : i32
    %c0_i32_0 = arith.constant 0 : i32
    %c0_i32_1 = arith.constant 0 : i32
    return %arg0, %c0_i32, %c0_i32_0 : i32, i32, i32
  }
  func.func @transform_9(%arg0: i32) -> (i32, i32, i32) {
    %c0_i32 = arith.constant 0 : i32
    %c0_i32_0 = arith.constant 0 : i32
    %c0_i32_1 = arith.constant 0 : i32
    return %arg0, %c0_i32, %c0_i32_0 : i32, i32, i32
  }
}

</mosaic_0001>

<llo_original>
// kernel: octave_conv.1
$region0: #{octave_conv.1}
  #allocation0 [shape = 'u32[]', space=smem, size = 0x4, offset = 0x4, fixed_abs, tag = 'smem constant byte address 0x4 - core index']
  #allocation1 [shape = 'u32[144,128]{1,0:T(1,128)}', space=vmem, size = 0x12000, scoped, tag = 'internal scratch']
  %s0 = inlined_call_operand.vmem [shape: f32[2,4,290], index: 0, kind: input, shape index: {}]
  %s1 = inlined_call_operand.vmem [shape: f32[2,4,82], index: 1, kind: input, shape index: {}]
  %s2 = inlined_call_operand.vmem [shape: f32[2,4,82], index: 2, kind: input, shape index: {}]
  %s3 = inlined_call_operand.vmem [shape: f32[4,36], index: 3, kind: input, shape index: {}]
  %s4 = inlined_call_operand.vmem [shape: f32[4,36], index: 4, kind: input, shape index: {}]
  %s5 = inlined_call_operand.vmem [shape: f32[4,36], index: 5, kind: input, shape index: {}]
  %s6 = inlined_call_operand.vmem [shape: f32[4,36], index: 6, kind: input, shape index: {}]
  %s7 = inlined_call_operand.vmem [shape: f32[64,256], index: 7, kind: input, shape index: {}]
  %s8 = inlined_call_operand.vmem [shape: f32[2,4,256], index: 8, kind: output, shape index: {0}]
  %s9 = inlined_call_operand.vmem [shape: f32[2,4,64], index: 9, kind: output, shape index: {1}]
  %10 = xla_tuple %s8, %s9
  %s11 = sld [smem:[#allocation0]]
  $region73: #{octave_conv.1} parent=0
    _
  %s13 = ssub.s32 1, %s11
  %s14 = scalar_select 0, %s13, %s11
  loop: start=0, step=1, limit=4
  $region2: #{octave_conv.1} parent=0 // loop_pre_header
    _
  $region3: #{octave_conv.1} parent=0 // loop_header
    %s16 = sphi 0, %s20
    %p17 = scmp.ge.s32.totalorder %s16, 4
    %s26 = sphi 0, %s28
    %s29 = sphi 0, %s26
    %s30 = sphi 0, %s29
    %s46 = sphi 0, %s30
    %s52 = sphi 0, %s54
    %s55 = sphi 0, %s52
    %s56 = sphi 0, %s55
    %s72 = sphi 0, %s56
    %s78 = sphi 0, %s80
    %s81 = sphi 0, %s78
    %s82 = sphi 0, %s81
    %s98 = sphi 0, %s82
    %s102 = sphi 0, %s102
    %s104 = sphi 0, %s102
    %s105 = sphi 0, %s104
    %s119 = sphi 0, %s105
    %s123 = sphi 0, %s123
    %s125 = sphi 0, %s123
    %s126 = sphi 0, %s125
    %s140 = sphi 0, %s126
    %s144 = sphi 0, %s144
    %s146 = sphi 0, %s144
    %s147 = sphi 0, %s146
    %s161 = sphi 0, %s147
    %s165 = sphi 0, %s165
    %s167 = sphi 0, %s165
    %s168 = sphi 0, %s167
    %s182 = sphi 0, %s168
    %s186 = sphi 0, %s186
    %s188 = sphi 0, %s186
    %s189 = sphi 0, %s188
    %s203 = sphi 0, %s189
    %s209 = sphi 0, %s211
    %s212 = sphi 0, %s209
    %s213 = sphi 0, %s212
    %s229 = sphi 0, %s213
    %s235 = sphi 0, %s237
    %s238 = sphi 0, %s235
    %s239 = sphi 0, %s238
    %s255 = sphi 0, %s239
  $region4: #{octave_conv.1} parent=0 // loop_header_branch
    %19 = sbr.rel (%p17) target = $region8
  $region5: #{octave_conv.1} parent=0 // loop_body
    %s21 = ssub.s32 %s16, 1
    %s22 = ssub.s32 %s16, 2
    %s23 = sadd.s32 %s16, 1
    %s24 = ssub.s32 %s16, %s23
    %p25 = scmp.eq.s32.totalorder %s24, 0
    %s27 = sadd.s32 %s26, 1
    %s28 = scalar_select %p25, %s26, %s27
    %p31 = pneg %p25
    %p32 = scmp.eq.s32.totalorder %s16, 1
    %p33 = por %p31, %p32
    %p34 = scmp.ne.s32.totalorder %s26, %s29
    %p35 = scmp.eq.s32.totalorder %s16, 0
    %p36 = por %p34, %p35
    %p37 = scmp.ne.s32.totalorder %s26, %s29
    %p38 = scmp.eq.s32.totalorder %s21, 1
    %p39 = por %p37, %p38
    %p40 = scmp.ne.s32.totalorder %s29, %s30
    %p41 = scmp.eq.s32.totalorder %s21, 0
    %p42 = por %p40, %p41
    %p43 = scmp.ne.s32.totalorder %s29, %s30
    %p44 = scmp.eq.s32.totalorder %s22, 1
    %p45 = por %p43, %p44
    %p47 = scmp.ne.s32.totalorder %s30, %s46
    %p48 = scmp.eq.s32.totalorder %s22, 0
    %p49 = por %p47, %p48
    %s50 = ssub.s32 %s16, %s23
    %p51 = scmp.eq.s32.totalorder %s50, 0
    %s53 = sadd.s32 %s52, 1
    %s54 = scalar_select %p51, %s52, %s53
    %p57 = pneg %p51
    %p58 = scmp.eq.s32.totalorder %s16, 1
    %p59 = por %p57, %p58
    %p60 = scmp.ne.s32.totalorder %s52, %s55
    %p61 = scmp.eq.s32.totalorder %s16, 0
    %p62 = por %p60, %p61
    %p63 = scmp.ne.s32.totalorder %s52, %s55
    %p64 = scmp.eq.s32.totalorder %s21, 1
    %p65 = por %p63, %p64
    %p66 = scmp.ne.s32.totalorder %s55, %s56
    %p67 = scmp.eq.s32.totalorder %s21, 0
    %p68 = por %p66, %p67
    %p69 = scmp.ne.s32.totalorder %s55, %s56
    %p70 = scmp.eq.s32.totalorder %s22, 1
    %p71 = por %p69, %p70
    %p73 = scmp.ne.s32.totalorder %s56, %s72
    %p74 = scmp.eq.s32.totalorder %s22, 0
    %p75 = por %p73, %p74
    %s76 = ssub.s32 %s16, %s23
    %p77 = scmp.eq.s32.totalorder %s76, 0
    %s79 = sadd.s32 %s78, 1
    %s80 = scalar_select %p77, %s78, %s79
    %p83 = pneg %p77
    %p84 = scmp.eq.s32.totalorder %s16, 1
    %p85 = por %p83, %p84
    %p86 = scmp.ne.s32.totalorder %s78, %s81
    %p87 = scmp.eq.s32.totalorder %s16, 0
    %p88 = por %p86, %p87
    %p89 = scmp.ne.s32.totalorder %s78, %s81
    %p90 = scmp.eq.s32.totalorder %s21, 1
    %p91 = por %p89, %p90
    %p92 = scmp.ne.s32.totalorder %s81, %s82
    %p93 = scmp.eq.s32.totalorder %s21, 0
    %p94 = por %p92, %p93
    %p95 = scmp.ne.s32.totalorder %s81, %s82
    %p96 = scmp.eq.s32.totalorder %s22, 1
    %p97 = por %p95, %p96
    %p99 = scmp.ne.s32.totalorder %s82, %s98
    %p100 = scmp.eq.s32.totalorder %s22, 0
    %p101 = por %p99, %p100
    %s103 = sadd.s32 %s102, 1
    %p106 = scmp.eq.s32.totalorder %s16, 1
    %p107 = scmp.ne.s32.totalorder %s102, %s104
    %p108 = scmp.eq.s32.totalorder %s16, 0
    %p109 = por %p107, %p108
    %p110 = scmp.ne.s32.totalorder %s102, %s104
    %p111 = scmp.eq.s32.totalorder %s21, 1
    %p112 = por %p110, %p111
    %p113 = scmp.ne.s32.totalorder %s104, %s105
    %p114 = scmp.eq.s32.totalorder %s21, 0
    %p115 = por %p113, %p114
    %p116 = scmp.ne.s32.totalorder %s104, %s105
    %p117 = scmp.eq.s32.totalorder %s22, 1
    %p118 = por %p116, %p117
    %p120 = scmp.ne.s32.totalorder %s105, %s119
    %p121 = scmp.eq.s32.totalorder %s22, 0
    %p122 = por %p120, %p121
    %s124 = sadd.s32 %s123, 1
    %p127 = scmp.eq.s32.totalorder %s16, 1
    %p128 = scmp.ne.s32.totalorder %s123, %s125
    %p129 = scmp.eq.s32.totalorder %s16, 0
    %p130 = por %p128, %p129
    %p131 = scmp.ne.s32.totalorder %s123, %s125
    %p132 = scmp.eq.s32.totalorder %s21, 1
    %p133 = por %p131, %p132
    %p134 = scmp.ne.s32.totalorder %s125, %s126
    %p135 = scmp.eq.s32.totalorder %s21, 0
    %p136 = por %p134, %p135
    %p137 = scmp.ne.s32.totalorder %s125, %s126
    %p138 = scmp.eq.s32.totalorder %s22, 1
    %p139 = por %p137, %p138
    %p141 = scmp.ne.s32.totalorder %s126, %s140
    %p142 = scmp.eq.s32.totalorder %s22, 0
    %p143 = por %p141, %p142
    %s145 = sadd.s32 %s144, 1
    %p148 = scmp.eq.s32.totalorder %s16, 1
    %p149 = scmp.ne.s32.totalorder %s144, %s146
    %p150 = scmp.eq.s32.totalorder %s16, 0
    %p151 = por %p149, %p150
    %p152 = scmp.ne.s32.totalorder %s144, %s146
    %p153 = scmp.eq.s32.totalorder %s21, 1
    %p154 = por %p152, %p153
    %p155 = scmp.ne.s32.totalorder %s146, %s147
    %p156 = scmp.eq.s32.totalorder %s21, 0
    %p157 = por %p155, %p156
    %p158 = scmp.ne.s32.totalorder %s146, %s147
    %p159 = scmp.eq.s32.totalorder %s22, 1
    %p160 = por %p158, %p159
    %p162 = scmp.ne.s32.totalorder %s147, %s161
    %p163 = scmp.eq.s32.totalorder %s22, 0
    %p164 = por %p162, %p163
    %s166 = sadd.s32 %s165, 1
    %p169 = scmp.eq.s32.totalorder %s16, 1
    %p170 = scmp.ne.s32.totalorder %s165, %s167
    %p171 = scmp.eq.s32.totalorder %s16, 0
    %p172 = por %p170, %p171
    %p173 = scmp.ne.s32.totalorder %s165, %s167
    %p174 = scmp.eq.s32.totalorder %s21, 1
    %p175 = por %p173, %p174
    %p176 = scmp.ne.s32.totalorder %s167, %s168
    %p177 = scmp.eq.s32.totalorder %s21, 0
    %p178 = por %p176, %p177
    %p179 = scmp.ne.s32.totalorder %s167, %s168
    %p180 = scmp.eq.s32.totalorder %s22, 1
    %p181 = por %p179, %p180
    %p183 = scmp.ne.s32.totalorder %s168, %s182
    %p184 = scmp.eq.s32.totalorder %s22, 0
    %p185 = por %p183, %p184
    %s187 = sadd.s32 %s186, 1
    %p190 = scmp.eq.s32.totalorder %s16, 1
    %p191 = scmp.ne.s32.totalorder %s186, %s188
    %p192 = scmp.eq.s32.totalorder %s16, 0
    %p193 = por %p191, %p192
    %p194 = scmp.ne.s32.totalorder %s186, %s188
    %p195 = scmp.eq.s32.totalorder %s21, 1
    %p196 = por %p194, %p195
    %p197 = scmp.ne.s32.totalorder %s188, %s189
    %p198 = scmp.eq.s32.totalorder %s21, 0
    %p199 = por %p197, %p198
    %p200 = scmp.ne.s32.totalorder %s188, %s189
    %p201 = scmp.eq.s32.totalorder %s22, 1
    %p202 = por %p200, %p201
    %p204 = scmp.ne.s32.totalorder %s189, %s203
    %p205 = scmp.eq.s32.totalorder %s22, 0
    %p206 = por %p204, %p205
    %s207 = ssub.s32 %s16, %s23
    %p208 = scmp.eq.s32.totalorder %s207, 0
    %s210 = sadd.s32 %s209, 1
    %s211 = scalar_select %p208, %s209, %s210
    %p214 = pneg %p208
    %p215 = scmp.eq.s32.totalorder %s16, 1
    %p216 = por %p214, %p215
    %p217 = scmp.ne.s32.totalorder %s209, %s212
    %p218 = scmp.eq.s32.totalorder %s16, 0
    %p219 = por %p217, %p218
    %p220 = scmp.ne.s32.totalorder %s209, %s212
    %p221 = scmp.eq.s32.totalorder %s21, 1
    %p222 = por %p220, %p221
    %p223 = scmp.ne.s32.totalorder %s212, %s213
    %p224 = scmp.eq.s32.totalorder %s21, 0
    %p225 = por %p223, %p224
    %p226 = scmp.ne.s32.totalorder %s212, %s213
    %p227 = scmp.eq.s32.totalorder %s22, 1
    %p228 = por %p226, %p227
    %p230 = scmp.ne.s32.totalorder %s213, %s229
    %p231 = scmp.eq.s32.totalorder %s22, 0
    %p232 = por %p230, %p231
    %s233 = ssub.s32 %s16, %s23
    %p234 = scmp.eq.s32.totalorder %s233, 0
    %s236 = sadd.s32 %s235, 1
    %s237 = scalar_select %p234, %s235, %s236
    %p240 = pneg %p234
    %p241 = scmp.eq.s32.totalorder %s16, 1
    %p242 = por %p240, %p241
    %p243 = scmp.ne.s32.totalorder %s235, %s238
    %p244 = scmp.eq.s32.totalorder %s16, 0
    %p245 = por %p243, %p244
    %p246 = scmp.ne.s32.totalorder %s235, %s238
    %p247 = scmp.eq.s32.totalorder %s21, 1
    %p248 = por %p246, %p247
    %p249 = scmp.ne.s32.totalorder %s238, %s239
    %p250 = scmp.eq.s32.totalorder %s21, 0
    %p251 = por %p249, %p250
    %p252 = scmp.ne.s32.totalorder %s238, %s239
    %p253 = scmp.eq.s32.totalorder %s22, 1
    %p254 = por %p252, %p253
    %p256 = scmp.ne.s32.totalorder %s239, %s255
    %p257 = scmp.eq.s32.totalorder %s22, 0
    %p258 = por %p256, %p257
    %p259 = scmp.le.s32.totalorder 1, %s16
    %p260 = scmp.lt.s32.totalorder %s16, 3
    %p261 = pnand %p259, %p260
    %p262 = pneg %p261
    // Predicated region
    $region9: #{octave_conv.1} parent=5 // pred_check
      _
    $region10: #{octave_conv.1} parent=5 // pred_check_branch
      %264 = sbr.rel (%p261) target = $region12
    $region11: #{octave_conv.1} parent=5 // pred_region
      %s265 = ssub.s32 %s16, 1
      // Predicated region
      $region13: #{octave_conv.1} parent=11 // pred_check
        %p266 = pneg %p115
      $region14: #{octave_conv.1} parent=11 // pred_check_branch
        %268 = sbr.rel (%p266) target = $region16
      $region15: #{octave_conv.1} parent=11 // pred_region
        _
      $region16: #{octave_conv.1} parent=11 // pred_fallthru
        _
      // Predicated region
      $region17: #{octave_conv.1} parent=11 // pred_check
        %p269 = pneg %p136
      $region18: #{octave_conv.1} parent=11 // pred_check_branch
        %271 = sbr.rel (%p269) target = $region20
      $region19: #{octave_conv.1} parent=11 // pred_region
        _
      $region20: #{octave_conv.1} parent=11 // pred_fallthru
        _
      // Predicated region
      $region21: #{octave_conv.1} parent=11 // pred_check
        %p272 = pneg %p157
      $region22: #{octave_conv.1} parent=11 // pred_check_branch
        %274 = sbr.rel (%p272) target = $region24
      $region23: #{octave_conv.1} parent=11 // pred_region
        _
      $region24: #{octave_conv.1} parent=11 // pred_fallthru
        _
      // Predicated region
      $region25: #{octave_conv.1} parent=11 // pred_check
        %p275 = pneg %p178
      $region26: #{octave_conv.1} parent=11 // pred_check_branch
        %277 = sbr.rel (%p275) target = $region28
      $region27: #{octave_conv.1} parent=11 // pred_region
        _
      $region28: #{octave_conv.1} parent=11 // pred_fallthru
        _
      // Predicated region
      $region29: #{octave_conv.1} parent=11 // pred_check
        %p278 = pneg %p199
      $region30: #{octave_conv.1} parent=11 // pred_check_branch
        %280 = sbr.rel (%p278) target = $region32
      $region31: #{octave_conv.1} parent=11 // pred_region
        _
      $region32: #{octave_conv.1} parent=11 // pred_fallthru
        _
    $region12: #{octave_conv.1} parent=5 // pred_fallthru
      _
    %p281 = scmp.lt.s32.totalorder %s16, 2
    // Predicated region
    $region33: #{octave_conv.1} parent=5 // pred_check
      %p282 = pneg %p281
    $region34: #{octave_conv.1} parent=5 // pred_check_branch
      %284 = sbr.rel (%p282) target = $region36
    $region35: #{octave_conv.1} parent=5 // pred_region
      // Predicated region
      $region37: #{octave_conv.1} parent=35 // pred_check
        %p285 = pneg %p36
      $region38: #{octave_conv.1} parent=35 // pred_check_branch
        %287 = sbr.rel (%p285) target = $region40
      $region39: #{octave_conv.1} parent=35 // pred_region
        %p288 = scmp.lt.s32.totalorder %s16, 1
        %s289 = scalar_select %p288, %s16, 1
        %s290 = smul.addr %s289, 3
        %s291 = smul.addr %s290, 4
        %s292 = scalar_lea.vmem %s0, %s291
      $region40: #{octave_conv.1} parent=35 // pred_fallthru
        _
      // Predicated region
      $region41: #{octave_conv.1} parent=35 // pred_check
        %p293 = pneg %p62
      $region42: #{octave_conv.1} parent=35 // pred_check_branch
        %295 = sbr.rel (%p293) target = $region44
      $region43: #{octave_conv.1} parent=35 // pred_region
        %p296 = scmp.lt.s32.totalorder %s16, 1
        %s297 = scalar_select %p296, %s16, 1
        %s298 = smul.addr %s297, 4
        %s299 = scalar_lea.vmem %s1, %s298
      $region44: #{octave_conv.1} parent=35 // pred_fallthru
        _
      // Predicated region
      $region45: #{octave_conv.1} parent=35 // pred_check
        %p300 = pneg %p88
      $region46: #{octave_conv.1} parent=35 // pred_check_branch
        %302 = sbr.rel (%p300) target = $region48
      $region47: #{octave_conv.1} parent=35 // pred_region
        %p303 = scmp.lt.s32.totalorder %s16, 1
        %s304 = scalar_select %p303, %s16, 1
        %s305 = smul.addr %s304, 4
        %s306 = scalar_lea.vmem %s2, %s305
      $region48: #{octave_conv.1} parent=35 // pred_fallthru
        _
    $region36: #{octave_conv.1} parent=5 // pred_fallthru
      _
    %p307 = scmp.le.s32.totalorder 1, %s16
    %p308 = scmp.lt.s32.totalorder %s16, 3
    %p309 = pnand %p307, %p308
    %p310 = pneg %p309
    // Predicated region
    $region49: #{octave_conv.1} parent=5 // pred_check
      _
    $region50: #{octave_conv.1} parent=5 // pred_check_branch
      %312 = sbr.rel (%p309) target = $region52
    $region51: #{octave_conv.1} parent=5 // pred_region
      %s313 = ssub.s32 %s16, 1
      %p314 = scmp.lt.s32.totalorder %s21, 1
      %s315 = scalar_select %p314, %s21, 1
      %s316 = smul.addr %s315, 3
      %s317 = smul.addr %s316, 4
      %s318 = scalar_lea.vmem %s0, %s317
      %p319 = pneg %p42
      %p320 = pneg %p39
      %p321 = scmp.lt.s32.totalorder %s21, 1
      %s322 = scalar_select %p321, %s21, 1
      %s323 = smul.addr %s322, 4
      %s324 = scalar_lea.vmem %s1, %s323
      %p325 = pneg %p68
      %p326 = pneg %p65
      %p327 = scmp.lt.s32.totalorder %s21, 1
      %s328 = scalar_select %p327, %s21, 1
      %s329 = smul.addr %s328, 4
      %s330 = scalar_lea.vmem %s2, %s329
      %p331 = pneg %p94
      %p332 = pneg %p91
      %p333 = pneg %p115
      %p334 = pneg %p112
      %p335 = pneg %p136
      %p336 = pneg %p133
      %p337 = pneg %p157
      %p338 = pneg %p154
      %p339 = pneg %p178
      %p340 = pneg %p175
      %p341 = pneg %p199
      %p342 = pneg %p196
      %p343 = pneg %p225
      %p344 = pneg %p222
      %p345 = scmp.lt.s32.totalorder %s21, 1
      %s346 = scalar_select %p345, %s21, 1
      %s347 = smul.addr %s346, 2
      %s348 = smul.addr %s347, 4
      %s349 = scalar_lea.vmem %s8, %s348
      %p350 = pneg %p251
      %p351 = pneg %p248
      %p352 = scmp.lt.s32.totalorder %s21, 1
      %s353 = scalar_select %p352, %s21, 1
      %s354 = smul.addr %s353, 4
      %s355 = scalar_lea.vmem %s9, %s354
      %p356 = scmp.lt.s32.totalorder %s21, 1
      %s357 = scalar_select %p356, %s21, 1
      %s358 = smul.addr %s357, 3
      %s359 = smul.addr %s358, 4
      %s360 = scalar_lea.vmem %s0, %s359
      %p361 = scmp.lt.s32.totalorder %s21, 1
      %s362 = scalar_select %p361, %s21, 1
      %s363 = smul.addr %s362, 4
      %s364 = scalar_lea.vmem %s1, %s363
      %p365 = scmp.lt.s32.totalorder %s21, 1
      %s366 = scalar_select %p365, %s21, 1
      %s367 = smul.addr %s366, 4
      %s368 = scalar_lea.vmem %s2, %s367
      %p369 = scmp.lt.s32.totalorder %s21, 1
      %s370 = scalar_select %p369, %s21, 1
      %s371 = smul.addr %s370, 2
      %s372 = smul.addr %s371, 4
      %s373 = scalar_lea.vmem %s8, %s372
      %p374 = scmp.lt.s32.totalorder %s21, 1
      %s375 = scalar_select %p374, %s21, 1
      %s376 = smul.addr %s375, 4
      %s377 = scalar_lea.vmem %s9, %s376
      %v378 = vlaneseq
      %v379 = vand.u32 %v378, 127
      %v380 = vadd.s32 %v379, 128
      %vm381 = vcmp.lt.s32.totalorder %v379, 0
      %v382 = vsub.s32 0, %v379
      %v383 = vsel %vm381, %v382, %v379
      %v384 = vshrl.u32 %v383, 4
      %v385 = vand.u32 %v383, 15
      %v386 = vsub.s32 0, %v385
      %v387 = vsel %vm381, %v386, %v385
      %vm388 = vcmp.lt.s32.totalorder %v380, 0
      %v389 = vsub.s32 0, %v380
      %v390 = vsel %vm388, %v389, %v380
      %v391 = vshrl.u32 %v390, 4
      %v392 = vand.u32 %v390, 15
      %v393 = vsub.s32 0, %v392
      %v394 = vsel %vm388, %v393, %v392
      %vm395 = vcmp.ne.s32.totalorder %v387, 0
      %vm396 = vcmp.ne.s32.totalorder %v394, 0
      %vm397 = vcmp.lt.s32.totalorder %v387, 0
      %vm398 = vcmp.lt.s32.totalorder %v394, 0
      %vm399 = vmand %vm397, %vm395
      %vm400 = vmand %vm398, %vm396
      %v401 = vadd.s32 %v387, 16
      %v402 = vadd.s32 %v394, 16
      %v403 = vsel %vm399, %v401, %v387
      %v404 = vsel %vm400, %v402, %v394
      %vm405 = vcmp.gt.s32.totalorder %v403, 0
      %vm406 = vcmp.gt.s32.totalorder %v404, 0
      %v407 = vsel %vm405, 1, 0
      %v408 = vsel %vm406, 1, 0
      %v409 = vcvt.s32.f32 %v407
      %v410 = vcvt.s32.f32 %v408
      %vm411 = vcmp.lt.s32.totalorder %v403, 15
      %vm412 = vcmp.lt.s32.totalorder %v404, 15
      %v413 = vsel %vm411, 1, 0
      %v414 = vsel %vm412, 1, 0
      %v415 = vcvt.s32.f32 %v413
      %v416 = vcvt.s32.f32 %v414
      %vm417 = vcmp.lt.s32.totalorder %v379, 0
      %v418 = vsub.s32 0, %v379
      %v419 = vsel %vm417, %v418, %v379
      %v420 = vshrl.u32 %v419, 3
      %v421 = vand.u32 %v419, 7
      %v422 = vsub.s32 0, %v421
      %v423 = vsel %vm417, %v422, %v421
      %vm424 = vcmp.ne.s32.totalorder %v423, 0
      %vm425 = vcmp.lt.s32.totalorder %v423, 0
      %vm426 = vmand %vm425, %vm424
      %v427 = vadd.s32 %v423, 8
      %v428 = vsel %vm426, %v427, %v423
      %vm429 = vcmp.gt.s32.totalorder %v428, 0
      %v430 = vsel %vm429, 1, 0
      %v431 = vcvt.s32.f32 %v430
      %vm432 = vcmp.lt.s32.totalorder %v428, 7
      %v433 = vsel %vm432, 1, 0
      %v434 = vcvt.s32.f32 %v433
      %v435 = vld [vmem:[%s3] sm:$0xf]
      %v436 = vld [vmem:[%s360] sm:$0xff]
      %v439 = vcombine.low %v409, %v410
      %v441 = vmul.f32 %v436, %v439
      %443 = vset.pattern.permute.xlu0 0
      %444 = vperm.xlu0 %443, %v435
      %v445 = vpop.permute.xlu0 %444
      %v448 = vlaneseq
      %v449 = vshrl.u32 %v448, 7
      %v450 = vsub.s32 0, %v449
      %v451 = vrot.slane %v441, %v450
      %v452 = vlaneseq
      %v453 = vshrl.u32 %v452, 7
      %v454 = vsub.s32 4, %v453
      %v455 = vrot.slane %v441, %v454
      %v458 = vlaneseq
      %v459 = vshrl.u32 %v458, 7
      %v460 = vsub.s32 0, %v459
      %v461 = vrot.slane %v451, %v460
      %v462 = vlaneseq
      %v463 = vshrl.u32 %v462, 7
      %v464 = vsub.s32 0, %v463
      %v465 = vrot.slane %v455, %v464
      %v466 = vmul.f32 %v445, %v461
      %v467 = vmul.f32 %v445, %v465
      %v468 = vadd.f32 %v466, 0.0
      %v469 = vadd.f32 %v467, 0.0
      %470 = vset.pattern.permute.xlu0 1
      %471 = vperm.xlu0 %470, %v435
      %v472 = vpop.permute.xlu0 %471
      %v474 = vlaneseq
      %v475 = vshrl.u32 %v474, 7
      %v476 = vsub.s32 1, %v475
      %v477 = vrot.slane %v441, %v476
      %v478 = vlaneseq
      %v479 = vshrl.u32 %v478, 7
      %v480 = vsub.s32 5, %v479
      %v481 = vrot.slane %v441, %v480
      %v484 = vlaneseq
      %v485 = vshrl.u32 %v484, 7
      %v486 = vsub.s32 1, %v485
      %v487 = vrot.slane %v477, %v486
      %v488 = vlaneseq
      %v489 = vshrl.u32 %v488, 7
      %v490 = vsub.s32 1, %v489
      %v491 = vrot.slane %v481, %v490
      %v492 = vmul.f32 %v472, %v487
      %v493 = vmul.f32 %v472, %v491
      %v494 = vadd.f32 %v468, %v492
      %v495 = vadd.f32 %v469, %v493
      %496 = vset.pattern.permute.xlu0 2
      %497 = vperm.xlu0 %496, %v435
      %v498 = vpop.permute.xlu0 %497
      %v500 = vlaneseq
      %v501 = vshrl.u32 %v500, 7
      %v502 = vsub.s32 2, %v501
      %v503 = vrot.slane %v441, %v502
      %v504 = vlaneseq
      %v505 = vshrl.u32 %v504, 7
      %v506 = vsub.s32 6, %v505
      %v507 = vrot.slane %v441, %v506
      %v510 = vlaneseq
      %v511 = vshrl.u32 %v510, 7
      %v512 = vsub.s32 2, %v511
      %v513 = vrot.slane %v503, %v512
      %v514 = vlaneseq
      %v515 = vshrl.u32 %v514, 7
      %v516 = vsub.s32 2, %v515
      %v517 = vrot.slane %v507, %v516
      %v518 = vmul.f32 %v498, %v513
      %v519 = vmul.f32 %v498, %v517
      %v520 = vadd.f32 %v494, %v518
      %v521 = vadd.f32 %v495, %v519
      %522 = vset.pattern.permute.xlu0 3
      %523 = vperm.xlu0 %522, %v435
      %v524 = vpop.permute.xlu0 %523
      %v526 = vlaneseq
      %v527 = vshrl.u32 %v526, 7
      %v528 = vsub.s32 3, %v527
      %v529 = vrot.slane %v441, %v528
      %v530 = vlaneseq
      %v531 = vshrl.u32 %v530, 7
      %v532 = vsub.s32 7, %v531
      %v533 = vrot.slane %v441, %v532
      %v536 = vlaneseq
      %v537 = vshrl.u32 %v536, 7
      %v538 = vsub.s32 3, %v537
      %v539 = vrot.slane %v529, %v538
      %v540 = vlaneseq
      %v541 = vshrl.u32 %v540, 7
      %v542 = vsub.s32 3, %v541
      %v543 = vrot.slane %v533, %v542
      %v544 = vmul.f32 %v524, %v539
      %v545 = vmul.f32 %v524, %v543
      %v546 = vadd.f32 %v520, %v544
      %v547 = vadd.f32 %v521, %v545
      %v548 = vld [vmem:[%s360] sm:$0xff]
      %v549 = vld [vmem:[%s360 + $0x8] sm:$0xf]
      %550 = vset.pattern.permute.xlu0 4
      %551 = vperm.xlu0 %550, %v435
      %v552 = vpop.permute.xlu0 %551
      %v556 = vlaneseq
      %v557 = vshrl.u32 %v556, 7
      %v558 = vsub.s32 0, %v557
      %v559 = vrot.slane %v548, %v558
      %v560 = vlaneseq
      %v561 = vshrl.u32 %v560, 7
      %v562 = vsub.s32 4, %v561
      %v563 = vrot.slane %v548, %v562
      %v564 = vlaneseq
      %v565 = vshrl.u32 %v564, 7
      %v566 = vsub.s32 0, %v565
      %v567 = vrot.slane %v549, %v566
      %v571 = vlaneseq
      %v572 = vshrl.u32 %v571, 7
      %v573 = vsub.s32 0, %v572
      %v574 = vrot.slane %v559, %v573
      %v575 = vlaneseq
      %v576 = vshrl.u32 %v575, 7
      %v577 = vsub.s32 0, %v576
      %v578 = vrot.slane %v563, %v577
      %v579 = vlaneseq
      %v580 = vshrl.u32 %v579, 7
      %v581 = vsub.s32 0, %v580
      %v582 = vrot.slane %v567, %v581
      %v583 = vmul.f32 %v552, %v574
      %v584 = vmul.f32 %v552, %v578
      %v585 = vmul.f32 %v552, %v582
      %589 = vrot.lane.b32.xlu0 %v583, 127
      %v590 = vpop.permute.xlu0 %589
      %591 = vrot.lane.b32.xlu0 %v584, 127
      %v592 = vpop.permute.xlu0 %591
      %593 = vrot.lane.b32.xlu0 %v585, 127
      %v594 = vpop.permute.xlu0 %593
      %vm595 = vcmask 1039360
      %v596 = vsel %vm595, %v590, %v592
      %v597 = vsel %vm595, %v592, %v594
      %v600 = vadd.f32 %v546, %v596
      %v601 = vadd.f32 %v547, %v597
      %602 = vset.pattern.permute.xlu0 5
      %603 = vperm.xlu0 %602, %v435
      %v604 = vpop.permute.xlu0 %603
      %v606 = vlaneseq
      %v607 = vshrl.u32 %v606, 7
      %v608 = vsub.s32 1, %v607
      %v609 = vrot.slane %v548, %v608
      %v610 = vlaneseq
      %v611 = vshrl.u32 %v610, 7
      %v612 = vsub.s32 5, %v611
      %v613 = vrot.slane %v548, %v612
      %v614 = vlaneseq
      %v615 = vshrl.u32 %v614, 7
      %v616 = vsub.s32 1, %v615
      %v617 = vrot.slane %v549, %v616
      %v621 = vlaneseq
      %v622 = vshrl.u32 %v621, 7
      %v623 = vsub.s32 1, %v622
      %v624 = vrot.slane %v609, %v623
      %v625 = vlaneseq
      %v626 = vshrl.u32 %v625, 7
      %v627 = vsub.s32 1, %v626
      %v628 = vrot.slane %v613, %v627
      %v629 = vlaneseq
      %v630 = vshrl.u32 %v629, 7
      %v631 = vsub.s32 1, %v630
      %v632 = vrot.slane %v617, %v631
      %v633 = vmul.f32 %v604, %v624
      %v634 = vmul.f32 %v604, %v628
      %v635 = vmul.f32 %v604, %v632
      %639 = vrot.lane.b32.xlu0 %v633, 127
      %v640 = vpop.permute.xlu0 %639
      %641 = vrot.lane.b32.xlu0 %v634, 127
      %v642 = vpop.permute.xlu0 %641
      %643 = vrot.lane.b32.xlu0 %v635, 127
      %v644 = vpop.permute.xlu0 %643
      %v645 = vsel %vm595, %v640, %v642
      %v646 = vsel %vm595, %v642, %v644
      %v649 = vadd.f32 %v600, %v645
      %v650 = vadd.f32 %v601, %v646
      %651 = vset.pattern.permute.xlu0 6
      %652 = vperm.xlu0 %651, %v435
      %v653 = vpop.permute.xlu0 %652
      %v655 = vlaneseq
      %v656 = vshrl.u32 %v655, 7
      %v657 = vsub.s32 2, %v656
      %v658 = vrot.slane %v548, %v657
      %v659 = vlaneseq
      %v660 = vshrl.u32 %v659, 7
      %v661 = vsub.s32 6, %v660
      %v662 = vrot.slane %v548, %v661
      %v663 = vlaneseq
      %v664 = vshrl.u32 %v663, 7
      %v665 = vsub.s32 2, %v664
      %v666 = vrot.slane %v549, %v665
      %v670 = vlaneseq
      %v671 = vshrl.u32 %v670, 7
      %v672 = vsub.s32 2, %v671
      %v673 = vrot.slane %v658, %v672
      %v674 = vlaneseq
      %v675 = vshrl.u32 %v674, 7
      %v676 = vsub.s32 2, %v675
      %v677 = vrot.slane %v662, %v676
      %v678 = vlaneseq
      %v679 = vshrl.u32 %v678, 7
      %v680 = vsub.s32 2, %v679
      %v681 = vrot.slane %v666, %v680
      %v682 = vmul.f32 %v653, %v673
      %v683 = vmul.f32 %v653, %v677
      %v684 = vmul.f32 %v653, %v681
      %688 = vrot.lane.b32.xlu0 %v682, 127
      %v689 = vpop.permute.xlu0 %688
      %690 = vrot.lane.b32.xlu0 %v683, 127
      %v691 = vpop.permute.xlu0 %690
      %692 = vrot.lane.b32.xlu0 %v684, 127
      %v693 = vpop.permute.xlu0 %692
      %v694 = vsel %vm595, %v689, %v691
      %v695 = vsel %vm595, %v691, %v693
      %v698 = vadd.f32 %v649, %v694
      %v699 = vadd.f32 %v650, %v695
      %700 = vset.pattern.permute.xlu0 7
      %701 = vperm.xlu0 %700, %v435
      %v702 = vpop.permute.xlu0 %701
      %v704 = vlaneseq
      %v705 = vshrl.u32 %v704, 7
      %v706 = vsub.s32 3, %v705
      %v707 = vrot.slane %v548, %v706
      %v708 = vlaneseq
      %v709 = vshrl.u32 %v708, 7
      %v710 = vsub.s32 7, %v709
      %v711 = vrot.slane %v548, %v710
      %v712 = vlaneseq
      %v713 = vshrl.u32 %v712, 7
      %v714 = vsub.s32 3, %v713
      %v715 = vrot.slane %v549, %v714
      %v719 = vlaneseq
      %v720 = vshrl.u32 %v719, 7
      %v721 = vsub.s32 3, %v720
      %v722 = vrot.slane %v707, %v721
      %v723 = vlaneseq
      %v724 = vshrl.u32 %v723, 7
      %v725 = vsub.s32 3, %v724
      %v726 = vrot.slane %v711, %v725
      %v727 = vlaneseq
      %v728 = vshrl.u32 %v727, 7
      %v729 = vsub.s32 3, %v728
      %v730 = vrot.slane %v715, %v729
      %v731 = vmul.f32 %v702, %v722
      %v732 = vmul.f32 %v702, %v726
      %v733 = vmul.f32 %v702, %v730
      %737 = vrot.lane.b32.xlu0 %v731, 127
      %v738 = vpop.permute.xlu0 %737
      %739 = vrot.lane.b32.xlu0 %v732, 127
      %v740 = vpop.permute.xlu0 %739
      %741 = vrot.lane.b32.xlu0 %v733, 127
      %v742 = vpop.permute.xlu0 %741
      %v743 = vsel %vm595, %v738, %v740
      %v744 = vsel %vm595, %v740, %v742
      %v747 = vadd.f32 %v698, %v743
      %v748 = vadd.f32 %v699, %v744
      %v751 = vcombine.low %v415, %v416
      %752 = vrot.lane.b32.xlu0 %v751, 2
      %v753 = vpop.permute.xlu0 %752
      %v754 = vrot.slane %v753, 4
      %vm755 = vcmask 15360
      %v756 = vsel %vm755, %v754, %v753
      %v759 = vmul.f32 %v548, %v756
      %v760 = vmul.f32 %v549, %v754
      %761 = vset.pattern.permute.xlu0 8
      %762 = vperm.xlu0 %761, %v435
      %v763 = vpop.permute.xlu0 %762
      %v767 = vlaneseq
      %v768 = vshrl.u32 %v767, 7
      %v769 = vsub.s32 0, %v768
      %v770 = vrot.slane %v759, %v769
      %v771 = vlaneseq
      %v772 = vshrl.u32 %v771, 7
      %v773 = vsub.s32 4, %v772
      %v774 = vrot.slane %v759, %v773
      %v775 = vlaneseq
      %v776 = vshrl.u32 %v775, 7
      %v777 = vsub.s32 0, %v776
      %v778 = vrot.slane %v760, %v777
      %v782 = vlaneseq
      %v783 = vshrl.u32 %v782, 7
      %v784 = vsub.s32 0, %v783
      %v785 = vrot.slane %v770, %v784
      %v786 = vlaneseq
      %v787 = vshrl.u32 %v786, 7
      %v788 = vsub.s32 0, %v787
      %v789 = vrot.slane %v774, %v788
      %v790 = vlaneseq
      %v791 = vshrl.u32 %v790, 7
      %v792 = vsub.s32 0, %v791
      %v793 = vrot.slane %v778, %v792
      %v794 = vmul.f32 %v763, %v785
      %v795 = vmul.f32 %v763, %v789
      %v796 = vmul.f32 %v763, %v793
      %800 = vrot.lane.b32.xlu0 %v794, 126
      %v801 = vpop.permute.xlu0 %800
      %802 = vrot.lane.b32.xlu0 %v795, 126
      %v803 = vpop.permute.xlu0 %802
      %804 = vrot.lane.b32.xlu0 %v796, 126
      %v805 = vpop.permute.xlu0 %804
      %vm806 = vcmask 1031168
      %v807 = vsel %vm806, %v801, %v803
      %v808 = vsel %vm806, %v803, %v805
      %v811 = vadd.f32 %v747, %v807
      %v812 = vadd.f32 %v748, %v808
      %813 = vset.pattern.permute.xlu0 9
      %814 = vperm.xlu0 %813, %v435
      %v815 = vpop.permute.xlu0 %814
      %v817 = vlaneseq
      %v818 = vshrl.u32 %v817, 7
      %v819 = vsub.s32 1, %v818
      %v820 = vrot.slane %v759, %v819
      %v821 = vlaneseq
      %v822 = vshrl.u32 %v821, 7
      %v823 = vsub.s32 5, %v822
      %v824 = vrot.slane %v759, %v823
      %v825 = vlaneseq
      %v826 = vshrl.u32 %v825, 7
      %v827 = vsub.s32 1, %v826
      %v828 = vrot.slane %v760, %v827
      %v832 = vlaneseq
      %v833 = vshrl.u32 %v832, 7
      %v834 = vsub.s32 1, %v833
      %v835 = vrot.slane %v820, %v834
      %v836 = vlaneseq
      %v837 = vshrl.u32 %v836, 7
      %v838 = vsub.s32 1, %v837
      %v839 = vrot.slane %v824, %v838
      %v840 = vlaneseq
      %v841 = vshrl.u32 %v840, 7
      %v842 = vsub.s32 1, %v841
      %v843 = vrot.slane %v828, %v842
      %v844 = vmul.f32 %v815, %v835
      %v845 = vmul.f32 %v815, %v839
      %v846 = vmul.f32 %v815, %v843
      %850 = vrot.lane.b32.xlu0 %v844, 126
      %v851 = vpop.permute.xlu0 %850
      %852 = vrot.lane.b32.xlu0 %v845, 126
      %v853 = vpop.permute.xlu0 %852
      %854 = vrot.lane.b32.xlu0 %v846, 126
      %v855 = vpop.permute.xlu0 %854
      %v856 = vsel %vm806, %v851, %v853
      %v857 = vsel %vm806, %v853, %v855
      %v860 = vadd.f32 %v811, %v856
      %v861 = vadd.f32 %v812, %v857
      %862 = vset.pattern.permute.xlu0 10
      %863 = vperm.xlu0 %862, %v435
      %v864 = vpop.permute.xlu0 %863
      %v866 = vlaneseq
      %v867 = vshrl.u32 %v866, 7
      %v868 = vsub.s32 2, %v867
      %v869 = vrot.slane %v759, %v868
      %v870 = vlaneseq
      %v871 = vshrl.u32 %v870, 7
      %v872 = vsub.s32 6, %v871
      %v873 = vrot.slane %v759, %v872
      %v874 = vlaneseq
      %v875 = vshrl.u32 %v874, 7
      %v876 = vsub.s32 2, %v875
      %v877 = vrot.slane %v760, %v876
      %v881 = vlaneseq
      %v882 = vshrl.u32 %v881, 7
      %v883 = vsub.s32 2, %v882
      %v884 = vrot.slane %v869, %v883
      %v885 = vlaneseq
      %v886 = vshrl.u32 %v885, 7
      %v887 = vsub.s32 2, %v886
      %v888 = vrot.slane %v873, %v887
      %v889 = vlaneseq
      %v890 = vshrl.u32 %v889, 7
      %v891 = vsub.s32 2, %v890
      %v892 = vrot.slane %v877, %v891
      %v893 = vmul.f32 %v864, %v884
      %v894 = vmul.f32 %v864, %v888
      %v895 = vmul.f32 %v864, %v892
      %899 = vrot.lane.b32.xlu0 %v893, 126
      %v900 = vpop.permute.xlu0 %899
      %901 = vrot.lane.b32.xlu0 %v894, 126
      %v902 = vpop.permute.xlu0 %901
      %903 = vrot.lane.b32.xlu0 %v895, 126
      %v904 = vpop.permute.xlu0 %903
      %v905 = vsel %vm806, %v900, %v902
      %v906 = vsel %vm806, %v902, %v904
      %v909 = vadd.f32 %v860, %v905
      %v910 = vadd.f32 %v861, %v906
      %911 = vset.pattern.permute.xlu0 11
      %912 = vperm.xlu0 %911, %v435
      %v913 = vpop.permute.xlu0 %912
      %v915 = vlaneseq
      %v916 = vshrl.u32 %v915, 7
      %v917 = vsub.s32 3, %v916
      %v918 = vrot.slane %v759, %v917
      %v919 = vlaneseq
      %v920 = vshrl.u32 %v919, 7
      %v921 = vsub.s32 7, %v920
      %v922 = vrot.slane %v759, %v921
      %v923 = vlaneseq
      %v924 = vshrl.u32 %v923, 7
      %v925 = vsub.s32 3, %v924
      %v926 = vrot.slane %v760, %v925
      %v930 = vlaneseq
      %v931 = vshrl.u32 %v930, 7
      %v932 = vsub.s32 3, %v931
      %v933 = vrot.slane %v918, %v932
      %v934 = vlaneseq
      %v935 = vshrl.u32 %v934, 7
      %v936 = vsub.s32 3, %v935
      %v937 = vrot.slane %v922, %v936
      %v938 = vlaneseq
      %v939 = vshrl.u32 %v938, 7
      %v940 = vsub.s32 3, %v939
      %v941 = vrot.slane %v926, %v940
      %v942 = vmul.f32 %v913, %v933
      %v943 = vmul.f32 %v913, %v937
      %v944 = vmul.f32 %v913, %v941
      %948 = vrot.lane.b32.xlu0 %v942, 126
      %v949 = vpop.permute.xlu0 %948
      %950 = vrot.lane.b32.xlu0 %v943, 126
      %v951 = vpop.permute.xlu0 %950
      %952 = vrot.lane.b32.xlu0 %v944, 126
      %v953 = vpop.permute.xlu0 %952
      %v954 = vsel %vm806, %v949, %v951
      %v955 = vsel %vm806, %v951, %v953
      %v958 = vadd.f32 %v909, %v954
      %v959 = vadd.f32 %v910, %v955
      %v960 = vld [vmem:[%s360] sm:$0xff]
      %v961 = vld [vmem:[%s360 + $0x8] sm:$0xf]
      %962 = vrot.lane.b32.xlu0 %v439, 16
      %v963 = vpop.permute.xlu0 %962
      %v964 = vrot.slane %v963, 4
      %vm965 = vcmask 130048
      %v966 = vsel %vm965, %v964, %v963
      %v969 = vmul.f32 %v960, %v966
      %v970 = vmul.f32 %v961, %v964
      %971 = vset.pattern.permute.xlu0 12
      %972 = vperm.xlu0 %971, %v435
      %v973 = vpop.permute.xlu0 %972
      %v977 = vlaneseq
      %v978 = vshrl.u32 %v977, 7
      %v979 = vsub.s32 0, %v978
      %v980 = vrot.slane %v969, %v979
      %v981 = vlaneseq
      %v982 = vshrl.u32 %v981, 7
      %v983 = vsub.s32 4, %v982
      %v984 = vrot.slane %v969, %v983
      %v985 = vlaneseq
      %v986 = vshrl.u32 %v985, 7
      %v987 = vsub.s32 0, %v986
      %v988 = vrot.slane %v970, %v987
      %v992 = vlaneseq
      %v993 = vshrl.u32 %v992, 7
      %v994 = vsub.s32 0, %v993
      %v995 = vrot.slane %v980, %v994
      %v996 = vlaneseq
      %v997 = vshrl.u32 %v996, 7
      %v998 = vsub.s32 0, %v997
      %v999 = vrot.slane %v984, %v998
      %v1000 = vlaneseq
      %v1001 = vshrl.u32 %v1000, 7
      %v1002 = vsub.s32 0, %v1001
      %v1003 = vrot.slane %v988, %v1002
      %v1004 = vmul.f32 %v973, %v995
      %v1005 = vmul.f32 %v973, %v999
      %v1006 = vmul.f32 %v973, %v1003
      %1010 = vrot.lane.b32.xlu0 %v1004, 112
      %v1011 = vpop.permute.xlu0 %1010
      %1012 = vrot.lane.b32.xlu0 %v1005, 112
      %v1013 = vpop.permute.xlu0 %1012
      %1014 = vrot.lane.b32.xlu0 %v1006, 112
      %v1015 = vpop.permute.xlu0 %1014
      %vm1016 = vcmask 916480
      %v1017 = vsel %vm1016, %v1011, %v1013
      %v1018 = vsel %vm1016, %v1013, %v1015
      %v1021 = vadd.f32 %v958, %v1017
      %v1022 = vadd.f32 %v959, %v1018
      %1023 = vset.pattern.permute.xlu0 13
      %1024 = vperm.xlu0 %1023, %v435
      %v1025 = vpop.permute.xlu0 %1024
      %v1027 = vlaneseq
      %v1028 = vshrl.u32 %v1027, 7
      %v1029 = vsub.s32 1, %v1028
      %v1030 = vrot.slane %v969, %v1029
      %v1031 = vlaneseq
      %v1032 = vshrl.u32 %v1031, 7
      %v1033 = vsub.s32 5, %v1032
      %v1034 = vrot.slane %v969, %v1033
      %v1035 = vlaneseq
      %v1036 = vshrl.u32 %v1035, 7
      %v1037 = vsub.s32 1, %v1036
      %v1038 = vrot.slane %v970, %v1037
      %v1042 = vlaneseq
      %v1043 = vshrl.u32 %v1042, 7
      %v1044 = vsub.s32 1, %v1043
      %v1045 = vrot.slane %v1030, %v1044
      %v1046 = vlaneseq
      %v1047 = vshrl.u32 %v1046, 7
      %v1048 = vsub.s32 1, %v1047
      %v1049 = vrot.slane %v1034, %v1048
      %v1050 = vlaneseq
      %v1051 = vshrl.u32 %v1050, 7
      %v1052 = vsub.s32 1, %v1051
      %v1053 = vrot.slane %v1038, %v1052
      %v1054 = vmul.f32 %v1025, %v1045
      %v1055 = vmul.f32 %v1025, %v1049
      %v1056 = vmul.f32 %v1025, %v1053
      %1060 = vrot.lane.b32.xlu0 %v1054, 112
      %v1061 = vpop.permute.xlu0 %1060
      %1062 = vrot.lane.b32.xlu0 %v1055, 112
      %v1063 = vpop.permute.xlu0 %1062
      %1064 = vrot.lane.b32.xlu0 %v1056, 112
      %v1065 = vpop.permute.xlu0 %1064
      %v1066 = vsel %vm1016, %v1061, %v1063
      %v1067 = vsel %vm1016, %v1063, %v1065
      %v1070 = vadd.f32 %v1021, %v1066
      %v1071 = vadd.f32 %v1022, %v1067
      %1072 = vset.pattern.permute.xlu0 14
      %1073 = vperm.xlu0 %1072, %v435
      %v1074 = vpop.permute.xlu0 %1073
      %v1076 = vlaneseq
      %v1077 = vshrl.u32 %v1076, 7
      %v1078 = vsub.s32 2, %v1077
      %v1079 = vrot.slane %v969, %v1078
      %v1080 = vlaneseq
      %v1081 = vshrl.u32 %v1080, 7
      %v1082 = vsub.s32 6, %v1081
      %v1083 = vrot.slane %v969, %v1082
      %v1084 = vlaneseq
      %v1085 = vshrl.u32 %v1084, 7
      %v1086 = vsub.s32 2, %v1085
      %v1087 = vrot.slane %v970, %v1086
      %v1091 = vlaneseq
      %v1092 = vshrl.u32 %v1091, 7
      %v1093 = vsub.s32 2, %v1092
      %v1094 = vrot.slane %v1079, %v1093
      %v1095 = vlaneseq
      %v1096 = vshrl.u32 %v1095, 7
      %v1097 = vsub.s32 2, %v1096
      %v1098 = vrot.slane %v1083, %v1097
      %v1099 = vlaneseq
      %v1100 = vshrl.u32 %v1099, 7
      %v1101 = vsub.s32 2, %v1100
      %v1102 = vrot.slane %v1087, %v1101
      %v1103 = vmul.f32 %v1074, %v1094
      %v1104 = vmul.f32 %v1074, %v1098
      %v1105 = vmul.f32 %v1074, %v1102
      %1109 = vrot.lane.b32.xlu0 %v1103, 112
      %v1110 = vpop.permute.xlu0 %1109
      %1111 = vrot.lane.b32.xlu0 %v1104, 112
      %v1112 = vpop.permute.xlu0 %1111
      %1113 = vrot.lane.b32.xlu0 %v1105, 112
      %v1114 = vpop.permute.xlu0 %1113
      %v1115 = vsel %vm1016, %v1110, %v1112
      %v1116 = vsel %vm1016, %v1112, %v1114
      %v1119 = vadd.f32 %v1070, %v1115
      %v1120 = vadd.f32 %v1071, %v1116
      %1121 = vset.pattern.permute.xlu0 15
      %1122 = vperm.xlu0 %1121, %v435
      %v1123 = vpop.permute.xlu0 %1122
      %v1125 = vlaneseq
      %v1126 = vshrl.u32 %v1125, 7
      %v1127 = vsub.s32 3, %v1126
      %v1128 = vrot.slane %v969, %v1127
      %v1129 = vlaneseq
      %v1130 = vshrl.u32 %v1129, 7
      %v1131 = vsub.s32 7, %v1130
      %v1132 = vrot.slane %v969, %v1131
      %v1133 = vlaneseq
      %v1134 = vshrl.u32 %v1133, 7
      %v1135 = vsub.s32 3, %v1134
      %v1136 = vrot.slane %v970, %v1135
      %v1140 = vlaneseq
      %v1141 = vshrl.u32 %v1140, 7
      %v1142 = vsub.s32 3, %v1141
      %v1143 = vrot.slane %v1128, %v1142
      %v1144 = vlaneseq
      %v1145 = vshrl.u32 %v1144, 7
      %v1146 = vsub.s32 3, %v1145
      %v1147 = vrot.slane %v1132, %v1146
      %v1148 = vlaneseq
      %v1149 = vshrl.u32 %v1148, 7
      %v1150 = vsub.s32 3, %v1149
      %v1151 = vrot.slane %v1136, %v1150
      %v1152 = vmul.f32 %v1123, %v1143
      %v1153 = vmul.f32 %v1123, %v1147
      %v1154 = vmul.f32 %v1123, %v1151
      %1158 = vrot.lane.b32.xlu0 %v1152, 112
      %v1159 = vpop.permute.xlu0 %1158
      %1160 = vrot.lane.b32.xlu0 %v1153, 112
      %v1161 = vpop.permute.xlu0 %1160
      %1162 = vrot.lane.b32.xlu0 %v1154, 112
      %v1163 = vpop.permute.xlu0 %1162
      %v1164 = vsel %vm1016, %v1159, %v1161
      %v1165 = vsel %vm1016, %v1161, %v1163
      %v1168 = vadd.f32 %v1119, %v1164
      %v1169 = vadd.f32 %v1120, %v1165
      %v1170 = vld [vmem:[%s360] sm:$0xff]
      %v1171 = vld [vmem:[%s360 + $0x8] sm:$0xf]
      %1172 = vset.pattern.permute.xlu0 16
      %1173 = vperm.xlu0 %1172, %v435
      %v1174 = vpop.permute.xlu0 %1173
      %v1178 = vlaneseq
      %v1179 = vshrl.u32 %v1178, 7
      %v1180 = vsub.s32 0, %v1179
      %v1181 = vrot.slane %v1170, %v1180
      %v1182 = vlaneseq
      %v1183 = vshrl.u32 %v1182, 7
      %v1184 = vsub.s32 4, %v1183
      %v1185 = vrot.slane %v1170, %v1184
      %v1186 = vlaneseq
      %v1187 = vshrl.u32 %v1186, 7
      %v1188 = vsub.s32 0, %v1187
      %v1189 = vrot.slane %v1171, %v1188
      %v1193 = vlaneseq
      %v1194 = vshrl.u32 %v1193, 7
      %v1195 = vsub.s32 0, %v1194
      %v1196 = vrot.slane %v1181, %v1195
      %v1197 = vlaneseq
      %v1198 = vshrl.u32 %v1197, 7
      %v1199 = vsub.s32 0, %v1198
      %v1200 = vrot.slane %v1185, %v1199
      %v1201 = vlaneseq
      %v1202 = vshrl.u32 %v1201, 7
      %v1203 = vsub.s32 0, %v1202
      %v1204 = vrot.slane %v1189, %v1203
      %v1205 = vmul.f32 %v1174, %v1196
      %v1206 = vmul.f32 %v1174, %v1200
      %v1207 = vmul.f32 %v1174, %v1204
      %1211 = vrot.lane.b32.xlu0 %v1205, 111
      %v1212 = vpop.permute.xlu0 %1211
      %1213 = vrot.lane.b32.xlu0 %v1206, 111
      %v1214 = vpop.permute.xlu0 %1213
      %1215 = vrot.lane.b32.xlu0 %v1207, 111
      %v1216 = vpop.permute.xlu0 %1215
      %vm1217 = vcmask 908288
      %v1218 = vsel %vm1217, %v1212, %v1214
      %v1219 = vsel %vm1217, %v1214, %v1216
      %v1222 = vadd.f32 %v1168, %v1218
      %v1223 = vadd.f32 %v1169, %v1219
      %1224 = vset.pattern.permute.xlu0 17
      %1225 = vperm.xlu0 %1224, %v435
      %v1226 = vpop.permute.xlu0 %1225
      %v1228 = vlaneseq
      %v1229 = vshrl.u32 %v1228, 7
      %v1230 = vsub.s32 1, %v1229
      %v1231 = vrot.slane %v1170, %v1230
      %v1232 = vlaneseq
      %v1233 = vshrl.u32 %v1232, 7
      %v1234 = vsub.s32 5, %v1233
      %v1235 = vrot.slane %v1170, %v1234
      %v1236 = vlaneseq
      %v1237 = vshrl.u32 %v1236, 7
      %v1238 = vsub.s32 1, %v1237
      %v1239 = vrot.slane %v1171, %v1238
      %v1243 = vlaneseq
      %v1244 = vshrl.u32 %v1243, 7
      %v1245 = vsub.s32 1, %v1244
      %v1246 = vrot.slane %v1231, %v1245
      %v1247 = vlaneseq
      %v1248 = vshrl.u32 %v1247, 7
      %v1249 = vsub.s32 1, %v1248
      %v1250 = vrot.slane %v1235, %v1249
      %v1251 = vlaneseq
      %v1252 = vshrl.u32 %v1251, 7
      %v1253 = vsub.s32 1, %v1252
      %v1254 = vrot.slane %v1239, %v1253
      %v1255 = vmul.f32 %v1226, %v1246
      %v1256 = vmul.f32 %v1226, %v1250
      %v1257 = vmul.f32 %v1226, %v1254
      %1261 = vrot.lane.b32.xlu0 %v1255, 111
      %v1262 = vpop.permute.xlu0 %1261
      %1263 = vrot.lane.b32.xlu0 %v1256, 111
      %v1264 = vpop.permute.xlu0 %1263
      %1265 = vrot.lane.b32.xlu0 %v1257, 111
      %v1266 = vpop.permute.xlu0 %1265
      %v1267 = vsel %vm1217, %v1262, %v1264
      %v1268 = vsel %vm1217, %v1264, %v1266
      %v1271 = vadd.f32 %v1222, %v1267
      %v1272 = vadd.f32 %v1223, %v1268
      %1273 = vset.pattern.permute.xlu0 18
      %1274 = vperm.xlu0 %1273, %v435
      %v1275 = vpop.permute.xlu0 %1274
      %v1277 = vlaneseq
      %v1278 = vshrl.u32 %v1277, 7
      %v1279 = vsub.s32 2, %v1278
      %v1280 = vrot.slane %v1170, %v1279
      %v1281 = vlaneseq
      %v1282 = vshrl.u32 %v1281, 7
      %v1283 = vsub.s32 6, %v1282
      %v1284 = vrot.slane %v1170, %v1283
      %v1285 = vlaneseq
      %v1286 = vshrl.u32 %v1285, 7
      %v1287 = vsub.s32 2, %v1286
      %v1288 = vrot.slane %v1171, %v1287
      %v1292 = vlaneseq
      %v1293 = vshrl.u32 %v1292, 7
      %v1294 = vsub.s32 2, %v1293
      %v1295 = vrot.slane %v1280, %v1294
      %v1296 = vlaneseq
      %v1297 = vshrl.u32 %v1296, 7
      %v1298 = vsub.s32 2, %v1297
      %v1299 = vrot.slane %v1284, %v1298
      %v1300 = vlaneseq
      %v1301 = vshrl.u32 %v1300, 7
      %v1302 = vsub.s32 2, %v1301
      %v1303 = vrot.slane %v1288, %v1302
      %v1304 = vmul.f32 %v1275, %v1295
      %v1305 = vmul.f32 %v1275, %v1299
      %v1306 = vmul.f32 %v1275, %v1303
      %1310 = vrot.lane.b32.xlu0 %v1304, 111
      %v1311 = vpop.permute.xlu0 %1310
      %1312 = vrot.lane.b32.xlu0 %v1305, 111
      %v1313 = vpop.permute.xlu0 %1312
      %1314 = vrot.lane.b32.xlu0 %v1306, 111
      %v1315 = vpop.permute.xlu0 %1314
      %v1316 = vsel %vm1217, %v1311, %v1313
      %v1317 = vsel %vm1217, %v1313, %v1315
      %v1320 = vadd.f32 %v1271, %v1316
      %v1321 = vadd.f32 %v1272, %v1317
      %1322 = vset.pattern.permute.xlu0 19
      %1323 = vperm.xlu0 %1322, %v435
      %v1324 = vpop.permute.xlu0 %1323
      %v1326 = vlaneseq
      %v1327 = vshrl.u32 %v1326, 7
      %v1328 = vsub.s32 3, %v1327
      %v1329 = vrot.slane %v1170, %v1328
      %v1330 = vlaneseq
      %v1331 = vshrl.u32 %v1330, 7
      %v1332 = vsub.s32 7, %v1331
      %v1333 = vrot.slane %v1170, %v1332
      %v1334 = vlaneseq
      %v1335 = vshrl.u32 %v1334, 7
      %v1336 = vsub.s32 3, %v1335
      %v1337 = vrot.slane %v1171, %v1336
      %v1341 = vlaneseq
      %v1342 = vshrl.u32 %v1341, 7
      %v1343 = vsub.s32 3, %v1342
      %v1344 = vrot.slane %v1329, %v1343
      %v1345 = vlaneseq
      %v1346 = vshrl.u32 %v1345, 7
      %v1347 = vsub.s32 3, %v1346
      %v1348 = vrot.slane %v1333, %v1347
      %v1349 = vlaneseq
      %v1350 = vshrl.u32 %v1349, 7
      %v1351 = vsub.s32 3, %v1350
      %v1352 = vrot.slane %v1337, %v1351
      %v1353 = vmul.f32 %v1324, %v1344
      %v1354 = vmul.f32 %v1324, %v1348
      %v1355 = vmul.f32 %v1324, %v1352
      %1359 = vrot.lane.b32.xlu0 %v1353, 111
      %v1360 = vpop.permute.xlu0 %1359
      %1361 = vrot.lane.b32.xlu0 %v1354, 111
      %v1362 = vpop.permute.xlu0 %1361
      %1363 = vrot.lane.b32.xlu0 %v1355, 111
      %v1364 = vpop.permute.xlu0 %1363
      %v1365 = vsel %vm1217, %v1360, %v1362
      %v1366 = vsel %vm1217, %v1362, %v1364
      %v1369 = vadd.f32 %v1320, %v1365
      %v1370 = vadd.f32 %v1321, %v1366
      %1371 = vrot.lane.b32.xlu0 %v751, 18
      %v1372 = vpop.permute.xlu0 %1371
      %v1373 = vrot.slane %v1372, 4
      %vm1374 = vcmask 146432
      %v1375 = vsel %vm1374, %v1373, %v1372
      %v1378 = vmul.f32 %v1170, %v1375
      %v1379 = vmul.f32 %v1171, %v1373
      %1380 = vset.pattern.permute.xlu0 20
      %1381 = vperm.xlu0 %1380, %v435
      %v1382 = vpop.permute.xlu0 %1381
      %v1386 = vlaneseq
      %v1387 = vshrl.u32 %v1386, 7
      %v1388 = vsub.s32 0, %v1387
      %v1389 = vrot.slane %v1378, %v1388
      %v1390 = vlaneseq
      %v1391 = vshrl.u32 %v1390, 7
      %v1392 = vsub.s32 4, %v1391
      %v1393 = vrot.slane %v1378, %v1392
      %v1394 = vlaneseq
      %v1395 = vshrl.u32 %v1394, 7
      %v1396 = vsub.s32 0, %v1395
      %v1397 = vrot.slane %v1379, %v1396
      %v1401 = vlaneseq
      %v1402 = vshrl.u32 %v1401, 7
      %v1403 = vsub.s32 0, %v1402
      %v1404 = vrot.slane %v1389, %v1403
      %v1405 = vlaneseq
      %v1406 = vshrl.u32 %v1405, 7
      %v1407 = vsub.s32 0, %v1406
      %v1408 = vrot.slane %v1393, %v1407
      %v1409 = vlaneseq
      %v1410 = vshrl.u32 %v1409, 7
      %v1411 = vsub.s32 0, %v1410
      %v1412 = vrot.slane %v1397, %v1411
      %v1413 = vmul.f32 %v1382, %v1404
      %v1414 = vmul.f32 %v1382, %v1408
      %v1415 = vmul.f32 %v1382, %v1412
      %1419 = vrot.lane.b32.xlu0 %v1413, 110
      %v1420 = vpop.permute.xlu0 %1419
      %1421 = vrot.lane.b32.xlu0 %v1414, 110
      %v1422 = vpop.permute.xlu0 %1421
      %1423 = vrot.lane.b32.xlu0 %v1415, 110
      %v1424 = vpop.permute.xlu0 %1423
      %vm1425 = vcmask 900096
      %v1426 = vsel %vm1425, %v1420, %v1422
      %v1427 = vsel %vm1425, %v1422, %v1424
      %v1430 = vadd.f32 %v1369, %v1426
      %v1431 = vadd.f32 %v1370, %v1427
      %1432 = vset.pattern.permute.xlu0 21
      %1433 = vperm.xlu0 %1432, %v435
      %v1434 = vpop.permute.xlu0 %1433
      %v1436 = vlaneseq
      %v1437 = vshrl.u32 %v1436, 7
      %v1438 = vsub.s32 1, %v1437
      %v1439 = vrot.slane %v1378, %v1438
      %v1440 = vlaneseq
      %v1441 = vshrl.u32 %v1440, 7
      %v1442 = vsub.s32 5, %v1441
      %v1443 = vrot.slane %v1378, %v1442
      %v1444 = vlaneseq
      %v1445 = vshrl.u32 %v1444, 7
      %v1446 = vsub.s32 1, %v1445
      %v1447 = vrot.slane %v1379, %v1446
      %v1451 = vlaneseq
      %v1452 = vshrl.u32 %v1451, 7
      %v1453 = vsub.s32 1, %v1452
      %v1454 = vrot.slane %v1439, %v1453
      %v1455 = vlaneseq
      %v1456 = vshrl.u32 %v1455, 7
      %v1457 = vsub.s32 1, %v1456
      %v1458 = vrot.slane %v1443, %v1457
      %v1459 = vlaneseq
      %v1460 = vshrl.u32 %v1459, 7
      %v1461 = vsub.s32 1, %v1460
      %v1462 = vrot.slane %v1447, %v1461
      %v1463 = vmul.f32 %v1434, %v1454
      %v1464 = vmul.f32 %v1434, %v1458
      %v1465 = vmul.f32 %v1434, %v1462
      %1469 = vrot.lane.b32.xlu0 %v1463, 110
      %v1470 = vpop.permute.xlu0 %1469
      %1471 = vrot.lane.b32.xlu0 %v1464, 110
      %v1472 = vpop.permute.xlu0 %1471
      %1473 = vrot.lane.b32.xlu0 %v1465, 110
      %v1474 = vpop.permute.xlu0 %1473
      %v1475 = vsel %vm1425, %v1470, %v1472
      %v1476 = vsel %vm1425, %v1472, %v1474
      %v1479 = vadd.f32 %v1430, %v1475
      %v1480 = vadd.f32 %v1431, %v1476
      %1481 = vset.pattern.permute.xlu0 22
      %1482 = vperm.xlu0 %1481, %v435
      %v1483 = vpop.permute.xlu0 %1482
      %v1485 = vlaneseq
      %v1486 = vshrl.u32 %v1485, 7
      %v1487 = vsub.s32 2, %v1486
      %v1488 = vrot.slane %v1378, %v1487
      %v1489 = vlaneseq
      %v1490 = vshrl.u32 %v1489, 7
      %v1491 = vsub.s32 6, %v1490
      %v1492 = vrot.slane %v1378, %v1491
      %v1493 = vlaneseq
      %v1494 = vshrl.u32 %v1493, 7
      %v1495 = vsub.s32 2, %v1494
      %v1496 = vrot.slane %v1379, %v1495
      %v1500 = vlaneseq
      %v1501 = vshrl.u32 %v1500, 7
      %v1502 = vsub.s32 2, %v1501
      %v1503 = vrot.slane %v1488, %v1502
      %v1504 = vlaneseq
      %v1505 = vshrl.u32 %v1504, 7
      %v1506 = vsub.s32 2, %v1505
      %v1507 = vrot.slane %v1492, %v1506
      %v1508 = vlaneseq
      %v1509 = vshrl.u32 %v1508, 7
      %v1510 = vsub.s32 2, %v1509
      %v1511 = vrot.slane %v1496, %v1510
      %v1512 = vmul.f32 %v1483, %v1503
      %v1513 = vmul.f32 %v1483, %v1507
      %v1514 = vmul.f32 %v1483, %v1511
      %1518 = vrot.lane.b32.xlu0 %v1512, 110
      %v1519 = vpop.permute.xlu0 %1518
      %1520 = vrot.lane.b32.xlu0 %v1513, 110
      %v1521 = vpop.permute.xlu0 %1520
      %1522 = vrot.lane.b32.xlu0 %v1514, 110
      %v1523 = vpop.permute.xlu0 %1522
      %v1524 = vsel %vm1425, %v1519, %v1521
      %v1525 = vsel %vm1425, %v1521, %v1523
      %v1528 = vadd.f32 %v1479, %v1524
      %v1529 = vadd.f32 %v1480, %v1525
      %1530 = vset.pattern.permute.xlu0 23
      %1531 = vperm.xlu0 %1530, %v435
      %v1532 = vpop.permute.xlu0 %1531
      %v1534 = vlaneseq
      %v1535 = vshrl.u32 %v1534, 7
      %v1536 = vsub.s32 3, %v1535
      %v1537 = vrot.slane %v1378, %v1536
      %v1538 = vlaneseq
      %v1539 = vshrl.u32 %v1538, 7
      %v1540 = vsub.s32 7, %v1539
      %v1541 = vrot.slane %v1378, %v1540
      %v1542 = vlaneseq
      %v1543 = vshrl.u32 %v1542, 7
      %v1544 = vsub.s32 3, %v1543
      %v1545 = vrot.slane %v1379, %v1544
      %v1549 = vlaneseq
      %v1550 = vshrl.u32 %v1549, 7
      %v1551 = vsub.s32 3, %v1550
      %v1552 = vrot.slane %v1537, %v1551
      %v1553 = vlaneseq
      %v1554 = vshrl.u32 %v1553, 7
      %v1555 = vsub.s32 3, %v1554
      %v1556 = vrot.slane %v1541, %v1555
      %v1557 = vlaneseq
      %v1558 = vshrl.u32 %v1557, 7
      %v1559 = vsub.s32 3, %v1558
      %v1560 = vrot.slane %v1545, %v1559
      %v1561 = vmul.f32 %v1532, %v1552
      %v1562 = vmul.f32 %v1532, %v1556
      %v1563 = vmul.f32 %v1532, %v1560
      %1567 = vrot.lane.b32.xlu0 %v1561, 110
      %v1568 = vpop.permute.xlu0 %1567
      %1569 = vrot.lane.b32.xlu0 %v1562, 110
      %v1570 = vpop.permute.xlu0 %1569
      %1571 = vrot.lane.b32.xlu0 %v1563, 110
      %v1572 = vpop.permute.xlu0 %1571
      %v1573 = vsel %vm1425, %v1568, %v1570
      %v1574 = vsel %vm1425, %v1570, %v1572
      %v1577 = vadd.f32 %v1528, %v1573
      %v1578 = vadd.f32 %v1529, %v1574
      %v1579 = vld [vmem:[%s360] sm:$0xff]
      %v1580 = vld [vmem:[%s360 + $0x8] sm:$0xf]
      %1581 = vrot.lane.b32.xlu0 %v439, 32
      %v1582 = vpop.permute.xlu0 %1581
      %v1583 = vrot.slane %v1582, 4
      %vm1584 = vcmask 261120
      %v1585 = vsel %vm1584, %v1583, %v1582
      %v1588 = vmul.f32 %v1579, %v1585
      %v1589 = vmul.f32 %v1580, %v1583
      %1590 = vset.pattern.permute.xlu0 24
      %1591 = vperm.xlu0 %1590, %v435
      %v1592 = vpop.permute.xlu0 %1591
      %v1596 = vlaneseq
      %v1597 = vshrl.u32 %v1596, 7
      %v1598 = vsub.s32 0, %v1597
      %v1599 = vrot.slane %v1588, %v1598
      %v1600 = vlaneseq
      %v1601 = vshrl.u32 %v1600, 7
      %v1602 = vsub.s32 4, %v1601
      %v1603 = vrot.slane %v1588, %v1602
      %v1604 = vlaneseq
      %v1605 = vshrl.u32 %v1604, 7
      %v1606 = vsub.s32 0, %v1605
      %v1607 = vrot.slane %v1589, %v1606
      %v1611 = vlaneseq
      %v1612 = vshrl.u32 %v1611, 7
      %v1613 = vsub.s32 0, %v1612
      %v1614 = vrot.slane %v1599, %v1613
      %v1615 = vlaneseq
      %v1616 = vshrl.u32 %v1615, 7
      %v1617 = vsub.s32 0, %v1616
      %v1618 = vrot.slane %v1603, %v1617
      %v1619 = vlaneseq
      %v1620 = vshrl.u32 %v1619, 7
      %v1621 = vsub.s32 0, %v1620
      %v1622 = vrot.slane %v1607, %v1621
      %v1623 = vmul.f32 %v1592, %v1614
      %v1624 = vmul.f32 %v1592, %v1618
      %v1625 = vmul.f32 %v1592, %v1622
      %1629 = vrot.lane.b32.xlu0 %v1623, 96
      %v1630 = vpop.permute.xlu0 %1629
      %1631 = vrot.lane.b32.xlu0 %v1624, 96
      %v1632 = vpop.permute.xlu0 %1631
      %1633 = vrot.lane.b32.xlu0 %v1625, 96
      %v1634 = vpop.permute.xlu0 %1633
      %vm1635 = vcmask 785408
      %v1636 = vsel %vm1635, %v1630, %v1632
      %v1637 = vsel %vm1635, %v1632, %v1634
      %v1640 = vadd.f32 %v1577, %v1636
      %v1641 = vadd.f32 %v1578, %v1637
      %1642 = vset.pattern.permute.xlu0 25
      %1643 = vperm.xlu0 %1642, %v435
      %v1644 = vpop.permute.xlu0 %1643
      %v1646 = vlaneseq
      %v1647 = vshrl.u32 %v1646, 7
      %v1648 = vsub.s32 1, %v1647
      %v1649 = vrot.slane %v1588, %v1648
      %v1650 = vlaneseq
      %v1651 = vshrl.u32 %v1650, 7
      %v1652 = vsub.s32 5, %v1651
      %v1653 = vrot.slane %v1588, %v1652
      %v1654 = vlaneseq
      %v1655 = vshrl.u32 %v1654, 7
      %v1656 = vsub.s32 1, %v1655
      %v1657 = vrot.slane %v1589, %v1656
      %v1661 = vlaneseq
      %v1662 = vshrl.u32 %v1661, 7
      %v1663 = vsub.s32 1, %v1662
      %v1664 = vrot.slane %v1649, %v1663
      %v1665 = vlaneseq
      %v1666 = vshrl.u32 %v1665, 7
      %v1667 = vsub.s32 1, %v1666
      %v1668 = vrot.slane %v1653, %v1667
      %v1669 = vlaneseq
      %v1670 = vshrl.u32 %v1669, 7
      %v1671 = vsub.s32 1, %v1670
      %v1672 = vrot.slane %v1657, %v1671
      %v1673 = vmul.f32 %v1644, %v1664
      %v1674 = vmul.f32 %v1644, %v1668
      %v1675 = vmul.f32 %v1644, %v1672
      %1679 = vrot.lane.b32.xlu0 %v1673, 96
      %v1680 = vpop.permute.xlu0 %1679
      %1681 = vrot.lane.b32.xlu0 %v1674, 96
      %v1682 = vpop.permute.xlu0 %1681
      %1683 = vrot.lane.b32.xlu0 %v1675, 96
      %v1684 = vpop.permute.xlu0 %1683
      %v1685 = vsel %vm1635, %v1680, %v1682
      %v1686 = vsel %vm1635, %v1682, %v1684
      %v1689 = vadd.f32 %v1640, %v1685
      %v1690 = vadd.f32 %v1641, %v1686
      %1691 = vset.pattern.permute.xlu0 26
      %1692 = vperm.xlu0 %1691, %v435
      %v1693 = vpop.permute.xlu0 %1692
      %v1695 = vlaneseq
      %v1696 = vshrl.u32 %v1695, 7
      %v1697 = vsub.s32 2, %v1696
      %v1698 = vrot.slane %v1588, %v1697
      %v1699 = vlaneseq
      %v1700 = vshrl.u32 %v1699, 7
      %v1701 = vsub.s32 6, %v1700
      %v1702 = vrot.slane %v1588, %v1701
      %v1703 = vlaneseq
      %v1704 = vshrl.u32 %v1703, 7
      %v1705 = vsub.s32 2, %v1704
      %v1706 = vrot.slane %v1589, %v1705
      %v1710 = vlaneseq
      %v1711 = vshrl.u32 %v1710, 7
      %v1712 = vsub.s32 2, %v1711
      %v1713 = vrot.slane %v1698, %v1712
      %v1714 = vlaneseq
      %v1715 = vshrl.u32 %v1714, 7
      %v1716 = vsub.s32 2, %v1715
      %v1717 = vrot.slane %v1702, %v1716
      %v1718 = vlaneseq
      %v1719 = vshrl.u32 %v1718, 7
      %v1720 = vsub.s32 2, %v1719
      %v1721 = vrot.slane %v1706, %v1720
      %v1722 = vmul.f32 %v1693, %v1713
      %v1723 = vmul.f32 %v1693, %v1717
      %v1724 = vmul.f32 %v1693, %v1721
      %1728 = vrot.lane.b32.xlu0 %v1722, 96
      %v1729 = vpop.permute.xlu0 %1728
      %1730 = vrot.lane.b32.xlu0 %v1723, 96
      %v1731 = vpop.permute.xlu0 %1730
      %1732 = vrot.lane.b32.xlu0 %v1724, 96
      %v1733 = vpop.permute.xlu0 %1732
      %v1734 = vsel %vm1635, %v1729, %v1731
      %v1735 = vsel %vm1635, %v1731, %v1733
      %v1738 = vadd.f32 %v1689, %v1734
      %v1739 = vadd.f32 %v1690, %v1735
      %1740 = vset.pattern.permute.xlu0 27
      %1741 = vperm.xlu0 %1740, %v435
      %v1742 = vpop.permute.xlu0 %1741
      %v1744 = vlaneseq
      %v1745 = vshrl.u32 %v1744, 7
      %v1746 = vsub.s32 3, %v1745
      %v1747 = vrot.slane %v1588, %v1746
      %v1748 = vlaneseq
      %v1749 = vshrl.u32 %v1748, 7
      %v1750 = vsub.s32 7, %v1749
      %v1751 = vrot.slane %v1588, %v1750
      %v1752 = vlaneseq
      %v1753 = vshrl.u32 %v1752, 7
      %v1754 = vsub.s32 3, %v1753
      %v1755 = vrot.slane %v1589, %v1754
      %v1759 = vlaneseq
      %v1760 = vshrl.u32 %v1759, 7
      %v1761 = vsub.s32 3, %v1760
      %v1762 = vrot.slane %v1747, %v1761
      %v1763 = vlaneseq
      %v1764 = vshrl.u32 %v1763, 7
      %v1765 = vsub.s32 3, %v1764
      %v1766 = vrot.slane %v1751, %v1765
      %v1767 = vlaneseq
      %v1768 = vshrl.u32 %v1767, 7
      %v1769 = vsub.s32 3, %v1768
      %v1770 = vrot.slane %v1755, %v1769
      %v1771 = vmul.f32 %v1742, %v1762
      %v1772 = vmul.f32 %v1742, %v1766
      %v1773 = vmul.f32 %v1742, %v1770
      %1777 = vrot.lane.b32.xlu0 %v1771, 96
      %v1778 = vpop.permute.xlu0 %1777
      %1779 = vrot.lane.b32.xlu0 %v1772, 96
      %v1780 = vpop.permute.xlu0 %1779
      %1781 = vrot.lane.b32.xlu0 %v1773, 96
      %v1782 = vpop.permute.xlu0 %1781
      %v1783 = vsel %vm1635, %v1778, %v1780
      %v1784 = vsel %vm1635, %v1780, %v1782
      %v1787 = vadd.f32 %v1738, %v1783
      %v1788 = vadd.f32 %v1739, %v1784
      %v1789 = vld [vmem:[%s360] sm:$0xff]
      %v1790 = vld [vmem:[%s360 + $0x8] sm:$0xf]
      %1791 = vset.pattern.permute.xlu0 28
      %1792 = vperm.xlu0 %1791, %v435
      %v1793 = vpop.permute.xlu0 %1792
      %v1797 = vlaneseq
      %v1798 = vshrl.u32 %v1797, 7
      %v1799 = vsub.s32 0, %v1798
      %v1800 = vrot.slane %v1789, %v1799
      %v1801 = vlaneseq
      %v1802 = vshrl.u32 %v1801, 7
      %v1803 = vsub.s32 4, %v1802
      %v1804 = vrot.slane %v1789, %v1803
      %v1805 = vlaneseq
      %v1806 = vshrl.u32 %v1805, 7
      %v1807 = vsub.s32 0, %v1806
      %v1808 = vrot.slane %v1790, %v1807
      %v1812 = vlaneseq
      %v1813 = vshrl.u32 %v1812, 7
      %v1814 = vsub.s32 0, %v1813
      %v1815 = vrot.slane %v1800, %v1814
      %v1816 = vlaneseq
      %v1817 = vshrl.u32 %v1816, 7
      %v1818 = vsub.s32 0, %v1817
      %v1819 = vrot.slane %v1804, %v1818
      %v1820 = vlaneseq
      %v1821 = vshrl.u32 %v1820, 7
      %v1822 = vsub.s32 0, %v1821
      %v1823 = vrot.slane %v1808, %v1822
      %v1824 = vmul.f32 %v1793, %v1815
      %v1825 = vmul.f32 %v1793, %v1819
      %v1826 = vmul.f32 %v1793, %v1823
      %1830 = vrot.lane.b32.xlu0 %v1824, 95
      %v1831 = vpop.permute.xlu0 %1830
      %1832 = vrot.lane.b32.xlu0 %v1825, 95
      %v1833 = vpop.permute.xlu0 %1832
      %1834 = vrot.lane.b32.xlu0 %v1826, 95
      %v1835 = vpop.permute.xlu0 %1834
      %vm1836 = vcmask 777216
      %v1837 = vsel %vm1836, %v1831, %v1833
      %v1838 = vsel %vm1836, %v1833, %v1835
      %v1841 = vadd.f32 %v1787, %v1837
      %v1842 = vadd.f32 %v1788, %v1838
      %1843 = vset.pattern.permute.xlu0 29
      %1844 = vperm.xlu0 %1843, %v435
      %v1845 = vpop.permute.xlu0 %1844
      %v1847 = vlaneseq
      %v1848 = vshrl.u32 %v1847, 7
      %v1849 = vsub.s32 1, %v1848
      %v1850 = vrot.slane %v1789, %v1849
      %v1851 = vlaneseq
      %v1852 = vshrl.u32 %v1851, 7
      %v1853 = vsub.s32 5, %v1852
      %v1854 = vrot.slane %v1789, %v1853
      %v1855 = vlaneseq
      %v1856 = vshrl.u32 %v1855, 7
      %v1857 = vsub.s32 1, %v1856
      %v1858 = vrot.slane %v1790, %v1857
      %v1862 = vlaneseq
      %v1863 = vshrl.u32 %v1862, 7
      %v1864 = vsub.s32 1, %v1863
      %v1865 = vrot.slane %v1850, %v1864
      %v1866 = vlaneseq
      %v1867 = vshrl.u32 %v1866, 7
      %v1868 = vsub.s32 1, %v1867
      %v1869 = vrot.slane %v1854, %v1868
      %v1870 = vlaneseq
      %v1871 = vshrl.u32 %v1870, 7
      %v1872 = vsub.s32 1, %v1871
      %v1873 = vrot.slane %v1858, %v1872
      %v1874 = vmul.f32 %v1845, %v1865
      %v1875 = vmul.f32 %v1845, %v1869
      %v1876 = vmul.f32 %v1845, %v1873
      %1880 = vrot.lane.b32.xlu0 %v1874, 95
      %v1881 = vpop.permute.xlu0 %1880
      %1882 = vrot.lane.b32.xlu0 %v1875, 95
      %v1883 = vpop.permute.xlu0 %1882
      %1884 = vrot.lane.b32.xlu0 %v1876, 95
      %v1885 = vpop.permute.xlu0 %1884
      %v1886 = vsel %vm1836, %v1881, %v1883
      %v1887 = vsel %vm1836, %v1883, %v1885
      %v1890 = vadd.f32 %v1841, %v1886
      %v1891 = vadd.f32 %v1842, %v1887
      %1892 = vset.pattern.permute.xlu0 30
      %1893 = vperm.xlu0 %1892, %v435
      %v1894 = vpop.permute.xlu0 %1893
      %v1896 = vlaneseq
      %v1897 = vshrl.u32 %v1896, 7
      %v1898 = vsub.s32 2, %v1897
      %v1899 = vrot.slane %v1789, %v1898
      %v1900 = vlaneseq
      %v1901 = vshrl.u32 %v1900, 7
      %v1902 = vsub.s32 6, %v1901
      %v1903 = vrot.slane %v1789, %v1902
      %v1904 = vlaneseq
      %v1905 = vshrl.u32 %v1904, 7
      %v1906 = vsub.s32 2, %v1905
      %v1907 = vrot.slane %v1790, %v1906
      %v1911 = vlaneseq
      %v1912 = vshrl.u32 %v1911, 7
      %v1913 = vsub.s32 2, %v1912
      %v1914 = vrot.slane %v1899, %v1913
      %v1915 = vlaneseq
      %v1916 = vshrl.u32 %v1915, 7
      %v1917 = vsub.s32 2, %v1916
      %v1918 = vrot.slane %v1903, %v1917
      %v1919 = vlaneseq
      %v1920 = vshrl.u32 %v1919, 7
      %v1921 = vsub.s32 2, %v1920
      %v1922 = vrot.slane %v1907, %v1921
      %v1923 = vmul.f32 %v1894, %v1914
      %v1924 = vmul.f32 %v1894, %v1918
      %v1925 = vmul.f32 %v1894, %v1922
      %1929 = vrot.lane.b32.xlu0 %v1923, 95
      %v1930 = vpop.permute.xlu0 %1929
      %1931 = vrot.lane.b32.xlu0 %v1924, 95
      %v1932 = vpop.permute.xlu0 %1931
      %1933 = vrot.lane.b32.xlu0 %v1925, 95
      %v1934 = vpop.permute.xlu0 %1933
      %v1935 = vsel %vm1836, %v1930, %v1932
      %v1936 = vsel %vm1836, %v1932, %v1934
      %v1939 = vadd.f32 %v1890, %v1935
      %v1940 = vadd.f32 %v1891, %v1936
      %1941 = vset.pattern.permute.xlu0 31
      %1942 = vperm.xlu0 %1941, %v435
      %v1943 = vpop.permute.xlu0 %1942
      %v1945 = vlaneseq
      %v1946 = vshrl.u32 %v1945, 7
      %v1947 = vsub.s32 3, %v1946
      %v1948 = vrot.slane %v1789, %v1947
      %v1949 = vlaneseq
      %v1950 = vshrl.u32 %v1949, 7
      %v1951 = vsub.s32 7, %v1950
      %v1952 = vrot.slane %v1789, %v1951
      %v1953 = vlaneseq
      %v1954 = vshrl.u32 %v1953, 7
      %v1955 = vsub.s32 3, %v1954
      %v1956 = vrot.slane %v1790, %v1955
      %v1960 = vlaneseq
      %v1961 = vshrl.u32 %v1960, 7
      %v1962 = vsub.s32 3, %v1961
      %v1963 = vrot.slane %v1948, %v1962
      %v1964 = vlaneseq
      %v1965 = vshrl.u32 %v1964, 7
      %v1966 = vsub.s32 3, %v1965
      %v1967 = vrot.slane %v1952, %v1966
      %v1968 = vlaneseq
      %v1969 = vshrl.u32 %v1968, 7
      %v1970 = vsub.s32 3, %v1969
      %v1971 = vrot.slane %v1956, %v1970
      %v1972 = vmul.f32 %v1943, %v1963
      %v1973 = vmul.f32 %v1943, %v1967
      %v1974 = vmul.f32 %v1943, %v1971
      %1978 = vrot.lane.b32.xlu0 %v1972, 95
      %v1979 = vpop.permute.xlu0 %1978
      %1980 = vrot.lane.b32.xlu0 %v1973, 95
      %v1981 = vpop.permute.xlu0 %1980
      %1982 = vrot.lane.b32.xlu0 %v1974, 95
      %v1983 = vpop.permute.xlu0 %1982
      %v1984 = vsel %vm1836, %v1979, %v1981
      %v1985 = vsel %vm1836, %v1981, %v1983
      %v1988 = vadd.f32 %v1939, %v1984
      %v1989 = vadd.f32 %v1940, %v1985
      %1990 = vrot.lane.b32.xlu0 %v751, 34
      %v1991 = vpop.permute.xlu0 %1990
      %v1992 = vrot.slane %v1991, 4
      %vm1993 = vcmask 277504
      %v1994 = vsel %vm1993, %v1992, %v1991
      %v1997 = vmul.f32 %v1789, %v1994
      %v1998 = vmul.f32 %v1790, %v1992
      %1999 = vset.pattern.permute.xlu0 32
      %2000 = vperm.xlu0 %1999, %v435
      %v2001 = vpop.permute.xlu0 %2000
      %v2005 = vlaneseq
      %v2006 = vshrl.u32 %v2005, 7
      %v2007 = vsub.s32 0, %v2006
      %v2008 = vrot.slane %v1997, %v2007
      %v2009 = vlaneseq
      %v2010 = vshrl.u32 %v2009, 7
      %v2011 = vsub.s32 4, %v2010
      %v2012 = vrot.slane %v1997, %v2011
      %v2013 = vlaneseq
      %v2014 = vshrl.u32 %v2013, 7
      %v2015 = vsub.s32 0, %v2014
      %v2016 = vrot.slane %v1998, %v2015
      %v2020 = vlaneseq
      %v2021 = vshrl.u32 %v2020, 7
      %v2022 = vsub.s32 0, %v2021
      %v2023 = vrot.slane %v2008, %v2022
      %v2024 = vlaneseq
      %v2025 = vshrl.u32 %v2024, 7
      %v2026 = vsub.s32 0, %v2025
      %v2027 = vrot.slane %v2012, %v2026
      %v2028 = vlaneseq
      %v2029 = vshrl.u32 %v2028, 7
      %v2030 = vsub.s32 0, %v2029
      %v2031 = vrot.slane %v2016, %v2030
      %v2032 = vmul.f32 %v2001, %v2023
      %v2033 = vmul.f32 %v2001, %v2027
      %v2034 = vmul.f32 %v2001, %v2031
      %2038 = vrot.lane.b32.xlu0 %v2032, 94
      %v2039 = vpop.permute.xlu0 %2038
      %2040 = vrot.lane.b32.xlu0 %v2033, 94
      %v2041 = vpop.permute.xlu0 %2040
      %2042 = vrot.lane.b32.xlu0 %v2034, 94
      %v2043 = vpop.permute.xlu0 %2042
      %vm2044 = vcmask 769024
      %v2045 = vsel %vm2044, %v2039, %v2041
      %v2046 = vsel %vm2044, %v2041, %v2043
      %v2049 = vadd.f32 %v1988, %v2045
      %v2050 = vadd.f32 %v1989, %v2046
      %2051 = vset.pattern.permute.xlu0 33
      %2052 = vperm.xlu0 %2051, %v435
      %v2053 = vpop.permute.xlu0 %2052
      %v2055 = vlaneseq
      %v2056 = vshrl.u32 %v2055, 7
      %v2057 = vsub.s32 1, %v2056
      %v2058 = vrot.slane %v1997, %v2057
      %v2059 = vlaneseq
      %v2060 = vshrl.u32 %v2059, 7
      %v2061 = vsub.s32 5, %v2060
      %v2062 = vrot.slane %v1997, %v2061
      %v2063 = vlaneseq
      %v2064 = vshrl.u32 %v2063, 7
      %v2065 = vsub.s32 1, %v2064
      %v2066 = vrot.slane %v1998, %v2065
      %v2070 = vlaneseq
      %v2071 = vshrl.u32 %v2070, 7
      %v2072 = vsub.s32 1, %v2071
      %v2073 = vrot.slane %v2058, %v2072
      %v2074 = vlaneseq
      %v2075 = vshrl.u32 %v2074, 7
      %v2076 = vsub.s32 1, %v2075
      %v2077 = vrot.slane %v2062, %v2076
      %v2078 = vlaneseq
      %v2079 = vshrl.u32 %v2078, 7
      %v2080 = vsub.s32 1, %v2079
      %v2081 = vrot.slane %v2066, %v2080
      %v2082 = vmul.f32 %v2053, %v2073
      %v2083 = vmul.f32 %v2053, %v2077
      %v2084 = vmul.f32 %v2053, %v2081
      %2088 = vrot.lane.b32.xlu0 %v2082, 94
      %v2089 = vpop.permute.xlu0 %2088
      %2090 = vrot.lane.b32.xlu0 %v2083, 94
      %v2091 = vpop.permute.xlu0 %2090
      %2092 = vrot.lane.b32.xlu0 %v2084, 94
      %v2093 = vpop.permute.xlu0 %2092
      %v2094 = vsel %vm2044, %v2089, %v2091
      %v2095 = vsel %vm2044, %v2091, %v2093
      %v2098 = vadd.f32 %v2049, %v2094
      %v2099 = vadd.f32 %v2050, %v2095
      %2100 = vset.pattern.permute.xlu0 34
      %2101 = vperm.xlu0 %2100, %v435
      %v2102 = vpop.permute.xlu0 %2101
      %v2104 = vlaneseq
      %v2105 = vshrl.u32 %v2104, 7
      %v2106 = vsub.s32 2, %v2105
      %v2107 = vrot.slane %v1997, %v2106
      %v2108 = vlaneseq
      %v2109 = vshrl.u32 %v2108, 7
      %v2110 = vsub.s32 6, %v2109
      %v2111 = vrot.slane %v1997, %v2110
      %v2112 = vlaneseq
      %v2113 = vshrl.u32 %v2112, 7
      %v2114 = vsub.s32 2, %v2113
      %v2115 = vrot.slane %v1998, %v2114
      %v2119 = vlaneseq
      %v2120 = vshrl.u32 %v2119, 7
      %v2121 = vsub.s32 2, %v2120
      %v2122 = vrot.slane %v2107, %v2121
      %v2123 = vlaneseq
      %v2124 = vshrl.u32 %v2123, 7
      %v2125 = vsub.s32 2, %v2124
      %v2126 = vrot.slane %v2111, %v2125
      %v2127 = vlaneseq
      %v2128 = vshrl.u32 %v2127, 7
      %v2129 = vsub.s32 2, %v2128
      %v2130 = vrot.slane %v2115, %v2129
      %v2131 = vmul.f32 %v2102, %v2122
      %v2132 = vmul.f32 %v2102, %v2126
      %v2133 = vmul.f32 %v2102, %v2130
      %2137 = vrot.lane.b32.xlu0 %v2131, 94
      %v2138 = vpop.permute.xlu0 %2137
      %2139 = vrot.lane.b32.xlu0 %v2132, 94
      %v2140 = vpop.permute.xlu0 %2139
      %2141 = vrot.lane.b32.xlu0 %v2133, 94
      %v2142 = vpop.permute.xlu0 %2141
      %v2143 = vsel %vm2044, %v2138, %v2140
      %v2144 = vsel %vm2044, %v2140, %v2142
      %v2147 = vadd.f32 %v2098, %v2143
      %v2148 = vadd.f32 %v2099, %v2144
      %2149 = vset.pattern.permute.xlu0 35
      %2150 = vperm.xlu0 %2149, %v435
      %v2151 = vpop.permute.xlu0 %2150
      %v2153 = vlaneseq
      %v2154 = vshrl.u32 %v2153, 7
      %v2155 = vsub.s32 3, %v2154
      %v2156 = vrot.slane %v1997, %v2155
      %v2157 = vlaneseq
      %v2158 = vshrl.u32 %v2157, 7
      %v2159 = vsub.s32 7, %v2158
      %v2160 = vrot.slane %v1997, %v2159
      %v2161 = vlaneseq
      %v2162 = vshrl.u32 %v2161, 7
      %v2163 = vsub.s32 3, %v2162
      %v2164 = vrot.slane %v1998, %v2163
      %v2168 = vlaneseq
      %v2169 = vshrl.u32 %v2168, 7
      %v2170 = vsub.s32 3, %v2169
      %v2171 = vrot.slane %v2156, %v2170
      %v2172 = vlaneseq
      %v2173 = vshrl.u32 %v2172, 7
      %v2174 = vsub.s32 3, %v2173
      %v2175 = vrot.slane %v2160, %v2174
      %v2176 = vlaneseq
      %v2177 = vshrl.u32 %v2176, 7
      %v2178 = vsub.s32 3, %v2177
      %v2179 = vrot.slane %v2164, %v2178
      %v2180 = vmul.f32 %v2151, %v2171
      %v2181 = vmul.f32 %v2151, %v2175
      %v2182 = vmul.f32 %v2151, %v2179
      %2186 = vrot.lane.b32.xlu0 %v2180, 94
      %v2187 = vpop.permute.xlu0 %2186
      %2188 = vrot.lane.b32.xlu0 %v2181, 94
      %v2189 = vpop.permute.xlu0 %2188
      %2190 = vrot.lane.b32.xlu0 %v2182, 94
      %v2191 = vpop.permute.xlu0 %2190
      %v2192 = vsel %vm2044, %v2187, %v2189
      %v2193 = vsel %vm2044, %v2189, %v2191
      %v2196 = vadd.f32 %v2147, %v2192
      %v2197 = vadd.f32 %v2148, %v2193
      %v2198 = vld [vmem:[%s6] sm:$0xf]
      %v2199 = vld [vmem:[%s364] sm:$0xf]
      %v2200 = vmul.f32 %v2199, %v431
      %2202 = vset.pattern.permute.xlu0 0
      %2203 = vperm.xlu0 %2202, %v2198
      %v2204 = vpop.permute.xlu0 %2203
      %v2206 = vlaneseq
      %v2207 = vshrl.u32 %v2206, 7
      %v2208 = vsub.s32 0, %v2207
      %v2209 = vrot.slane %v2200, %v2208
      %v2210 = vmul.f32 %v2204, %v2209
      %v2211 = vadd.f32 %v2210, 0.0
      %2212 = vset.pattern.permute.xlu0 1
      %2213 = vperm.xlu0 %2212, %v2198
      %v2214 = vpop.permute.xlu0 %2213
      %v2216 = vlaneseq
      %v2217 = vshrl.u32 %v2216, 7
      %v2218 = vsub.s32 1, %v2217
      %v2219 = vrot.slane %v2200, %v2218
      %v2220 = vmul.f32 %v2214, %v2219
      %v2221 = vadd.f32 %v2211, %v2220
      %2222 = vset.pattern.permute.xlu0 2
      %2223 = vperm.xlu0 %2222, %v2198
      %v2224 = vpop.permute.xlu0 %2223
      %v2226 = vlaneseq
      %v2227 = vshrl.u32 %v2226, 7
      %v2228 = vsub.s32 2, %v2227
      %v2229 = vrot.slane %v2200, %v2228
      %v2230 = vmul.f32 %v2224, %v2229
      %v2231 = vadd.f32 %v2221, %v2230
      %2232 = vset.pattern.permute.xlu0 3
      %2233 = vperm.xlu0 %2232, %v2198
      %v2234 = vpop.permute.xlu0 %2233
      %v2236 = vlaneseq
      %v2237 = vshrl.u32 %v2236, 7
      %v2238 = vsub.s32 3, %v2237
      %v2239 = vrot.slane %v2200, %v2238
      %v2240 = vmul.f32 %v2234, %v2239
      %v2241 = vadd.f32 %v2231, %v2240
      %2242 = vset.pattern.permute.xlu0 4
      %2243 = vperm.xlu0 %2242, %v2198
      %v2244 = vpop.permute.xlu0 %2243
      %v2246 = vlaneseq
      %v2247 = vshrl.u32 %v2246, 7
      %v2248 = vsub.s32 0, %v2247
      %v2249 = vrot.slane %v2199, %v2248
      %v2250 = vmul.f32 %v2244, %v2249
      %2252 = vrot.lane.b32.xlu0 %v2250, 127
      %v2253 = vpop.permute.xlu0 %2252
      %v2255 = vadd.f32 %v2241, %v2253
      %2256 = vset.pattern.permute.xlu0 5
      %2257 = vperm.xlu0 %2256, %v2198
      %v2258 = vpop.permute.xlu0 %2257
      %v2260 = vlaneseq
      %v2261 = vshrl.u32 %v2260, 7
      %v2262 = vsub.s32 1, %v2261
      %v2263 = vrot.slane %v2199, %v2262
      %v2264 = vmul.f32 %v2258, %v2263
      %2266 = vrot.lane.b32.xlu0 %v2264, 127
      %v2267 = vpop.permute.xlu0 %2266
      %v2269 = vadd.f32 %v2255, %v2267
      %2270 = vset.pattern.permute.xlu0 6
      %2271 = vperm.xlu0 %2270, %v2198
      %v2272 = vpop.permute.xlu0 %2271
      %v2274 = vlaneseq
      %v2275 = vshrl.u32 %v2274, 7
      %v2276 = vsub.s32 2, %v2275
      %v2277 = vrot.slane %v2199, %v2276
      %v2278 = vmul.f32 %v2272, %v2277
      %2280 = vrot.lane.b32.xlu0 %v2278, 127
      %v2281 = vpop.permute.xlu0 %2280
      %v2283 = vadd.f32 %v2269, %v2281
      %2284 = vset.pattern.permute.xlu0 7
      %2285 = vperm.xlu0 %2284, %v2198
      %v2286 = vpop.permute.xlu0 %2285
      %v2288 = vlaneseq
      %v2289 = vshrl.u32 %v2288, 7
      %v2290 = vsub.s32 3, %v2289
      %v2291 = vrot.slane %v2199, %v2290
      %v2292 = vmul.f32 %v2286, %v2291
      %2294 = vrot.lane.b32.xlu0 %v2292, 127
      %v2295 = vpop.permute.xlu0 %2294
      %v2297 = vadd.f32 %v2283, %v2295
      %2299 = vrot.lane.b32.xlu0 %v434, 2
      %v2300 = vpop.permute.xlu0 %2299
      %v2302 = vmul.f32 %v2199, %v2300
      %2303 = vset.pattern.permute.xlu0 8
      %2304 = vperm.xlu0 %2303, %v2198
      %v2305 = vpop.permute.xlu0 %2304
      %v2307 = vlaneseq
      %v2308 = vshrl.u32 %v2307, 7
      %v2309 = vsub.s32 0, %v2308
      %v2310 = vrot.slane %v2302, %v2309
      %v2311 = vmul.f32 %v2305, %v2310
      %2313 = vrot.lane.b32.xlu0 %v2311, 126
      %v2314 = vpop.permute.xlu0 %2313
      %v2316 = vadd.f32 %v2297, %v2314
      %2317 = vset.pattern.permute.xlu0 9
      %2318 = vperm.xlu0 %2317, %v2198
      %v2319 = vpop.permute.xlu0 %2318
      %v2321 = vlaneseq
      %v2322 = vshrl.u32 %v2321, 7
      %v2323 = vsub.s32 1, %v2322
      %v2324 = vrot.slane %v2302, %v2323
      %v2325 = vmul.f32 %v2319, %v2324
      %2327 = vrot.lane.b32.xlu0 %v2325, 126
      %v2328 = vpop.permute.xlu0 %2327
      %v2330 = vadd.f32 %v2316, %v2328
      %2331 = vset.pattern.permute.xlu0 10
      %2332 = vperm.xlu0 %2331, %v2198
      %v2333 = vpop.permute.xlu0 %2332
      %v2335 = vlaneseq
      %v2336 = vshrl.u32 %v2335, 7
      %v2337 = vsub.s32 2, %v2336
      %v2338 = vrot.slane %v2302, %v2337
      %v2339 = vmul.f32 %v2333, %v2338
      %2341 = vrot.lane.b32.xlu0 %v2339, 126
      %v2342 = vpop.permute.xlu0 %2341
      %v2344 = vadd.f32 %v2330, %v2342
      %2345 = vset.pattern.permute.xlu0 11
      %2346 = vperm.xlu0 %2345, %v2198
      %v2347 = vpop.permute.xlu0 %2346
      %v2349 = vlaneseq
      %v2350 = vshrl.u32 %v2349, 7
      %v2351 = vsub.s32 3, %v2350
      %v2352 = vrot.slane %v2302, %v2351
      %v2353 = vmul.f32 %v2347, %v2352
      %2355 = vrot.lane.b32.xlu0 %v2353, 126
      %v2356 = vpop.permute.xlu0 %2355
      %v2358 = vadd.f32 %v2344, %v2356
      %2360 = vrot.lane.b32.xlu0 %v431, 8
      %v2361 = vpop.permute.xlu0 %2360
      %v2363 = vmul.f32 %v2199, %v2361
      %2364 = vset.pattern.permute.xlu0 12
      %2365 = vperm.xlu0 %2364, %v2198
      %v2366 = vpop.permute.xlu0 %2365
      %v2368 = vlaneseq
      %v2369 = vshrl.u32 %v2368, 7
      %v2370 = vsub.s32 0, %v2369
      %v2371 = vrot.slane %v2363, %v2370
      %v2372 = vmul.f32 %v2366, %v2371
      %2374 = vrot.lane.b32.xlu0 %v2372, 120
      %v2375 = vpop.permute.xlu0 %2374
      %v2377 = vadd.f32 %v2358, %v2375
      %2378 = vset.pattern.permute.xlu0 13
      %2379 = vperm.xlu0 %2378, %v2198
      %v2380 = vpop.permute.xlu0 %2379
      %v2382 = vlaneseq
      %v2383 = vshrl.u32 %v2382, 7
      %v2384 = vsub.s32 1, %v2383
      %v2385 = vrot.slane %v2363, %v2384
      %v2386 = vmul.f32 %v2380, %v2385
      %2388 = vrot.lane.b32.xlu0 %v2386, 120
      %v2389 = vpop.permute.xlu0 %2388
      %v2391 = vadd.f32 %v2377, %v2389
      %2392 = vset.pattern.permute.xlu0 14
      %2393 = vperm.xlu0 %2392, %v2198
      %v2394 = vpop.permute.xlu0 %2393
      %v2396 = vlaneseq
      %v2397 = vshrl.u32 %v2396, 7
      %v2398 = vsub.s32 2, %v2397
      %v2399 = vrot.slane %v2363, %v2398
      %v2400 = vmul.f32 %v2394, %v2399
      %2402 = vrot.lane.b32.xlu0 %v2400, 120
      %v2403 = vpop.permute.xlu0 %2402
      %v2405 = vadd.f32 %v2391, %v2403
      %2406 = vset.pattern.permute.xlu0 15
      %2407 = vperm.xlu0 %2406, %v2198
      %v2408 = vpop.permute.xlu0 %2407
      %v2410 = vlaneseq
      %v2411 = vshrl.u32 %v2410, 7
      %v2412 = vsub.s32 3, %v2411
      %v2413 = vrot.slane %v2363, %v2412
      %v2414 = vmul.f32 %v2408, %v2413
      %2416 = vrot.lane.b32.xlu0 %v2414, 120
      %v2417 = vpop.permute.xlu0 %2416
      %v2419 = vadd.f32 %v2405, %v2417
      %2420 = vset.pattern.permute.xlu0 16
      %2421 = vperm.xlu0 %2420, %v2198
      %v2422 = vpop.permute.xlu0 %2421
      %v2424 = vmul.f32 %v2422, %v2249
      %2426 = vrot.lane.b32.xlu0 %v2424, 119
      %v2427 = vpop.permute.xlu0 %2426
      %v2429 = vadd.f32 %v2419, %v2427
      %2430 = vset.pattern.permute.xlu0 17
      %2431 = vperm.xlu0 %2430, %v2198
      %v2432 = vpop.permute.xlu0 %2431
      %v2434 = vmul.f32 %v2432, %v2263
      %2436 = vrot.lane.b32.xlu0 %v2434, 119
      %v2437 = vpop.permute.xlu0 %2436
      %v2439 = vadd.f32 %v2429, %v2437
      %2440 = vset.pattern.permute.xlu0 18
      %2441 = vperm.xlu0 %2440, %v2198
      %v2442 = vpop.permute.xlu0 %2441
      %v2444 = vmul.f32 %v2442, %v2277
      %2446 = vrot.lane.b32.xlu0 %v2444, 119
      %v2447 = vpop.permute.xlu0 %2446
      %v2449 = vadd.f32 %v2439, %v2447
      %2450 = vset.pattern.permute.xlu0 19
      %2451 = vperm.xlu0 %2450, %v2198
      %v2452 = vpop.permute.xlu0 %2451
      %v2454 = vmul.f32 %v2452, %v2291
      %2456 = vrot.lane.b32.xlu0 %v2454, 119
      %v2457 = vpop.permute.xlu0 %2456
      %v2459 = vadd.f32 %v2449, %v2457
      %2460 = vrot.lane.b32.xlu0 %v434, 10
      %v2461 = vpop.permute.xlu0 %2460
      %v2463 = vmul.f32 %v2199, %v2461
      %2464 = vset.pattern.permute.xlu0 20
      %2465 = vperm.xlu0 %2464, %v2198
      %v2466 = vpop.permute.xlu0 %2465
      %v2468 = vlaneseq
      %v2469 = vshrl.u32 %v2468, 7
      %v2470 = vsub.s32 0, %v2469
      %v2471 = vrot.slane %v2463, %v2470
      %v2472 = vmul.f32 %v2466, %v2471
      %2474 = vrot.lane.b32.xlu0 %v2472, 118
      %v2475 = vpop.permute.xlu0 %2474
      %v2477 = vadd.f32 %v2459, %v2475
      %2478 = vset.pattern.permute.xlu0 21
      %2479 = vperm.xlu0 %2478, %v2198
      %v2480 = vpop.permute.xlu0 %2479
      %v2482 = vlaneseq
      %v2483 = vshrl.u32 %v2482, 7
      %v2484 = vsub.s32 1, %v2483
      %v2485 = vrot.slane %v2463, %v2484
      %v2486 = vmul.f32 %v2480, %v2485
      %2488 = vrot.lane.b32.xlu0 %v2486, 118
      %v2489 = vpop.permute.xlu0 %2488
      %v2491 = vadd.f32 %v2477, %v2489
      %2492 = vset.pattern.permute.xlu0 22
      %2493 = vperm.xlu0 %2492, %v2198
      %v2494 = vpop.permute.xlu0 %2493
      %v2496 = vlaneseq
      %v2497 = vshrl.u32 %v2496, 7
      %v2498 = vsub.s32 2, %v2497
      %v2499 = vrot.slane %v2463, %v2498
      %v2500 = vmul.f32 %v2494, %v2499
      %2502 = vrot.lane.b32.xlu0 %v2500, 118
      %v2503 = vpop.permute.xlu0 %2502
      %v2505 = vadd.f32 %v2491, %v2503
      %2506 = vset.pattern.permute.xlu0 23
      %2507 = vperm.xlu0 %2506, %v2198
      %v2508 = vpop.permute.xlu0 %2507
      %v2510 = vlaneseq
      %v2511 = vshrl.u32 %v2510, 7
      %v2512 = vsub.s32 3, %v2511
      %v2513 = vrot.slane %v2463, %v2512
      %v2514 = vmul.f32 %v2508, %v2513
      %2516 = vrot.lane.b32.xlu0 %v2514, 118
      %v2517 = vpop.permute.xlu0 %2516
      %v2519 = vadd.f32 %v2505, %v2517
      %2520 = vrot.lane.b32.xlu0 %v431, 16
      %v2521 = vpop.permute.xlu0 %2520
      %v2523 = vmul.f32 %v2199, %v2521
      %2524 = vset.pattern.permute.xlu0 24
      %2525 = vperm.xlu0 %2524, %v2198
      %v2526 = vpop.permute.xlu0 %2525
      %v2528 = vlaneseq
      %v2529 = vshrl.u32 %v2528, 7
      %v2530 = vsub.s32 0, %v2529
      %v2531 = vrot.slane %v2523, %v2530
      %v2532 = vmul.f32 %v2526, %v2531
      %2534 = vrot.lane.b32.xlu0 %v2532, 112
      %v2535 = vpop.permute.xlu0 %2534
      %v2537 = vadd.f32 %v2519, %v2535
      %2538 = vset.pattern.permute.xlu0 25
      %2539 = vperm.xlu0 %2538, %v2198
      %v2540 = vpop.permute.xlu0 %2539
      %v2542 = vlaneseq
      %v2543 = vshrl.u32 %v2542, 7
      %v2544 = vsub.s32 1, %v2543
      %v2545 = vrot.slane %v2523, %v2544
      %v2546 = vmul.f32 %v2540, %v2545
      %2548 = vrot.lane.b32.xlu0 %v2546, 112
      %v2549 = vpop.permute.xlu0 %2548
      %v2551 = vadd.f32 %v2537, %v2549
      %2552 = vset.pattern.permute.xlu0 26
      %2553 = vperm.xlu0 %2552, %v2198
      %v2554 = vpop.permute.xlu0 %2553
      %v2556 = vlaneseq
      %v2557 = vshrl.u32 %v2556, 7
      %v2558 = vsub.s32 2, %v2557
      %v2559 = vrot.slane %v2523, %v2558
      %v2560 = vmul.f32 %v2554, %v2559
      %2562 = vrot.lane.b32.xlu0 %v2560, 112
      %v2563 = vpop.permute.xlu0 %2562
      %v2565 = vadd.f32 %v2551, %v2563
      %2566 = vset.pattern.permute.xlu0 27
      %2567 = vperm.xlu0 %2566, %v2198
      %v2568 = vpop.permute.xlu0 %2567
      %v2570 = vlaneseq
      %v2571 = vshrl.u32 %v2570, 7
      %v2572 = vsub.s32 3, %v2571
      %v2573 = vrot.slane %v2523, %v2572
      %v2574 = vmul.f32 %v2568, %v2573
      %2576 = vrot.lane.b32.xlu0 %v2574, 112
      %v2577 = vpop.permute.xlu0 %2576
      %v2579 = vadd.f32 %v2565, %v2577
      %2580 = vset.pattern.permute.xlu0 28
      %2581 = vperm.xlu0 %2580, %v2198
      %v2582 = vpop.permute.xlu0 %2581
      %v2584 = vmul.f32 %v2582, %v2249
      %2586 = vrot.lane.b32.xlu0 %v2584, 111
      %v2587 = vpop.permute.xlu0 %2586
      %v2589 = vadd.f32 %v2579, %v2587
      %2590 = vset.pattern.permute.xlu0 29
      %2591 = vperm.xlu0 %2590, %v2198
      %v2592 = vpop.permute.xlu0 %2591
      %v2594 = vmul.f32 %v2592, %v2263
      %2596 = vrot.lane.b32.xlu0 %v2594, 111
      %v2597 = vpop.permute.xlu0 %2596
      %v2599 = vadd.f32 %v2589, %v2597
      %2600 = vset.pattern.permute.xlu0 30
      %2601 = vperm.xlu0 %2600, %v2198
      %v2602 = vpop.permute.xlu0 %2601
      %v2604 = vmul.f32 %v2602, %v2277
      %2606 = vrot.lane.b32.xlu0 %v2604, 111
      %v2607 = vpop.permute.xlu0 %2606
      %v2609 = vadd.f32 %v2599, %v2607
      %2610 = vset.pattern.permute.xlu0 31
      %2611 = vperm.xlu0 %2610, %v2198
      %v2612 = vpop.permute.xlu0 %2611
      %v2614 = vmul.f32 %v2612, %v2291
      %2616 = vrot.lane.b32.xlu0 %v2614, 111
      %v2617 = vpop.permute.xlu0 %2616
      %v2619 = vadd.f32 %v2609, %v2617
      %2620 = vrot.lane.b32.xlu0 %v434, 18
      %v2621 = vpop.permute.xlu0 %2620
      %v2623 = vmul.f32 %v2199, %v2621
      %2624 = vset.pattern.permute.xlu0 32
      %2625 = vperm.xlu0 %2624, %v2198
      %v2626 = vpop.permute.xlu0 %2625
      %v2628 = vlaneseq
      %v2629 = vshrl.u32 %v2628, 7
      %v2630 = vsub.s32 0, %v2629
      %v2631 = vrot.slane %v2623, %v2630
      %v2632 = vmul.f32 %v2626, %v2631
      %2634 = vrot.lane.b32.xlu0 %v2632, 110
      %v2635 = vpop.permute.xlu0 %2634
      %v2637 = vadd.f32 %v2619, %v2635
      %2638 = vset.pattern.permute.xlu0 33
      %2639 = vperm.xlu0 %2638, %v2198
      %v2640 = vpop.permute.xlu0 %2639
      %v2642 = vlaneseq
      %v2643 = vshrl.u32 %v2642, 7
      %v2644 = vsub.s32 1, %v2643
      %v2645 = vrot.slane %v2623, %v2644
      %v2646 = vmul.f32 %v2640, %v2645
      %2648 = vrot.lane.b32.xlu0 %v2646, 110
      %v2649 = vpop.permute.xlu0 %2648
      %v2651 = vadd.f32 %v2637, %v2649
      %2652 = vset.pattern.permute.xlu0 34
      %2653 = vperm.xlu0 %2652, %v2198
      %v2654 = vpop.permute.xlu0 %2653
      %v2656 = vlaneseq
      %v2657 = vshrl.u32 %v2656, 7
      %v2658 = vsub.s32 2, %v2657
      %v2659 = vrot.slane %v2623, %v2658
      %v2660 = vmul.f32 %v2654, %v2659
      %2662 = vrot.lane.b32.xlu0 %v2660, 110
      %v2663 = vpop.permute.xlu0 %2662
      %v2665 = vadd.f32 %v2651, %v2663
      %2666 = vset.pattern.permute.xlu0 35
      %2667 = vperm.xlu0 %2666, %v2198
      %v2668 = vpop.permute.xlu0 %2667
      %v2670 = vlaneseq
      %v2671 = vshrl.u32 %v2670, 7
      %v2672 = vsub.s32 3, %v2671
      %v2673 = vrot.slane %v2623, %v2672
      %v2674 = vmul.f32 %v2668, %v2673
      %2676 = vrot.lane.b32.xlu0 %v2674, 110
      %v2677 = vpop.permute.xlu0 %2676
      %v2679 = vadd.f32 %v2665, %v2677
      %v2680 = vld [vmem:[%s5] sm:$0xf]
      %2682 = vset.pattern.permute.xlu0 0
      %2683 = vperm.xlu0 %2682, %v2680
      %v2684 = vpop.permute.xlu0 %2683
      %v2686 = vmul.f32 %v2684, %v2209
      %v2687 = vadd.f32 %v2686, 0.0
      %2688 = vset.pattern.permute.xlu0 1
      %2689 = vperm.xlu0 %2688, %v2680
      %v2690 = vpop.permute.xlu0 %2689
      %v2692 = vmul.f32 %v2690, %v2219
      %v2693 = vadd.f32 %v2687, %v2692
      %2694 = vset.pattern.permute.xlu0 2
      %2695 = vperm.xlu0 %2694, %v2680
      %v2696 = vpop.permute.xlu0 %2695
      %v2698 = vmul.f32 %v2696, %v2229
      %v2699 = vadd.f32 %v2693, %v2698
      %2700 = vset.pattern.permute.xlu0 3
      %2701 = vperm.xlu0 %2700, %v2680
      %v2702 = vpop.permute.xlu0 %2701
      %v2704 = vmul.f32 %v2702, %v2239
      %v2705 = vadd.f32 %v2699, %v2704
      %2706 = vset.pattern.permute.xlu0 4
      %2707 = vperm.xlu0 %2706, %v2680
      %v2708 = vpop.permute.xlu0 %2707
      %v2710 = vmul.f32 %v2708, %v2249
      %2712 = vrot.lane.b32.xlu0 %v2710, 127
      %v2713 = vpop.permute.xlu0 %2712
      %v2715 = vadd.f32 %v2705, %v2713
      %2716 = vset.pattern.permute.xlu0 5
      %2717 = vperm.xlu0 %2716, %v2680
      %v2718 = vpop.permute.xlu0 %2717
      %v2720 = vmul.f32 %v2718, %v2263
      %2722 = vrot.lane.b32.xlu0 %v2720, 127
      %v2723 = vpop.permute.xlu0 %2722
      %v2725 = vadd.f32 %v2715, %v2723
      %2726 = vset.pattern.permute.xlu0 6
      %2727 = vperm.xlu0 %2726, %v2680
      %v2728 = vpop.permute.xlu0 %2727
      %v2730 = vmul.f32 %v2728, %v2277
      %2732 = vrot.lane.b32.xlu0 %v2730, 127
      %v2733 = vpop.permute.xlu0 %2732
      %v2735 = vadd.f32 %v2725, %v2733
      %2736 = vset.pattern.permute.xlu0 7
      %2737 = vperm.xlu0 %2736, %v2680
      %v2738 = vpop.permute.xlu0 %2737
      %v2740 = vmul.f32 %v2738, %v2291
      %2742 = vrot.lane.b32.xlu0 %v2740, 127
      %v2743 = vpop.permute.xlu0 %2742
      %v2745 = vadd.f32 %v2735, %v2743
      %2746 = vset.pattern.permute.xlu0 8
      %2747 = vperm.xlu0 %2746, %v2680
      %v2748 = vpop.permute.xlu0 %2747
      %v2750 = vmul.f32 %v2748, %v2310
      %2752 = vrot.lane.b32.xlu0 %v2750, 126
      %v2753 = vpop.permute.xlu0 %2752
      %v2755 = vadd.f32 %v2745, %v2753
      %2756 = vset.pattern.permute.xlu0 9
      %2757 = vperm.xlu0 %2756, %v2680
      %v2758 = vpop.permute.xlu0 %2757
      %v2760 = vmul.f32 %v2758, %v2324
      %2762 = vrot.lane.b32.xlu0 %v2760, 126
      %v2763 = vpop.permute.xlu0 %2762
      %v2765 = vadd.f32 %v2755, %v2763
      %2766 = vset.pattern.permute.xlu0 10
      %2767 = vperm.xlu0 %2766, %v2680
      %v2768 = vpop.permute.xlu0 %2767
      %v2770 = vmul.f32 %v2768, %v2338
      %2772 = vrot.lane.b32.xlu0 %v2770, 126
      %v2773 = vpop.permute.xlu0 %2772
      %v2775 = vadd.f32 %v2765, %v2773
      %2776 = vset.pattern.permute.xlu0 11
      %2777 = vperm.xlu0 %2776, %v2680
      %v2778 = vpop.permute.xlu0 %2777
      %v2780 = vmul.f32 %v2778, %v2352
      %2782 = vrot.lane.b32.xlu0 %v2780, 126
      %v2783 = vpop.permute.xlu0 %2782
      %v2785 = vadd.f32 %v2775, %v2783
      %2786 = vset.pattern.permute.xlu0 12
      %2787 = vperm.xlu0 %2786, %v2680
      %v2788 = vpop.permute.xlu0 %2787
      %v2790 = vmul.f32 %v2788, %v2371
      %2792 = vrot.lane.b32.xlu0 %v2790, 120
      %v2793 = vpop.permute.xlu0 %2792
      %v2795 = vadd.f32 %v2785, %v2793
      %2796 = vset.pattern.permute.xlu0 13
      %2797 = vperm.xlu0 %2796, %v2680
      %v2798 = vpop.permute.xlu0 %2797
      %v2800 = vmul.f32 %v2798, %v2385
      %2802 = vrot.lane.b32.xlu0 %v2800, 120
      %v2803 = vpop.permute.xlu0 %2802
      %v2805 = vadd.f32 %v2795, %v2803
      %2806 = vset.pattern.permute.xlu0 14
      %2807 = vperm.xlu0 %2806, %v2680
      %v2808 = vpop.permute.xlu0 %2807
      %v2810 = vmul.f32 %v2808, %v2399
      %2812 = vrot.lane.b32.xlu0 %v2810, 120
      %v2813 = vpop.permute.xlu0 %2812
      %v2815 = vadd.f32 %v2805, %v2813
      %2816 = vset.pattern.permute.xlu0 15
      %2817 = vperm.xlu0 %2816, %v2680
      %v2818 = vpop.permute.xlu0 %2817
      %v2820 = vmul.f32 %v2818, %v2413
      %2822 = vrot.lane.b32.xlu0 %v2820, 120
      %v2823 = vpop.permute.xlu0 %2822
      %v2825 = vadd.f32 %v2815, %v2823
      %2826 = vset.pattern.permute.xlu0 16
      %2827 = vperm.xlu0 %2826, %v2680
      %v2828 = vpop.permute.xlu0 %2827
      %v2830 = vmul.f32 %v2828, %v2249
      %2832 = vrot.lane.b32.xlu0 %v2830, 119
      %v2833 = vpop.permute.xlu0 %2832
      %v2835 = vadd.f32 %v2825, %v2833
      %2836 = vset.pattern.permute.xlu0 17
      %2837 = vperm.xlu0 %2836, %v2680
      %v2838 = vpop.permute.xlu0 %2837
      %v2840 = vmul.f32 %v2838, %v2263
      %2842 = vrot.lane.b32.xlu0 %v2840, 119
      %v2843 = vpop.permute.xlu0 %2842
      %v2845 = vadd.f32 %v2835, %v2843
      %2846 = vset.pattern.permute.xlu0 18
      %2847 = vperm.xlu0 %2846, %v2680
      %v2848 = vpop.permute.xlu0 %2847
      %v2850 = vmul.f32 %v2848, %v2277
      %2852 = vrot.lane.b32.xlu0 %v2850, 119
      %v2853 = vpop.permute.xlu0 %2852
      %v2855 = vadd.f32 %v2845, %v2853
      %2856 = vset.pattern.permute.xlu0 19
      %2857 = vperm.xlu0 %2856, %v2680
      %v2858 = vpop.permute.xlu0 %2857
      %v2860 = vmul.f32 %v2858, %v2291
      %2862 = vrot.lane.b32.xlu0 %v2860, 119
      %v2863 = vpop.permute.xlu0 %2862
      %v2865 = vadd.f32 %v2855, %v2863
      %2866 = vset.pattern.permute.xlu0 20
      %2867 = vperm.xlu0 %2866, %v2680
      %v2868 = vpop.permute.xlu0 %2867
      %v2870 = vmul.f32 %v2868, %v2471
      %2872 = vrot.lane.b32.xlu0 %v2870, 118
      %v2873 = vpop.permute.xlu0 %2872
      %v2875 = vadd.f32 %v2865, %v2873
      %2876 = vset.pattern.permute.xlu0 21
      %2877 = vperm.xlu0 %2876, %v2680
      %v2878 = vpop.permute.xlu0 %2877
      %v2880 = vmul.f32 %v2878, %v2485
      %2882 = vrot.lane.b32.xlu0 %v2880, 118
      %v2883 = vpop.permute.xlu0 %2882
      %v2885 = vadd.f32 %v2875, %v2883
      %2886 = vset.pattern.permute.xlu0 22
      %2887 = vperm.xlu0 %2886, %v2680
      %v2888 = vpop.permute.xlu0 %2887
      %v2890 = vmul.f32 %v2888, %v2499
      %2892 = vrot.lane.b32.xlu0 %v2890, 118
      %v2893 = vpop.permute.xlu0 %2892
      %v2895 = vadd.f32 %v2885, %v2893
      %2896 = vset.pattern.permute.xlu0 23
      %2897 = vperm.xlu0 %2896, %v2680
      %v2898 = vpop.permute.xlu0 %2897
      %v2900 = vmul.f32 %v2898, %v2513
      %2902 = vrot.lane.b32.xlu0 %v2900, 118
      %v2903 = vpop.permute.xlu0 %2902
      %v2905 = vadd.f32 %v2895, %v2903
      %2906 = vset.pattern.permute.xlu0 24
      %2907 = vperm.xlu0 %2906, %v2680
      %v2908 = vpop.permute.xlu0 %2907
      %v2910 = vmul.f32 %v2908, %v2531
      %2912 = vrot.lane.b32.xlu0 %v2910, 112
      %v2913 = vpop.permute.xlu0 %2912
      %v2915 = vadd.f32 %v2905, %v2913
      %2916 = vset.pattern.permute.xlu0 25
      %2917 = vperm.xlu0 %2916, %v2680
      %v2918 = vpop.permute.xlu0 %2917
      %v2920 = vmul.f32 %v2918, %v2545
      %2922 = vrot.lane.b32.xlu0 %v2920, 112
      %v2923 = vpop.permute.xlu0 %2922
      %v2925 = vadd.f32 %v2915, %v2923
      %2926 = vset.pattern.permute.xlu0 26
      %2927 = vperm.xlu0 %2926, %v2680
      %v2928 = vpop.permute.xlu0 %2927
      %v2930 = vmul.f32 %v2928, %v2559
      %2932 = vrot.lane.b32.xlu0 %v2930, 112
      %v2933 = vpop.permute.xlu0 %2932
      %v2935 = vadd.f32 %v2925, %v2933
      %2936 = vset.pattern.permute.xlu0 27
      %2937 = vperm.xlu0 %2936, %v2680
      %v2938 = vpop.permute.xlu0 %2937
      %v2940 = vmul.f32 %v2938, %v2573
      %2942 = vrot.lane.b32.xlu0 %v2940, 112
      %v2943 = vpop.permute.xlu0 %2942
      %v2945 = vadd.f32 %v2935, %v2943
      %2946 = vset.pattern.permute.xlu0 28
      %2947 = vperm.xlu0 %2946, %v2680
      %v2948 = vpop.permute.xlu0 %2947
      %v2950 = vmul.f32 %v2948, %v2249
      %2952 = vrot.lane.b32.xlu0 %v2950, 111
      %v2953 = vpop.permute.xlu0 %2952
      %v2955 = vadd.f32 %v2945, %v2953
      %2956 = vset.pattern.permute.xlu0 29
      %2957 = vperm.xlu0 %2956, %v2680
      %v2958 = vpop.permute.xlu0 %2957
      %v2960 = vmul.f32 %v2958, %v2263
      %2962 = vrot.lane.b32.xlu0 %v2960, 111
      %v2963 = vpop.permute.xlu0 %2962
      %v2965 = vadd.f32 %v2955, %v2963
      %2966 = vset.pattern.permute.xlu0 30
      %2967 = vperm.xlu0 %2966, %v2680
      %v2968 = vpop.permute.xlu0 %2967
      %v2970 = vmul.f32 %v2968, %v2277
      %2972 = vrot.lane.b32.xlu0 %v2970, 111
      %v2973 = vpop.permute.xlu0 %2972
      %v2975 = vadd.f32 %v2965, %v2973
      %2976 = vset.pattern.permute.xlu0 31
      %2977 = vperm.xlu0 %2976, %v2680
      %v2978 = vpop.permute.xlu0 %2977
      %v2980 = vmul.f32 %v2978, %v2291
      %2982 = vrot.lane.b32.xlu0 %v2980, 111
      %v2983 = vpop.permute.xlu0 %2982
      %v2985 = vadd.f32 %v2975, %v2983
      %2986 = vset.pattern.permute.xlu0 32
      %2987 = vperm.xlu0 %2986, %v2680
      %v2988 = vpop.permute.xlu0 %2987
      %v2990 = vmul.f32 %v2988, %v2631
      %2992 = vrot.lane.b32.xlu0 %v2990, 110
      %v2993 = vpop.permute.xlu0 %2992
      %v2995 = vadd.f32 %v2985, %v2993
      %2996 = vset.pattern.permute.xlu0 33
      %2997 = vperm.xlu0 %2996, %v2680
      %v2998 = vpop.permute.xlu0 %2997
      %v3000 = vmul.f32 %v2998, %v2645
      %3002 = vrot.lane.b32.xlu0 %v3000, 110
      %v3003 = vpop.permute.xlu0 %3002
      %v3005 = vadd.f32 %v2995, %v3003
      %3006 = vset.pattern.permute.xlu0 34
      %3007 = vperm.xlu0 %3006, %v2680
      %v3008 = vpop.permute.xlu0 %3007
      %v3010 = vmul.f32 %v3008, %v2659
      %3012 = vrot.lane.b32.xlu0 %v3010, 110
      %v3013 = vpop.permute.xlu0 %3012
      %v3015 = vadd.f32 %v3005, %v3013
      %3016 = vset.pattern.permute.xlu0 35
      %3017 = vperm.xlu0 %3016, %v2680
      %v3018 = vpop.permute.xlu0 %3017
      %v3020 = vmul.f32 %v3018, %v2673
      %3022 = vrot.lane.b32.xlu0 %v3020, 110
      %v3023 = vpop.permute.xlu0 %3022
      %v3025 = vadd.f32 %v3015, %v3023
      %v3026 = vld [vmem:[%s4] sm:$0xf]
      %v3027 = vld [vmem:[%s368] sm:$0xf]
      %v3028 = vmul.f32 %v3027, %v431
      %3030 = vset.pattern.permute.xlu0 0
      %3031 = vperm.xlu0 %3030, %v3026
      %v3032 = vpop.permute.xlu0 %3031
      %v3034 = vlaneseq
      %v3035 = vshrl.u32 %v3034, 7
      %v3036 = vsub.s32 0, %v3035
      %v3037 = vrot.slane %v3028, %v3036
      %v3038 = vmul.f32 %v3032, %v3037
      %v3039 = vadd.f32 %v3038, 0.0
      %3040 = vset.pattern.permute.xlu0 1
      %3041 = vperm.xlu0 %3040, %v3026
      %v3042 = vpop.permute.xlu0 %3041
      %v3044 = vlaneseq
      %v3045 = vshrl.u32 %v3044, 7
      %v3046 = vsub.s32 1, %v3045
      %v3047 = vrot.slane %v3028, %v3046
      %v3048 = vmul.f32 %v3042, %v3047
      %v3049 = vadd.f32 %v3039, %v3048
      %3050 = vset.pattern.permute.xlu0 2
      %3051 = vperm.xlu0 %3050, %v3026
      %v3052 = vpop.permute.xlu0 %3051
      %v3054 = vlaneseq
      %v3055 = vshrl.u32 %v3054, 7
      %v3056 = vsub.s32 2, %v3055
      %v3057 = vrot.slane %v3028, %v3056
      %v3058 = vmul.f32 %v3052, %v3057
      %v3059 = vadd.f32 %v3049, %v3058
      %3060 = vset.pattern.permute.xlu0 3
      %3061 = vperm.xlu0 %3060, %v3026
      %v3062 = vpop.permute.xlu0 %3061
      %v3064 = vlaneseq
      %v3065 = vshrl.u32 %v3064, 7
      %v3066 = vsub.s32 3, %v3065
      %v3067 = vrot.slane %v3028, %v3066
      %v3068 = vmul.f32 %v3062, %v3067
      %v3069 = vadd.f32 %v3059, %v3068
      %3070 = vset.pattern.permute.xlu0 4
      %3071 = vperm.xlu0 %3070, %v3026
      %v3072 = vpop.permute.xlu0 %3071
      %v3074 = vlaneseq
      %v3075 = vshrl.u32 %v3074, 7
      %v3076 = vsub.s32 0, %v3075
      %v3077 = vrot.slane %v3027, %v3076
      %v3078 = vmul.f32 %v3072, %v3077
      %3080 = vrot.lane.b32.xlu0 %v3078, 127
      %v3081 = vpop.permute.xlu0 %3080
      %v3083 = vadd.f32 %v3069, %v3081
      %3084 = vset.pattern.permute.xlu0 5
      %3085 = vperm.xlu0 %3084, %v3026
      %v3086 = vpop.permute.xlu0 %3085
      %v3088 = vlaneseq
      %v3089 = vshrl.u32 %v3088, 7
      %v3090 = vsub.s32 1, %v3089
      %v3091 = vrot.slane %v3027, %v3090
      %v3092 = vmul.f32 %v3086, %v3091
      %3094 = vrot.lane.b32.xlu0 %v3092, 127
      %v3095 = vpop.permute.xlu0 %3094
      %v3097 = vadd.f32 %v3083, %v3095
      %3098 = vset.pattern.permute.xlu0 6
      %3099 = vperm.xlu0 %3098, %v3026
      %v3100 = vpop.permute.xlu0 %3099
      %v3102 = vlaneseq
      %v3103 = vshrl.u32 %v3102, 7
      %v3104 = vsub.s32 2, %v3103
      %v3105 = vrot.slane %v3027, %v3104
      %v3106 = vmul.f32 %v3100, %v3105
      %3108 = vrot.lane.b32.xlu0 %v3106, 127
      %v3109 = vpop.permute.xlu0 %3108
      %v3111 = vadd.f32 %v3097, %v3109
      %3112 = vset.pattern.permute.xlu0 7
      %3113 = vperm.xlu0 %3112, %v3026
      %v3114 = vpop.permute.xlu0 %3113
      %v3116 = vlaneseq
      %v3117 = vshrl.u32 %v3116, 7
      %v3118 = vsub.s32 3, %v3117
      %v3119 = vrot.slane %v3027, %v3118
      %v3120 = vmul.f32 %v3114, %v3119
      %3122 = vrot.lane.b32.xlu0 %v3120, 127
      %v3123 = vpop.permute.xlu0 %3122
      %v3125 = vadd.f32 %v3111, %v3123
      %v3126 = vmul.f32 %v3027, %v2300
      %3127 = vset.pattern.permute.xlu0 8
      %3128 = vperm.xlu0 %3127, %v3026
      %v3129 = vpop.permute.xlu0 %3128
      %v3131 = vlaneseq
      %v3132 = vshrl.u32 %v3131, 7
      %v3133 = vsub.s32 0, %v3132
      %v3134 = vrot.slane %v3126, %v3133
      %v3135 = vmul.f32 %v3129, %v3134
      %3137 = vrot.lane.b32.xlu0 %v3135, 126
      %v3138 = vpop.permute.xlu0 %3137
      %v3140 = vadd.f32 %v3125, %v3138
      %3141 = vset.pattern.permute.xlu0 9
      %3142 = vperm.xlu0 %3141, %v3026
      %v3143 = vpop.permute.xlu0 %3142
      %v3145 = vlaneseq
      %v3146 = vshrl.u32 %v3145, 7
      %v3147 = vsub.s32 1, %v3146
      %v3148 = vrot.slane %v3126, %v3147
      %v3149 = vmul.f32 %v3143, %v3148
      %3151 = vrot.lane.b32.xlu0 %v3149, 126
      %v3152 = vpop.permute.xlu0 %3151
      %v3154 = vadd.f32 %v3140, %v3152
      %3155 = vset.pattern.permute.xlu0 10
      %3156 = vperm.xlu0 %3155, %v3026
      %v3157 = vpop.permute.xlu0 %3156
      %v3159 = vlaneseq
      %v3160 = vshrl.u32 %v3159, 7
      %v3161 = vsub.s32 2, %v3160
      %v3162 = vrot.slane %v3126, %v3161
      %v3163 = vmul.f32 %v3157, %v3162
      %3165 = vrot.lane.b32.xlu0 %v3163, 126
      %v3166 = vpop.permute.xlu0 %3165
      %v3168 = vadd.f32 %v3154, %v3166
      %3169 = vset.pattern.permute.xlu0 11
      %3170 = vperm.xlu0 %3169, %v3026
      %v3171 = vpop.permute.xlu0 %3170
      %v3173 = vlaneseq
      %v3174 = vshrl.u32 %v3173, 7
      %v3175 = vsub.s32 3, %v3174
      %v3176 = vrot.slane %v3126, %v3175
      %v3177 = vmul.f32 %v3171, %v3176
      %3179 = vrot.lane.b32.xlu0 %v3177, 126
      %v3180 = vpop.permute.xlu0 %3179
      %v3182 = vadd.f32 %v3168, %v3180
      %v3183 = vmul.f32 %v3027, %v2361
      %3184 = vset.pattern.permute.xlu0 12
      %3185 = vperm.xlu0 %3184, %v3026
      %v3186 = vpop.permute.xlu0 %3185
      %v3188 = vlaneseq
      %v3189 = vshrl.u32 %v3188, 7
      %v3190 = vsub.s32 0, %v3189
      %v3191 = vrot.slane %v3183, %v3190
      %v3192 = vmul.f32 %v3186, %v3191
      %3194 = vrot.lane.b32.xlu0 %v3192, 120
      %v3195 = vpop.permute.xlu0 %3194
      %v3197 = vadd.f32 %v3182, %v3195
      %3198 = vset.pattern.permute.xlu0 13
      %3199 = vperm.xlu0 %3198, %v3026
      %v3200 = vpop.permute.xlu0 %3199
      %v3202 = vlaneseq
      %v3203 = vshrl.u32 %v3202, 7
      %v3204 = vsub.s32 1, %v3203
      %v3205 = vrot.slane %v3183, %v3204
      %v3206 = vmul.f32 %v3200, %v3205
      %3208 = vrot.lane.b32.xlu0 %v3206, 120
      %v3209 = vpop.permute.xlu0 %3208
      %v3211 = vadd.f32 %v3197, %v3209
      %3212 = vset.pattern.permute.xlu0 14
      %3213 = vperm.xlu0 %3212, %v3026
      %v3214 = vpop.permute.xlu0 %3213
      %v3216 = vlaneseq
      %v3217 = vshrl.u32 %v3216, 7
      %v3218 = vsub.s32 2, %v3217
      %v3219 = vrot.slane %v3183, %v3218
      %v3220 = vmul.f32 %v3214, %v3219
      %3222 = vrot.lane.b32.xlu0 %v3220, 120
      %v3223 = vpop.permute.xlu0 %3222
      %v3225 = vadd.f32 %v3211, %v3223
      %3226 = vset.pattern.permute.xlu0 15
      %3227 = vperm.xlu0 %3226, %v3026
      %v3228 = vpop.permute.xlu0 %3227
      %v3230 = vlaneseq
      %v3231 = vshrl.u32 %v3230, 7
      %v3232 = vsub.s32 3, %v3231
      %v3233 = vrot.slane %v3183, %v3232
      %v3234 = vmul.f32 %v3228, %v3233
      %3236 = vrot.lane.b32.xlu0 %v3234, 120
      %v3237 = vpop.permute.xlu0 %3236
      %v3239 = vadd.f32 %v3225, %v3237
      %3240 = vset.pattern.permute.xlu0 16
      %3241 = vperm.xlu0 %3240, %v3026
      %v3242 = vpop.permute.xlu0 %3241
      %v3244 = vmul.f32 %v3242, %v3077
      %3246 = vrot.lane.b32.xlu0 %v3244, 119
      %v3247 = vpop.permute.xlu0 %3246
      %v3249 = vadd.f32 %v3239, %v3247
      %3250 = vset.pattern.permute.xlu0 17
      %3251 = vperm.xlu0 %3250, %v3026
      %v3252 = vpop.permute.xlu0 %3251
      %v3254 = vmul.f32 %v3252, %v3091
      %3256 = vrot.lane.b32.xlu0 %v3254, 119
      %v3257 = vpop.permute.xlu0 %3256
      %v3259 = vadd.f32 %v3249, %v3257
      %3260 = vset.pattern.permute.xlu0 18
      %3261 = vperm.xlu0 %3260, %v3026
      %v3262 = vpop.permute.xlu0 %3261
      %v3264 = vmul.f32 %v3262, %v3105
      %3266 = vrot.lane.b32.xlu0 %v3264, 119
      %v3267 = vpop.permute.xlu0 %3266
      %v3269 = vadd.f32 %v3259, %v3267
      %3270 = vset.pattern.permute.xlu0 19
      %3271 = vperm.xlu0 %3270, %v3026
      %v3272 = vpop.permute.xlu0 %3271
      %v3274 = vmul.f32 %v3272, %v3119
      %3276 = vrot.lane.b32.xlu0 %v3274, 119
      %v3277 = vpop.permute.xlu0 %3276
      %v3279 = vadd.f32 %v3269, %v3277
      %v3280 = vmul.f32 %v3027, %v2461
      %3281 = vset.pattern.permute.xlu0 20
      %3282 = vperm.xlu0 %3281, %v3026
      %v3283 = vpop.permute.xlu0 %3282
      %v3285 = vlaneseq
      %v3286 = vshrl.u32 %v3285, 7
      %v3287 = vsub.s32 0, %v3286
      %v3288 = vrot.slane %v3280, %v3287
      %v3289 = vmul.f32 %v3283, %v3288
      %3291 = vrot.lane.b32.xlu0 %v3289, 118
      %v3292 = vpop.permute.xlu0 %3291
      %v3294 = vadd.f32 %v3279, %v3292
      %3295 = vset.pattern.permute.xlu0 21
      %3296 = vperm.xlu0 %3295, %v3026
      %v3297 = vpop.permute.xlu0 %3296
      %v3299 = vlaneseq
      %v3300 = vshrl.u32 %v3299, 7
      %v3301 = vsub.s32 1, %v3300
      %v3302 = vrot.slane %v3280, %v3301
      %v3303 = vmul.f32 %v3297, %v3302
      %3305 = vrot.lane.b32.xlu0 %v3303, 118
      %v3306 = vpop.permute.xlu0 %3305
      %v3308 = vadd.f32 %v3294, %v3306
      %3309 = vset.pattern.permute.xlu0 22
      %3310 = vperm.xlu0 %3309, %v3026
      %v3311 = vpop.permute.xlu0 %3310
      %v3313 = vlaneseq
      %v3314 = vshrl.u32 %v3313, 7
      %v3315 = vsub.s32 2, %v3314
      %v3316 = vrot.slane %v3280, %v3315
      %v3317 = vmul.f32 %v3311, %v3316
      %3319 = vrot.lane.b32.xlu0 %v3317, 118
      %v3320 = vpop.permute.xlu0 %3319
      %v3322 = vadd.f32 %v3308, %v3320
      %3323 = vset.pattern.permute.xlu0 23
      %3324 = vperm.xlu0 %3323, %v3026
      %v3325 = vpop.permute.xlu0 %3324
      %v3327 = vlaneseq
      %v3328 = vshrl.u32 %v3327, 7
      %v3329 = vsub.s32 3, %v3328
      %v3330 = vrot.slane %v3280, %v3329
      %v3331 = vmul.f32 %v3325, %v3330
      %3333 = vrot.lane.b32.xlu0 %v3331, 118
      %v3334 = vpop.permute.xlu0 %3333
      %v3336 = vadd.f32 %v3322, %v3334
      %v3337 = vmul.f32 %v3027, %v2521
      %3338 = vset.pattern.permute.xlu0 24
      %3339 = vperm.xlu0 %3338, %v3026
      %v3340 = vpop.permute.xlu0 %3339
      %v3342 = vlaneseq
      %v3343 = vshrl.u32 %v3342, 7
      %v3344 = vsub.s32 0, %v3343
      %v3345 = vrot.slane %v3337, %v3344
      %v3346 = vmul.f32 %v3340, %v3345
      %3348 = vrot.lane.b32.xlu0 %v3346, 112
      %v3349 = vpop.permute.xlu0 %3348
      %v3351 = vadd.f32 %v3336, %v3349
      %3352 = vset.pattern.permute.xlu0 25
      %3353 = vperm.xlu0 %3352, %v3026
      %v3354 = vpop.permute.xlu0 %3353
      %v3356 = vlaneseq
      %v3357 = vshrl.u32 %v3356, 7
      %v3358 = vsub.s32 1, %v3357
      %v3359 = vrot.slane %v3337, %v3358
      %v3360 = vmul.f32 %v3354, %v3359
      %3362 = vrot.lane.b32.xlu0 %v3360, 112
      %v3363 = vpop.permute.xlu0 %3362
      %v3365 = vadd.f32 %v3351, %v3363
      %3366 = vset.pattern.permute.xlu0 26
      %3367 = vperm.xlu0 %3366, %v3026
      %v3368 = vpop.permute.xlu0 %3367
      %v3370 = vlaneseq
      %v3371 = vshrl.u32 %v3370, 7
      %v3372 = vsub.s32 2, %v3371
      %v3373 = vrot.slane %v3337, %v3372
      %v3374 = vmul.f32 %v3368, %v3373
      %3376 = vrot.lane.b32.xlu0 %v3374, 112
      %v3377 = vpop.permute.xlu0 %3376
      %v3379 = vadd.f32 %v3365, %v3377
      %3380 = vset.pattern.permute.xlu0 27
      %3381 = vperm.xlu0 %3380, %v3026
      %v3382 = vpop.permute.xlu0 %3381
      %v3384 = vlaneseq
      %v3385 = vshrl.u32 %v3384, 7
      %v3386 = vsub.s32 3, %v3385
      %v3387 = vrot.slane %v3337, %v3386
      %v3388 = vmul.f32 %v3382, %v3387
      %3390 = vrot.lane.b32.xlu0 %v3388, 112
      %v3391 = vpop.permute.xlu0 %3390
      %v3393 = vadd.f32 %v3379, %v3391
      %3394 = vset.pattern.permute.xlu0 28
      %3395 = vperm.xlu0 %3394, %v3026
      %v3396 = vpop.permute.xlu0 %3395
      %v3398 = vmul.f32 %v3396, %v3077
      %3400 = vrot.lane.b32.xlu0 %v3398, 111
      %v3401 = vpop.permute.xlu0 %3400
      %v3403 = vadd.f32 %v3393, %v3401
      %3404 = vset.pattern.permute.xlu0 29
      %3405 = vperm.xlu0 %3404, %v3026
      %v3406 = vpop.permute.xlu0 %3405
      %v3408 = vmul.f32 %v3406, %v3091
      %3410 = vrot.lane.b32.xlu0 %v3408, 111
      %v3411 = vpop.permute.xlu0 %3410
      %v3413 = vadd.f32 %v3403, %v3411
      %3414 = vset.pattern.permute.xlu0 30
      %3415 = vperm.xlu0 %3414, %v3026
      %v3416 = vpop.permute.xlu0 %3415
      %v3418 = vmul.f32 %v3416, %v3105
      %3420 = vrot.lane.b32.xlu0 %v3418, 111
      %v3421 = vpop.permute.xlu0 %3420
      %v3423 = vadd.f32 %v3413, %v3421
      %3424 = vset.pattern.permute.xlu0 31
      %3425 = vperm.xlu0 %3424, %v3026
      %v3426 = vpop.permute.xlu0 %3425
      %v3428 = vmul.f32 %v3426, %v3119
      %3430 = vrot.lane.b32.xlu0 %v3428, 111
      %v3431 = vpop.permute.xlu0 %3430
      %v3433 = vadd.f32 %v3423, %v3431
      %v3434 = vmul.f32 %v3027, %v2621
      %3435 = vset.pattern.permute.xlu0 32
      %3436 = vperm.xlu0 %3435, %v3026
      %v3437 = vpop.permute.xlu0 %3436
      %v3439 = vlaneseq
      %v3440 = vshrl.u32 %v3439, 7
      %v3441 = vsub.s32 0, %v3440
      %v3442 = vrot.slane %v3434, %v3441
      %v3443 = vmul.f32 %v3437, %v3442
      %3445 = vrot.lane.b32.xlu0 %v3443, 110
      %v3446 = vpop.permute.xlu0 %3445
      %v3448 = vadd.f32 %v3433, %v3446
      %3449 = vset.pattern.permute.xlu0 33
      %3450 = vperm.xlu0 %3449, %v3026
      %v3451 = vpop.permute.xlu0 %3450
      %v3453 = vlaneseq
      %v3454 = vshrl.u32 %v3453, 7
      %v3455 = vsub.s32 1, %v3454
      %v3456 = vrot.slane %v3434, %v3455
      %v3457 = vmul.f32 %v3451, %v3456
      %3459 = vrot.lane.b32.xlu0 %v3457, 110
      %v3460 = vpop.permute.xlu0 %3459
      %v3462 = vadd.f32 %v3448, %v3460
      %3463 = vset.pattern.permute.xlu0 34
      %3464 = vperm.xlu0 %3463, %v3026
      %v3465 = vpop.permute.xlu0 %3464
      %v3467 = vlaneseq
      %v3468 = vshrl.u32 %v3467, 7
      %v3469 = vsub.s32 2, %v3468
      %v3470 = vrot.slane %v3434, %v3469
      %v3471 = vmul.f32 %v3465, %v3470
      %3473 = vrot.lane.b32.xlu0 %v3471, 110
      %v3474 = vpop.permute.xlu0 %3473
      %v3476 = vadd.f32 %v3462, %v3474
      %3477 = vset.pattern.permute.xlu0 35
      %3478 = vperm.xlu0 %3477, %v3026
      %v3479 = vpop.permute.xlu0 %3478
      %v3481 = vlaneseq
      %v3482 = vshrl.u32 %v3481, 7
      %v3483 = vsub.s32 3, %v3482
      %v3484 = vrot.slane %v3434, %v3483
      %v3485 = vmul.f32 %v3479, %v3484
      %3487 = vrot.lane.b32.xlu0 %v3485, 110
      %v3488 = vpop.permute.xlu0 %3487
      %v3490 = vadd.f32 %v3476, %v3488
      %v3491 = vld [vmem:[%s7] sm:$0xff]
      %v3492 = vld [vmem:[%s7 + $0x8] sm:$0xff]
      %v3493 = vld [vmem:[%s7 + $0x10] sm:$0xff]
      %v3494 = vld [vmem:[%s7 + $0x18] sm:$0xff]
      %v3495 = vld [vmem:[%s7 + $0x20] sm:$0xff]
      %v3496 = vld [vmem:[%s7 + $0x28] sm:$0xff]
      %v3497 = vld [vmem:[%s7 + $0x30] sm:$0xff]
      %v3498 = vld [vmem:[%s7 + $0x38] sm:$0xff]
      %v3499 = vld [vmem:[%s7 + $0x40] sm:$0xff]
      %v3500 = vld [vmem:[%s7 + $0x48] sm:$0xff]
      %v3501 = vld [vmem:[%s7 + $0x50] sm:$0xff]
      %v3502 = vld [vmem:[%s7 + $0x58] sm:$0xff]
      %v3503 = vld [vmem:[%s7 + $0x60] sm:$0xff]
      %v3504 = vld [vmem:[%s7 + $0x68] sm:$0xff]
      %v3505 = vld [vmem:[%s7 + $0x70] sm:$0xff]
      %v3506 = vld [vmem:[%s7 + $0x78] sm:$0xff]
      %vm3507 = vcmask 523264
      %v3509 = vsel %vm3507, %v2679, 0
      %3511 = vmatprep.subr.mxu0 %v3492
      %3512 = vmatpush1.msra.mxu0 %v3491
      %3513 = vmatprep.subr.mxu0 %v3494
      %3514 = vmatpush1.msra.mxu0 %v3493
      %3515 = vmatprep.subr.mxu0 %v3496
      %3516 = vmatpush1.msra.mxu0 %v3495
      %3517 = vmatprep.subr.mxu0 %v3498
      %3518 = vmatpush1.msra.mxu0 %v3497
      %3519 = vmatprep.subr.mxu0 %v3500
      %3520 = vmatpush1.msra.mxu0 %v3499
      %3521 = vmatprep.subr.mxu0 %v3502
      %3522 = vmatpush1.msra.mxu0 %v3501
      %3523 = vmatprep.subr.mxu0 %v3504
      %3524 = vmatpush1.msra.mxu0 %v3503
      %3525 = vmatprep.subr.mxu0 %v3506
      %3526 = vmatpush1.msra.mxu0 %v3505
      %3527 = vmatprep.subr.mxu0 0.0
      %3528 = vmatpush1.msra.mxu0 0.0
      %3529 = vmatprep.subr.mxu0 0.0
      %3530 = vmatpush1.msra.mxu0 0.0
      %3531 = vmatprep.subr.mxu0 0.0
      %3532 = vmatpush1.msra.mxu0 0.0
      %3533 = vmatprep.subr.mxu0 0.0
      %3534 = vmatpush1.msra.mxu0 0.0
      %3535 = vmatprep.subr.mxu0 0.0
      %3536 = vmatpush1.msra.mxu0 0.0
      %3537 = vmatprep.subr.mxu0 0.0
      %3538 = vmatpush1.msra.mxu0 0.0
      %3539 = vmatprep.subr.mxu0 0.0
      %3540 = vmatpush1.msra.mxu0 0.0
      %3541 = vmatprep.subr.mxu0 0.0
      %3542 = vmatpush1.msra.mxu0 0.0
      %3543 = vmatprep.subr.mxu0 0.0
      %3544 = vmatpush1.msra.mxu0 0.0
      %3545 = vmatprep.subr.mxu0 0.0
      %3546 = vmatpush1.msra.mxu0 0.0
      %3547 = vmatprep.subr.mxu0 0.0
      %3548 = vmatpush1.msra.mxu0 0.0
      %3549 = vmatprep.subr.mxu0 0.0
      %3550 = vmatpush1.msra.mxu0 0.0
      %3551 = vmatprep.subr.mxu0 0.0
      %3552 = vmatpush1.msra.mxu0 0.0
      %3553 = vmatprep.subr.mxu0 0.0
      %3554 = vmatpush1.msra.mxu0 0.0
      %3555 = vmatprep.subr.mxu0 0.0
      %3556 = vmatpush1.msra.mxu0 0.0
      %3557 = vmatprep.subr.mxu0 0.0
      %3558 = vmatpush1.msra.mxu0 0.0
      %3559 = vmatprep.subr.mxu0 0.0
      %3560 = vmatpush1.msra.mxu0 0.0
      %3561 = vmatprep.subr.mxu0 0.0
      %3562 = vmatpush1.msra.mxu0 0.0
      %3563 = vmatprep.subr.mxu0 0.0
      %3564 = vmatpush1.msra.mxu0 0.0
      %3565 = vmatprep.subr.mxu0 0.0
      %3566 = vmatpush1.msra.mxu0 0.0
      %3567 = vmatprep.subr.mxu0 0.0
      %3568 = vmatpush1.msra.mxu0 0.0
      %3569 = vmatprep.subr.mxu0 0.0
      %3570 = vmatpush1.msra.mxu0 0.0
      %3571 = vmatprep.subr.mxu0 0.0
      %3572 = vmatpush1.msra.mxu0 0.0
      %3573 = vmatprep.subr.mxu0 0.0
      %3574 = vmatpush1.msra.mxu0 0.0
      %3575 = vmatprep.mubr.f32.mxu0 0.0
      %3576 = vmatmul.mubr.f32.gmra.mrb[0].mxu0 %v3509
      %v3577 = vpop.f32.mrb[0].mxu0
      %v3578 = vadd.f32 0.0, %v3577
      %v3579 = vpop.f32.mrb[0].mxu0
      %v3580 = vadd.f32 0.0, %v3579
      %3581 = vdwg.mxu0
      %v3582 = vadd.f32 %v2196, %v3578
      %v3583 = vadd.f32 %v2197, %v3580
      %v3586 = vcombine.low %v3582, %v3583
      %3588 = vst [vmem:[%s373] sm:$0xff] %v3586
      %v3589 = vadd.f32 %v3490, %v3025
      %vm3590 = vcmask 519168
      %3591 = vst.msk [vmem:[%s377] sm:$0xf] %vm3590, %v3589
      %p3592 = scmp.lt.s32.totalorder %s21, 1
      %s3593 = scalar_select %p3592, %s21, 1
      %s3594 = smul.addr %s3593, 2
      %s3595 = smul.addr %s3594, 4
      %s3596 = scalar_lea.vmem %s8, %s3595
      %p3597 = scmp.lt.s32.totalorder %s21, 1
      %s3598 = scalar_select %p3597, %s21, 1
      %s3599 = smul.addr %s3598, 4
      %s3600 = scalar_lea.vmem %s9, %s3599
      // Predicated region
      $region53: #{octave_conv.1} parent=51 // pred_check
        %p3601 = pneg %p222
      $region54: #{octave_conv.1} parent=51 // pred_check_branch
        %3603 = sbr.rel (%p3601) target = $region56
      $region55: #{octave_conv.1} parent=51 // pred_region
        _
      $region56: #{octave_conv.1} parent=51 // pred_fallthru
        _
      // Predicated region
      $region57: #{octave_conv.1} parent=51 // pred_check
        %p3604 = pneg %p248
      $region58: #{octave_conv.1} parent=51 // pred_check_branch
        %3606 = sbr.rel (%p3604) target = $region60
      $region59: #{octave_conv.1} parent=51 // pred_region
        _
      $region60: #{octave_conv.1} parent=51 // pred_fallthru
        _
    $region52: #{octave_conv.1} parent=5 // pred_fallthru
      _
    %p3607 = scmp.le.s32.totalorder 2, %s16
    // Predicated region
    $region61: #{octave_conv.1} parent=5 // pred_check
      %p3608 = pneg %p3607
    $region62: #{octave_conv.1} parent=5 // pred_check_branch
      %3610 = sbr.rel (%p3608) target = $region64
    $region63: #{octave_conv.1} parent=5 // pred_region
      %s3611 = ssub.s32 %s16, 2
      // Predicated region
      $region65: #{octave_conv.1} parent=63 // pred_check
        %p3612 = pneg %p228
      $region66: #{octave_conv.1} parent=63 // pred_check_branch
        %3614 = sbr.rel (%p3612) target = $region68
      $region67: #{octave_conv.1} parent=63 // pred_region
        %p3615 = scmp.lt.s32.totalorder %s22, 1
        %s3616 = scalar_select %p3615, %s22, 1
        %s3617 = smul.addr %s3616, 2
        %s3618 = smul.addr %s3617, 4
        %s3619 = scalar_lea.vmem %s8, %s3618
      $region68: #{octave_conv.1} parent=63 // pred_fallthru
        _
      // Predicated region
      $region69: #{octave_conv.1} parent=63 // pred_check
        %p3620 = pneg %p254
      $region70: #{octave_conv.1} parent=63 // pred_check_branch
        %3622 = sbr.rel (%p3620) target = $region72
      $region71: #{octave_conv.1} parent=63 // pred_region
        %p3623 = scmp.lt.s32.totalorder %s22, 1
        %s3624 = scalar_select %p3623, %s22, 1
        %s3625 = smul.addr %s3624, 4
        %s3626 = scalar_lea.vmem %s9, %s3625
      $region72: #{octave_conv.1} parent=63 // pred_fallthru
        _
    $region64: #{octave_conv.1} parent=5 // pred_fallthru
      _
  $region6: #{octave_conv.1} parent=0 // loop_footer
    %s20 = sadd.s32 1, %s16
  $region7: #{octave_conv.1} parent=0 // loop_footer_branch
    %15 = sbr.rel target = $region3
  $region8: #{octave_conv.1} parent=0 // loop_exit
    _

</llo_original>
